<compile_context>
chip_gen: v5e
topology: v5e:2x2
jax: 0.10.0
libtpu: 0.0.40
codegen_flags: <defaults>
</compile_context>

<pallas_src>
import numpy as np
import jax
import jax.numpy as jnp
from jax import lax
from jax.experimental import pallas as pl
from jax.experimental.pallas import tpu as pltpu

M_SIZE = 15                 # sampling points per side (M = N)
UPSAMPLED_SIZE = 21         # SLM plane size (odd, difference to M_SIZE even)
INPUT_PIXEL_SIZE = 8e-6
UPSAMPLED_PIXEL_SIZE = 7.56e-6
L = 0.004
LMBDA = 5.15e-7
Z = 0.08
FILL_FACTOR = 0.93

P15 = 16                    # 15 padded to a sublane multiple of 8
P21 = 24                    # 21 padded to a sublane multiple of 8


# ----------------------- operator-matrix precompute --------------------------
# All of this runs ONCE (hoisted out of the per-batch hot path).

def _build_linear_operators():
    """Propagation / FFT-resampling per-axis operators (float64 numpy)."""
    m, s = M_SIZE, UPSAMPLED_SIZE

    # Angular-spectrum propagation: u2 = exp(jkz) * P u P^T
    dx = L / m
    k = 2.0 * np.pi / LMBDA
    fx = np.linspace(-1.0 / (2 * dx), 1.0 / (2 * dx) - 1.0 / L, m)
    h = np.exp(-1j * np.pi * LMBDA * Z * fx ** 2)         # separable half of H
    hs = np.fft.fftshift(h)                                # H = fftshift(H_pre)
    eye_m = np.eye(m, dtype=np.complex128)
    t = np.fft.fft(np.fft.fftshift(eye_m, axes=0), axis=0)
    t = hs[:, None] * t
    P = np.fft.ifftshift(np.fft.ifft(t, axis=0), axes=0)
    prop_l = np.exp(1j * k * Z) * P                        # exp(jkz) folded left
    prop_rt = P.T

    # FFT up-resampling 15 -> 21: x_up = (src/tgt) * RU x RU^T
    pad = (s - m) // 2
    t = np.fft.fftshift(np.fft.fft(np.fft.ifftshift(eye_m, axes=0), axis=0), axes=0)
    t = np.pad(t, ((pad, pad), (0, 0)))
    RU = np.fft.fftshift(np.fft.ifft(np.fft.ifftshift(t, axes=0), axis=0), axes=0)
    up_scale = INPUT_PIXEL_SIZE / UPSAMPLED_PIXEL_SIZE     # sqrt(energy_scale)

    # FFT down-resampling 21 -> 15: x_dn = (src/tgt) * RD x RD^T
    eye_s = np.eye(s, dtype=np.complex128)
    t = np.fft.fftshift(np.fft.fft(np.fft.ifftshift(eye_s, axes=0), axis=0), axes=0)
    start = (s - m) // 2
    t = t[start:start + m, :]
    RD = np.fft.fftshift(np.fft.ifft(np.fft.ifftshift(t, axes=0), axis=0), axes=0)
    down_scale = UPSAMPLED_PIXEL_SIZE / INPUT_PIXEL_SIZE

    return (prop_l, prop_rt,
            up_scale * RU, RU.T,
            down_scale * RD, RD.T)


def _pixel_response_1d():
    """1D Gaussian pixel response (reference uses torch.linspace(-s//2, s//2, s))."""
    s = UPSAMPLED_SIZE
    sigma = 0.5 / (UPSAMPLED_PIXEL_SIZE / INPUT_PIXEL_SIZE)
    grid = np.linspace(float((-s) // 2), float(s // 2), s)   # matches reference
    return np.exp(-(grid ** 2) / (2.0 * sigma ** 2))


def _pixel_response_toeplitz():
    """A such that conv2d(E, outer(g,g), padding=s//2) == A @ E @ A^T."""
    s = UPSAMPLED_SIZE
    g = _pixel_response_1d()
    p = s // 2
    i = np.arange(s)[:, None]
    m = np.arange(s)[None, :]
    u = m - i + p
    valid = (u >= 0) & (u < s)
    return np.where(valid, g[np.clip(u, 0, s - 1)], 0.0)


def _pack_complex(z, rows, cols):
    """complex matrix -> planar float32 (2, rows, cols), zero padded."""
    out = np.zeros((2, rows, cols), np.float32)
    out[0, : z.shape[0], : z.shape[1]] = z.real
    out[1, : z.shape[0], : z.shape[1]] = z.imag
    return jnp.asarray(out)


def prepare_constants(params):
    """Param-only precompute, hoisted out of the per-batch hot path."""
    prop_l, prop_rt, rul, rurt, rdl, rdrt = _build_linear_operators()
    consts = {
        "prop_l": _pack_complex(prop_l, P15, P15),
        "prop_rt": _pack_complex(prop_rt, P15, P15),
        "up_l": _pack_complex(rul, P21, P15),
        "up_rt": _pack_complex(rurt, P15, P21),
        "dn_l": _pack_complex(rdl, P15, P21),
        "dn_rt": _pack_complex(rdrt, P21, P15),
    }

    # exp(j*2*pi*phase) for the four modulation planes, planar (cos, sin)
    phases = jnp.stack([params["phase1"], params["phase2"],
                        params["phase3"], params["phase4"]]).astype(jnp.float32)
    ang = np.float32(2.0 * np.pi) * phases
    mods = jnp.stack([jnp.cos(ang), jnp.sin(ang)], axis=1)        # (4,2,15,15)
    consts["mods"] = jnp.pad(
        mods, ((0, 0), (0, 0), (0, P15 - M_SIZE), (0, P15 - M_SIZE)))

    # SLM masks: conv2d((sigmoid(w)>0.5)*ff, gauss) == A @ E @ A^T (separable)
    A = jnp.asarray(_pixel_response_toeplitz(), jnp.float32)
    pw = jnp.stack([params["pw1"], params["pw2"],
                    params["pw3"]]).astype(jnp.float32)
    eff = (pw > 0.0).astype(jnp.float32) * np.float32(FILL_FACTOR)
    masks = jnp.einsum("im,bmn,jn->bij", A, eff, A)               # (3,21,21)
    consts["masks"] = jnp.pad(
        masks, ((0, 0), (0, P21 - UPSAMPLED_SIZE), (0, P21 - UPSAMPLED_SIZE)))
    return consts


# ------------------------------ fused kernel --------------------------------

def _optical_net_kernel(field_ref, prop_l_ref, prop_rt_ref, mod_ref,
                        up_l_ref, up_rt_ref, mask_ref, dn_l_ref, dn_rt_ref,
                        out_ref):
    def mm(a, b):
        return jnp.dot(a, b, preferred_element_type=jnp.float32)

    def csandwich(ar, ai, lft, rgt):
        """Complex L @ u @ R with planar L=(lr,li), R=(rr,ri); R is pre-transposed."""
        lr, li = lft
        rr, ri = rgt
        tr = mm(lr, ar) - mm(li, ai)
        ti = mm(lr, ai) + mm(li, ar)
        return mm(tr, rr) - mm(ti, ri), mm(tr, ri) + mm(ti, rr)

    fld = field_ref[0]                          # (2, P15, P15) planar field
    ur, ui = fld[0], fld[1]

    plm, prtm = prop_l_ref[...], prop_rt_ref[...]
    prop_l, prop_r = (plm[0], plm[1]), (prtm[0], prtm[1])
    ulm, urtm = up_l_ref[...], up_rt_ref[...]
    up_l, up_r = (ulm[0], ulm[1]), (urtm[0], urtm[1])
    dlm, drtm = dn_l_ref[...], dn_rt_ref[...]
    dn_l, dn_r = (dlm[0], dlm[1]), (drtm[0], drtm[1])
    mods = mod_ref[...]                         # (4, 2, P15, P15)
    masks = mask_ref[...]                       # (3, P21, P21)

    def modulate(ar, ai, idx):                  # u *= exp(j*2*pi*phase)
        cr, ci = mods[idx, 0], mods[idx, 1]
        return ar * cr - ai * ci, ar * ci + ai * cr

    def propagate(ar, ai):                      # angular-spectrum propagation
        return csandwich(ar, ai, prop_l, prop_r)

    def nonlinear(ar, ai, idx):                 # upsample -> SLM mask -> downsample
        vr, vi = csandwich(ar, ai, up_l, up_r)  # 15 -> 21 (padded 24)
        m = masks[idx]
        vr, vi = vr * m, vi * m
        return csandwich(vr, vi, dn_l, dn_r)    # 21 -> 15 (padded 16)

    ur, ui = modulate(ur, ui, 0)
    ur, ui = propagate(ur, ui)
    ur, ui = nonlinear(ur, ui, 0)
    ur, ui = propagate(ur, ui)
    ur, ui = modulate(ur, ui, 1)
    ur, ui = propagate(ur, ui)
    ur, ui = nonlinear(ur, ui, 1)
    ur, ui = propagate(ur, ui)
    ur, ui = modulate(ur, ui, 2)
    ur, ui = propagate(ur, ui)
    ur, ui = nonlinear(ur, ui, 2)
    ur, ui = propagate(ur, ui)
    ur, ui = modulate(ur, ui, 3)
    ur, ui = propagate(ur, ui)
    out_ref[0] = ur * ur + ui * ui              # imaging layer: |u|^2


def optical_network_forward(x, consts):
    """x: complex (B, 15, 15) -> intensity (B, 15, 15) float32. One pallas_call."""
    b = x.shape[0]
    # Pack ONCE: planar (B, 2, P15, P15), zero-padded spatial dims.
    field = jnp.stack([jnp.real(x), jnp.imag(x)], axis=1).astype(jnp.float32)
    field = jnp.pad(field, ((0, 0), (0, 0),
                            (0, P15 - M_SIZE), (0, P15 - M_SIZE)))

    const_map3 = lambda i: (0, 0, 0)
    out = pl.pallas_call(
        _optical_net_kernel,
        out_shape=jax.ShapeDtypeStruct((b, P15, P15), jnp.float32),
        grid_spec=pltpu.PrefetchScalarGridSpec(
            num_scalar_prefetch=0,
            grid=(b,),                                   # one field per grid step
            in_specs=[
                pl.BlockSpec((1, 2, P15, P15), lambda i: (i, 0, 0, 0)),
                pl.BlockSpec((2, P15, P15), const_map3),              # prop_l
                pl.BlockSpec((2, P15, P15), const_map3),              # prop_rt
                pl.BlockSpec((4, 2, P15, P15), lambda i: (0, 0, 0, 0)),  # mods
                pl.BlockSpec((2, P21, P15), const_map3),              # up_l
                pl.BlockSpec((2, P15, P21), const_map3),              # up_rt
                pl.BlockSpec((3, P21, P21), const_map3),              # masks
                pl.BlockSpec((2, P15, P21), const_map3),              # dn_l
                pl.BlockSpec((2, P21, P15), const_map3),              # dn_rt
            ],
            out_specs=pl.BlockSpec((1, P15, P15), lambda i: (i, 0, 0)),
        ),
        compiler_params=pltpu.CompilerParams(
            dimension_semantics=("parallel",),     # v7x: 2 TensorCores split batch
            vmem_limit_bytes=32 * 1024 * 1024,     # footprint is ~100 KiB; safe on all gens
        ),
    )(field, consts["prop_l"], consts["prop_rt"], consts["mods"],
      consts["up_l"], consts["up_rt"], consts["masks"],
      consts["dn_l"], consts["dn_rt"])
    return out[:, :M_SIZE, :M_SIZE]               # unpack ONCE (drop zero pad)


# -------------------- pure-JAX reference (verification only) -----------------

def _reference_forward(x, params):
    def propagate(u):
        m = u.shape[-1]
        dx = L / m
        k = 2.0 * np.pi / LMBDA
        fx = jnp.linspace(-1.0 / (2 * dx), 1.0 / (2 * dx) - 1.0 / L, m)
        FX, FY = jnp.meshgrid(fx, fx, indexing="ij")
        H = jnp.exp(-1j * np.pi * LMBDA * Z * (FX ** 2 + FY ** 2)) * np.exp(1j * k * Z)
        H = jnp.fft.fftshift(H, axes=(-2, -1))
        U1 = jnp.fft.fft2(jnp.fft.fftshift(u, axes=(-2, -1)))
        return jnp.fft.ifftshift(jnp.fft.ifft2(H * U1), axes=(-2, -1))

    def resample(u, tgt, mode, src_ps, tgt_ps):
        n = u.shape[-1]
        X = jnp.fft.fftshift(jnp.fft.fft2(jnp.fft.ifftshift(u, axes=(-2, -1))),
                             axes=(-2, -1))
        if mode == "up":
            p = (tgt - n) // 2
            X = jnp.pad(X, ((0, 0), (p, p), (p, p)))
        else:
            st = (n - tgt) // 2
            X = X[:, st:st + tgt, st:st + tgt]
        u2 = jnp.fft.fftshift(jnp.fft.ifft2(jnp.fft.ifftshift(X, axes=(-2, -1))),
                              axes=(-2, -1))
        return u2 * np.float32(src_ps / tgt_ps)

    g = _pixel_response_1d()
    resp2d = jnp.asarray(np.outer(g, g), jnp.float32)

    def nonlinear(u, pw):
        up = resample(u, UPSAMPLED_SIZE, "up", INPUT_PIXEL_SIZE, UPSAMPLED_PIXEL_SIZE)
        eff = (jax.nn.sigmoid(pw) > 0.5).astype(jnp.float32) * np.float32(FILL_FACTOR)
        filt = lax.conv_general_dilated(
            eff[None, None], resp2d[None, None], window_strides=(1, 1),
            padding=[(UPSAMPLED_SIZE // 2, UPSAMPLED_SIZE // 2)] * 2)[0, 0]
        return resample(up * filt, M_SIZE, "down",
                        UPSAMPLED_PIXEL_SIZE, INPUT_PIXEL_SIZE)

    def modulate(u, ph):
        return u * jnp.exp(1j * np.float32(2.0 * np.pi) * ph)

    u = modulate(x, params["phase1"]); u = propagate(u)
    u = nonlinear(u, params["pw1"]);   u = propagate(u)
    u = modulate(u, params["phase2"]); u = propagate(u)
    u = nonlinear(u, params["pw2"]);   u = propagate(u)
    u = modulate(u, params["phase3"]); u = propagate(u)
    u = nonlinear(u, params["pw3"]);   u = propagate(u)
    u = modulate(u, params["phase4"]); u = propagate(u)
    return (jnp.abs(u) ** 2).astype(jnp.float32)


# --------------------------------- main --------------------------------------

if __name__ == "__main__":
    key = jax.random.PRNGKey(0)
    keys = jax.random.split(key, 9)

    params = {
        "phase1": jax.random.uniform(keys[0], (M_SIZE, M_SIZE), jnp.float32, 0.0, 2.0),
        "phase2": jax.random.uniform(keys[1], (M_SIZE, M_SIZE), jnp.float32, 0.0, 2.0),
        "phase3": jax.random.uniform(keys[2], (M_SIZE, M_SIZE), jnp.float32, 0.0, 2.0),
        "phase4": jax.random.uniform(keys[3], (M_SIZE, M_SIZE), jnp.float32, 0.0, 2.0),
        "pw1": jax.random.uniform(keys[4], (UPSAMPLED_SIZE, UPSAMPLED_SIZE),
                                  jnp.float32, -1.0, 1.0),
        "pw2": jax.random.uniform(keys[5], (UPSAMPLED_SIZE, UPSAMPLED_SIZE),
                                  jnp.float32, -1.0, 1.0),
        "pw3": jax.random.uniform(keys[6], (UPSAMPLED_SIZE, UPSAMPLED_SIZE),
                                  jnp.float32, -1.0, 1.0),
    }

    B = 2
    xr = jax.random.normal(keys[7], (B, M_SIZE, M_SIZE), jnp.float32)
    xi = jax.random.normal(keys[8], (B, M_SIZE, M_SIZE), jnp.float32)
    x = lax.complex(xr, xi)                      # input complex field (B, M, M)

    # Param-only precompute, done once (hoisted out of the hot path).
    consts = jax.block_until_ready(prepare_constants(params))

    fwd = jax.jit(optical_network_forward)
    out = jax.block_until_ready(fwd(x, consts))

    assert out.shape == (B, M_SIZE, M_SIZE) and out.dtype == jnp.float32
    assert bool(jnp.all(jnp.isfinite(out)))

    # Correctness check against a pure-JAX FFT-based reference of the module.
    ref = jax.block_until_ready(jax.jit(_reference_forward)(x, params))
    err = float(jnp.max(jnp.abs(out - ref)))
    scale = float(jnp.max(jnp.abs(ref))) + 1e-12
    assert err <= 0.05 * scale + 1e-5, f"mismatch: max|diff|={err}, max|ref|={scale}"

    print("KERNEL_OK")
</pallas_src>

<mosaic_0001>
module attributes {stable_mosaic.version = 11 : i64} {
  func.func @_optical_net_kernel(%arg0: i32, %arg1: memref<1x2x16x16xf32, #tpu.memory_space<vmem>>, %arg2: memref<2x16x16xf32, #tpu.memory_space<vmem>>, %arg3: memref<2x16x16xf32, #tpu.memory_space<vmem>>, %arg4: memref<4x2x16x16xf32, #tpu.memory_space<vmem>>, %arg5: memref<2x24x16xf32, #tpu.memory_space<vmem>>, %arg6: memref<2x16x24xf32, #tpu.memory_space<vmem>>, %arg7: memref<3x24x24xf32, #tpu.memory_space<vmem>>, %arg8: memref<2x16x24xf32, #tpu.memory_space<vmem>>, %arg9: memref<2x24x16xf32, #tpu.memory_space<vmem>>, %arg10: memref<1x16x16xf32, #tpu.memory_space<vmem>>) attributes {dimension_semantics = [#tpu.dimension_semantics<parallel>], iteration_bounds = array<i64: 2>, scalar_prefetch = 0 : i64, scratch_operands = 0 : i64, tpu.core_type = #tpu.core_type<tc>, window_params = [{transform_indices = @transform_0, window_bounds = array<i64: 1, 2, 16, 16>}, {pipeline_mode = #tpu.pipeline_mode<synchronous>, transform_indices = @transform_1, window_bounds = array<i64: 2, 16, 16>}, {pipeline_mode = #tpu.pipeline_mode<synchronous>, transform_indices = @transform_2, window_bounds = array<i64: 2, 16, 16>}, {pipeline_mode = #tpu.pipeline_mode<synchronous>, transform_indices = @transform_3, window_bounds = array<i64: 4, 2, 16, 16>}, {pipeline_mode = #tpu.pipeline_mode<synchronous>, transform_indices = @transform_4, window_bounds = array<i64: 2, 24, 16>}, {pipeline_mode = #tpu.pipeline_mode<synchronous>, transform_indices = @transform_5, window_bounds = array<i64: 2, 16, 24>}, {pipeline_mode = #tpu.pipeline_mode<synchronous>, transform_indices = @transform_6, window_bounds = array<i64: 3, 24, 24>}, {pipeline_mode = #tpu.pipeline_mode<synchronous>, transform_indices = @transform_7, window_bounds = array<i64: 2, 16, 24>}, {pipeline_mode = #tpu.pipeline_mode<synchronous>, transform_indices = @transform_8, window_bounds = array<i64: 2, 24, 16>}, {transform_indices = @transform_9, window_bounds = array<i64: 1, 16, 16>}]} {
    %c0 = arith.constant 0 : index
    %c0_0 = arith.constant 0 : index
    %c0_1 = arith.constant 0 : index
    %c0_2 = arith.constant 0 : index
    %0 = vector.load %arg1[%c0, %c0_0, %c0_1, %c0_2] : memref<1x2x16x16xf32, #tpu.memory_space<vmem>>, vector<1x2x16x16xf32>
    %1 = vector.shape_cast %0 : vector<1x2x16x16xf32> to vector<2x16x16xf32>
    %2 = vector.extract_strided_slice %1 {offsets = [0, 0, 0], sizes = [1, 16, 16], strides = [1, 1, 1]} : vector<2x16x16xf32> to vector<1x16x16xf32>
    %3 = vector.shape_cast %2 : vector<1x16x16xf32> to vector<16x16xf32>
    %4 = vector.extract_strided_slice %1 {offsets = [1, 0, 0], sizes = [1, 16, 16], strides = [1, 1, 1]} : vector<2x16x16xf32> to vector<1x16x16xf32>
    %5 = vector.shape_cast %4 : vector<1x16x16xf32> to vector<16x16xf32>
    %c0_3 = arith.constant 0 : index
    %c0_4 = arith.constant 0 : index
    %c0_5 = arith.constant 0 : index
    %6 = vector.load %arg2[%c0_3, %c0_4, %c0_5] : memref<2x16x16xf32, #tpu.memory_space<vmem>>, vector<2x16x16xf32>
    %c0_6 = arith.constant 0 : index
    %c0_7 = arith.constant 0 : index
    %c0_8 = arith.constant 0 : index
    %7 = vector.load %arg3[%c0_6, %c0_7, %c0_8] : memref<2x16x16xf32, #tpu.memory_space<vmem>>, vector<2x16x16xf32>
    %8 = vector.extract_strided_slice %6 {offsets = [0, 0, 0], sizes = [1, 16, 16], strides = [1, 1, 1]} : vector<2x16x16xf32> to vector<1x16x16xf32>
    %9 = vector.shape_cast %8 : vector<1x16x16xf32> to vector<16x16xf32>
    %10 = vector.extract_strided_slice %6 {offsets = [1, 0, 0], sizes = [1, 16, 16], strides = [1, 1, 1]} : vector<2x16x16xf32> to vector<1x16x16xf32>
    %11 = vector.shape_cast %10 : vector<1x16x16xf32> to vector<16x16xf32>
    %12 = vector.extract_strided_slice %7 {offsets = [0, 0, 0], sizes = [1, 16, 16], strides = [1, 1, 1]} : vector<2x16x16xf32> to vector<1x16x16xf32>
    %13 = vector.shape_cast %12 : vector<1x16x16xf32> to vector<16x16xf32>
    %14 = vector.extract_strided_slice %7 {offsets = [1, 0, 0], sizes = [1, 16, 16], strides = [1, 1, 1]} : vector<2x16x16xf32> to vector<1x16x16xf32>
    %15 = vector.shape_cast %14 : vector<1x16x16xf32> to vector<16x16xf32>
    %c0_9 = arith.constant 0 : index
    %c0_10 = arith.constant 0 : index
    %c0_11 = arith.constant 0 : index
    %16 = vector.load %arg5[%c0_9, %c0_10, %c0_11] : memref<2x24x16xf32, #tpu.memory_space<vmem>>, vector<2x24x16xf32>
    %c0_12 = arith.constant 0 : index
    %c0_13 = arith.constant 0 : index
    %c0_14 = arith.constant 0 : index
    %17 = vector.load %arg6[%c0_12, %c0_13, %c0_14] : memref<2x16x24xf32, #tpu.memory_space<vmem>>, vector<2x16x24xf32>
    %18 = vector.extract_strided_slice %16 {offsets = [0, 0, 0], sizes = [1, 24, 16], strides = [1, 1, 1]} : vector<2x24x16xf32> to vector<1x24x16xf32>
    %19 = vector.shape_cast %18 : vector<1x24x16xf32> to vector<24x16xf32>
    %20 = vector.extract_strided_slice %16 {offsets = [1, 0, 0], sizes = [1, 24, 16], strides = [1, 1, 1]} : vector<2x24x16xf32> to vector<1x24x16xf32>
    %21 = vector.shape_cast %20 : vector<1x24x16xf32> to vector<24x16xf32>
    %22 = vector.extract_strided_slice %17 {offsets = [0, 0, 0], sizes = [1, 16, 24], strides = [1, 1, 1]} : vector<2x16x24xf32> to vector<1x16x24xf32>
    %23 = vector.shape_cast %22 : vector<1x16x24xf32> to vector<16x24xf32>
    %24 = vector.extract_strided_slice %17 {offsets = [1, 0, 0], sizes = [1, 16, 24], strides = [1, 1, 1]} : vector<2x16x24xf32> to vector<1x16x24xf32>
    %25 = vector.shape_cast %24 : vector<1x16x24xf32> to vector<16x24xf32>
    %c0_15 = arith.constant 0 : index
    %c0_16 = arith.constant 0 : index
    %c0_17 = arith.constant 0 : index
    %26 = vector.load %arg8[%c0_15, %c0_16, %c0_17] : memref<2x16x24xf32, #tpu.memory_space<vmem>>, vector<2x16x24xf32>
    %c0_18 = arith.constant 0 : index
    %c0_19 = arith.constant 0 : index
    %c0_20 = arith.constant 0 : index
    %27 = vector.load %arg9[%c0_18, %c0_19, %c0_20] : memref<2x24x16xf32, #tpu.memory_space<vmem>>, vector<2x24x16xf32>
    %28 = vector.extract_strided_slice %26 {offsets = [0, 0, 0], sizes = [1, 16, 24], strides = [1, 1, 1]} : vector<2x16x24xf32> to vector<1x16x24xf32>
    %29 = vector.shape_cast %28 : vector<1x16x24xf32> to vector<16x24xf32>
    %30 = vector.extract_strided_slice %26 {offsets = [1, 0, 0], sizes = [1, 16, 24], strides = [1, 1, 1]} : vector<2x16x24xf32> to vector<1x16x24xf32>
    %31 = vector.shape_cast %30 : vector<1x16x24xf32> to vector<16x24xf32>
    %32 = vector.extract_strided_slice %27 {offsets = [0, 0, 0], sizes = [1, 24, 16], strides = [1, 1, 1]} : vector<2x24x16xf32> to vector<1x24x16xf32>
    %33 = vector.shape_cast %32 : vector<1x24x16xf32> to vector<24x16xf32>
    %34 = vector.extract_strided_slice %27 {offsets = [1, 0, 0], sizes = [1, 24, 16], strides = [1, 1, 1]} : vector<2x24x16xf32> to vector<1x24x16xf32>
    %35 = vector.shape_cast %34 : vector<1x24x16xf32> to vector<24x16xf32>
    %c0_21 = arith.constant 0 : index
    %c0_22 = arith.constant 0 : index
    %c0_23 = arith.constant 0 : index
    %c0_24 = arith.constant 0 : index
    %36 = vector.load %arg4[%c0_21, %c0_22, %c0_23, %c0_24] : memref<4x2x16x16xf32, #tpu.memory_space<vmem>>, vector<4x2x16x16xf32>
    %c0_25 = arith.constant 0 : index
    %c0_26 = arith.constant 0 : index
    %c0_27 = arith.constant 0 : index
    %37 = vector.load %arg7[%c0_25, %c0_26, %c0_27] : memref<3x24x24xf32, #tpu.memory_space<vmem>>, vector<3x24x24xf32>
    %38 = vector.extract_strided_slice %36 {offsets = [0, 0, 0, 0], sizes = [1, 1, 16, 16], strides = [1, 1, 1, 1]} : vector<4x2x16x16xf32> to vector<1x1x16x16xf32>
    %39 = vector.shape_cast %38 : vector<1x1x16x16xf32> to vector<16x16xf32>
    %40 = vector.extract_strided_slice %36 {offsets = [0, 1, 0, 0], sizes = [1, 1, 16, 16], strides = [1, 1, 1, 1]} : vector<4x2x16x16xf32> to vector<1x1x16x16xf32>
    %41 = vector.shape_cast %40 : vector<1x1x16x16xf32> to vector<16x16xf32>
    %42 = arith.mulf %3, %39 : vector<16x16xf32>
    %43 = arith.mulf %5, %41 : vector<16x16xf32>
    %44 = arith.subf %42, %43 : vector<16x16xf32>
    %45 = arith.mulf %3, %41 : vector<16x16xf32>
    %46 = arith.mulf %5, %39 : vector<16x16xf32>
    %47 = arith.addf %45, %46 : vector<16x16xf32>
    %cst = arith.constant dense<0.000000e+00> : vector<16x16xf32>
    %48 = tpu.matmul %9, %44, %cst {dimension_numbers = #tpu.dot_dimension_numbers<[1], [0], [0], [1], [0, 0, 1, 1], [], []>} : vector<16x16xf32>, vector<16x16xf32>, vector<16x16xf32> -> vector<16x16xf32>
    %cst_28 = arith.constant dense<0.000000e+00> : vector<16x16xf32>
    %49 = tpu.matmul %11, %47, %cst_28 {dimension_numbers = #tpu.dot_dimension_numbers<[1], [0], [0], [1], [0, 0, 1, 1], [], []>} : vector<16x16xf32>, vector<16x16xf32>, vector<16x16xf32> -> vector<16x16xf32>
    %50 = arith.subf %48, %49 : vector<16x16xf32>
    %cst_29 = arith.constant dense<0.000000e+00> : vector<16x16xf32>
    %51 = tpu.matmul %9, %47, %cst_29 {dimension_numbers = #tpu.dot_dimension_numbers<[1], [0], [0], [1], [0, 0, 1, 1], [], []>} : vector<16x16xf32>, vector<16x16xf32>, vector<16x16xf32> -> vector<16x16xf32>
    %cst_30 = arith.constant dense<0.000000e+00> : vector<16x16xf32>
    %52 = tpu.matmul %11, %44, %cst_30 {dimension_numbers = #tpu.dot_dimension_numbers<[1], [0], [0], [1], [0, 0, 1, 1], [], []>} : vector<16x16xf32>, vector<16x16xf32>, vector<16x16xf32> -> vector<16x16xf32>
    %53 = arith.addf %51, %52 : vector<16x16xf32>
    %cst_31 = arith.constant dense<0.000000e+00> : vector<16x16xf32>
    %54 = tpu.matmul %50, %13, %cst_31 {dimension_numbers = #tpu.dot_dimension_numbers<[1], [0], [0], [1], [0, 0, 1, 1], [], []>} : vector<16x16xf32>, vector<16x16xf32>, vector<16x16xf32> -> vector<16x16xf32>
    %cst_32 = arith.constant dense<0.000000e+00> : vector<16x16xf32>
    %55 = tpu.matmul %53, %15, %cst_32 {dimension_numbers = #tpu.dot_dimension_numbers<[1], [0], [0], [1], [0, 0, 1, 1], [], []>} : vector<16x16xf32>, vector<16x16xf32>, vector<16x16xf32> -> vector<16x16xf32>
    %56 = arith.subf %54, %55 : vector<16x16xf32>
    %cst_33 = arith.constant dense<0.000000e+00> : vector<16x16xf32>
    %57 = tpu.matmul %50, %15, %cst_33 {dimension_numbers = #tpu.dot_dimension_numbers<[1], [0], [0], [1], [0, 0, 1, 1], [], []>} : vector<16x16xf32>, vector<16x16xf32>, vector<16x16xf32> -> vector<16x16xf32>
    %cst_34 = arith.constant dense<0.000000e+00> : vector<16x16xf32>
    %58 = tpu.matmul %53, %13, %cst_34 {dimension_numbers = #tpu.dot_dimension_numbers<[1], [0], [0], [1], [0, 0, 1, 1], [], []>} : vector<16x16xf32>, vector<16x16xf32>, vector<16x16xf32> -> vector<16x16xf32>
    %59 = arith.addf %57, %58 : vector<16x16xf32>
    %cst_35 = arith.constant dense<0.000000e+00> : vector<24x16xf32>
    %60 = tpu.matmul %19, %56, %cst_35 {dimension_numbers = #tpu.dot_dimension_numbers<[1], [0], [0], [1], [0, 0, 1, 1], [], []>} : vector<24x16xf32>, vector<16x16xf32>, vector<24x16xf32> -> vector<24x16xf32>
    %cst_36 = arith.constant dense<0.000000e+00> : vector<24x16xf32>
    %61 = tpu.matmul %21, %59, %cst_36 {dimension_numbers = #tpu.dot_dimension_numbers<[1], [0], [0], [1], [0, 0, 1, 1], [], []>} : vector<24x16xf32>, vector<16x16xf32>, vector<24x16xf32> -> vector<24x16xf32>
    %62 = arith.subf %60, %61 : vector<24x16xf32>
    %cst_37 = arith.constant dense<0.000000e+00> : vector<24x16xf32>
    %63 = tpu.matmul %19, %59, %cst_37 {dimension_numbers = #tpu.dot_dimension_numbers<[1], [0], [0], [1], [0, 0, 1, 1], [], []>} : vector<24x16xf32>, vector<16x16xf32>, vector<24x16xf32> -> vector<24x16xf32>
    %cst_38 = arith.constant dense<0.000000e+00> : vector<24x16xf32>
    %64 = tpu.matmul %21, %56, %cst_38 {dimension_numbers = #tpu.dot_dimension_numbers<[1], [0], [0], [1], [0, 0, 1, 1], [], []>} : vector<24x16xf32>, vector<16x16xf32>, vector<24x16xf32> -> vector<24x16xf32>
    %65 = arith.addf %63, %64 : vector<24x16xf32>
    %cst_39 = arith.constant dense<0.000000e+00> : vector<24x24xf32>
    %66 = tpu.matmul %62, %23, %cst_39 {dimension_numbers = #tpu.dot_dimension_numbers<[1], [0], [0], [1], [0, 0, 1, 1], [], []>} : vector<24x16xf32>, vector<16x24xf32>, vector<24x24xf32> -> vector<24x24xf32>
    %cst_40 = arith.constant dense<0.000000e+00> : vector<24x24xf32>
    %67 = tpu.matmul %65, %25, %cst_40 {dimension_numbers = #tpu.dot_dimension_numbers<[1], [0], [0], [1], [0, 0, 1, 1], [], []>} : vector<24x16xf32>, vector<16x24xf32>, vector<24x24xf32> -> vector<24x24xf32>
    %68 = arith.subf %66, %67 : vector<24x24xf32>
    %cst_41 = arith.constant dense<0.000000e+00> : vector<24x24xf32>
    %69 = tpu.matmul %62, %25, %cst_41 {dimension_numbers = #tpu.dot_dimension_numbers<[1], [0], [0], [1], [0, 0, 1, 1], [], []>} : vector<24x16xf32>, vector<16x24xf32>, vector<24x24xf32> -> vector<24x24xf32>
    %cst_42 = arith.constant dense<0.000000e+00> : vector<24x24xf32>
    %70 = tpu.matmul %65, %23, %cst_42 {dimension_numbers = #tpu.dot_dimension_numbers<[1], [0], [0], [1], [0, 0, 1, 1], [], []>} : vector<24x16xf32>, vector<16x24xf32>, vector<24x24xf32> -> vector<24x24xf32>
    %71 = arith.addf %69, %70 : vector<24x24xf32>
    %72 = vector.extract_strided_slice %37 {offsets = [0, 0, 0], sizes = [1, 24, 24], strides = [1, 1, 1]} : vector<3x24x24xf32> to vector<1x24x24xf32>
    %73 = vector.shape_cast %72 : vector<1x24x24xf32> to vector<24x24xf32>
    %74 = arith.mulf %68, %73 : vector<24x24xf32>
    %75 = arith.mulf %71, %73 : vector<24x24xf32>
    %cst_43 = arith.constant dense<0.000000e+00> : vector<16x24xf32>
    %76 = tpu.matmul %29, %74, %cst_43 {dimension_numbers = #tpu.dot_dimension_numbers<[1], [0], [0], [1], [0, 0, 1, 1], [], []>} : vector<16x24xf32>, vector<24x24xf32>, vector<16x24xf32> -> vector<16x24xf32>
    %cst_44 = arith.constant dense<0.000000e+00> : vector<16x24xf32>
    %77 = tpu.matmul %31, %75, %cst_44 {dimension_numbers = #tpu.dot_dimension_numbers<[1], [0], [0], [1], [0, 0, 1, 1], [], []>} : vector<16x24xf32>, vector<24x24xf32>, vector<16x24xf32> -> vector<16x24xf32>
    %78 = arith.subf %76, %77 : vector<16x24xf32>
    %cst_45 = arith.constant dense<0.000000e+00> : vector<16x24xf32>
    %79 = tpu.matmul %29, %75, %cst_45 {dimension_numbers = #tpu.dot_dimension_numbers<[1], [0], [0], [1], [0, 0, 1, 1], [], []>} : vector<16x24xf32>, vector<24x24xf32>, vector<16x24xf32> -> vector<16x24xf32>
    %cst_46 = arith.constant dense<0.000000e+00> : vector<16x24xf32>
    %80 = tpu.matmul %31, %74, %cst_46 {dimension_numbers = #tpu.dot_dimension_numbers<[1], [0], [0], [1], [0, 0, 1, 1], [], []>} : vector<16x24xf32>, vector<24x24xf32>, vector<16x24xf32> -> vector<16x24xf32>
    %81 = arith.addf %79, %80 : vector<16x24xf32>
    %cst_47 = arith.constant dense<0.000000e+00> : vector<16x16xf32>
    %82 = tpu.matmul %78, %33, %cst_47 {dimension_numbers = #tpu.dot_dimension_numbers<[1], [0], [0], [1], [0, 0, 1, 1], [], []>} : vector<16x24xf32>, vector<24x16xf32>, vector<16x16xf32> -> vector<16x16xf32>
    %cst_48 = arith.constant dense<0.000000e+00> : vector<16x16xf32>
    %83 = tpu.matmul %81, %35, %cst_48 {dimension_numbers = #tpu.dot_dimension_numbers<[1], [0], [0], [1], [0, 0, 1, 1], [], []>} : vector<16x24xf32>, vector<24x16xf32>, vector<16x16xf32> -> vector<16x16xf32>
    %84 = arith.subf %82, %83 : vector<16x16xf32>
    %cst_49 = arith.constant dense<0.000000e+00> : vector<16x16xf32>
    %85 = tpu.matmul %78, %35, %cst_49 {dimension_numbers = #tpu.dot_dimension_numbers<[1], [0], [0], [1], [0, 0, 1, 1], [], []>} : vector<16x24xf32>, vector<24x16xf32>, vector<16x16xf32> -> vector<16x16xf32>
    %cst_50 = arith.constant dense<0.000000e+00> : vector<16x16xf32>
    %86 = tpu.matmul %81, %33, %cst_50 {dimension_numbers = #tpu.dot_dimension_numbers<[1], [0], [0], [1], [0, 0, 1, 1], [], []>} : vector<16x24xf32>, vector<24x16xf32>, vector<16x16xf32> -> vector<16x16xf32>
    %87 = arith.addf %85, %86 : vector<16x16xf32>
    %cst_51 = arith.constant dense<0.000000e+00> : vector<16x16xf32>
    %88 = tpu.matmul %9, %84, %cst_51 {dimension_numbers = #tpu.dot_dimension_numbers<[1], [0], [0], [1], [0, 0, 1, 1], [], []>} : vector<16x16xf32>, vector<16x16xf32>, vector<16x16xf32> -> vector<16x16xf32>
    %cst_52 = arith.constant dense<0.000000e+00> : vector<16x16xf32>
    %89 = tpu.matmul %11, %87, %cst_52 {dimension_numbers = #tpu.dot_dimension_numbers<[1], [0], [0], [1], [0, 0, 1, 1], [], []>} : vector<16x16xf32>, vector<16x16xf32>, vector<16x16xf32> -> vector<16x16xf32>
    %90 = arith.subf %88, %89 : vector<16x16xf32>
    %cst_53 = arith.constant dense<0.000000e+00> : vector<16x16xf32>
    %91 = tpu.matmul %9, %87, %cst_53 {dimension_numbers = #tpu.dot_dimension_numbers<[1], [0], [0], [1], [0, 0, 1, 1], [], []>} : vector<16x16xf32>, vector<16x16xf32>, vector<16x16xf32> -> vector<16x16xf32>
    %cst_54 = arith.constant dense<0.000000e+00> : vector<16x16xf32>
    %92 = tpu.matmul %11, %84, %cst_54 {dimension_numbers = #tpu.dot_dimension_numbers<[1], [0], [0], [1], [0, 0, 1, 1], [], []>} : vector<16x16xf32>, vector<16x16xf32>, vector<16x16xf32> -> vector<16x16xf32>
    %93 = arith.addf %91, %92 : vector<16x16xf32>
    %cst_55 = arith.constant dense<0.000000e+00> : vector<16x16xf32>
    %94 = tpu.matmul %90, %13, %cst_55 {dimension_numbers = #tpu.dot_dimension_numbers<[1], [0], [0], [1], [0, 0, 1, 1], [], []>} : vector<16x16xf32>, vector<16x16xf32>, vector<16x16xf32> -> vector<16x16xf32>
    %cst_56 = arith.constant dense<0.000000e+00> : vector<16x16xf32>
    %95 = tpu.matmul %93, %15, %cst_56 {dimension_numbers = #tpu.dot_dimension_numbers<[1], [0], [0], [1], [0, 0, 1, 1], [], []>} : vector<16x16xf32>, vector<16x16xf32>, vector<16x16xf32> -> vector<16x16xf32>
    %96 = arith.subf %94, %95 : vector<16x16xf32>
    %cst_57 = arith.constant dense<0.000000e+00> : vector<16x16xf32>
    %97 = tpu.matmul %90, %15, %cst_57 {dimension_numbers = #tpu.dot_dimension_numbers<[1], [0], [0], [1], [0, 0, 1, 1], [], []>} : vector<16x16xf32>, vector<16x16xf32>, vector<16x16xf32> -> vector<16x16xf32>
    %cst_58 = arith.constant dense<0.000000e+00> : vector<16x16xf32>
    %98 = tpu.matmul %93, %13, %cst_58 {dimension_numbers = #tpu.dot_dimension_numbers<[1], [0], [0], [1], [0, 0, 1, 1], [], []>} : vector<16x16xf32>, vector<16x16xf32>, vector<16x16xf32> -> vector<16x16xf32>
    %99 = arith.addf %97, %98 : vector<16x16xf32>
    %100 = vector.extract_strided_slice %36 {offsets = [1, 0, 0, 0], sizes = [1, 1, 16, 16], strides = [1, 1, 1, 1]} : vector<4x2x16x16xf32> to vector<1x1x16x16xf32>
    %101 = vector.shape_cast %100 : vector<1x1x16x16xf32> to vector<16x16xf32>
    %102 = vector.extract_strided_slice %36 {offsets = [1, 1, 0, 0], sizes = [1, 1, 16, 16], strides = [1, 1, 1, 1]} : vector<4x2x16x16xf32> to vector<1x1x16x16xf32>
    %103 = vector.shape_cast %102 : vector<1x1x16x16xf32> to vector<16x16xf32>
    %104 = arith.mulf %96, %101 : vector<16x16xf32>
    %105 = arith.mulf %99, %103 : vector<16x16xf32>
    %106 = arith.subf %104, %105 : vector<16x16xf32>
    %107 = arith.mulf %96, %103 : vector<16x16xf32>
    %108 = arith.mulf %99, %101 : vector<16x16xf32>
    %109 = arith.addf %107, %108 : vector<16x16xf32>
    %cst_59 = arith.constant dense<0.000000e+00> : vector<16x16xf32>
    %110 = tpu.matmul %9, %106, %cst_59 {dimension_numbers = #tpu.dot_dimension_numbers<[1], [0], [0], [1], [0, 0, 1, 1], [], []>} : vector<16x16xf32>, vector<16x16xf32>, vector<16x16xf32> -> vector<16x16xf32>
    %cst_60 = arith.constant dense<0.000000e+00> : vector<16x16xf32>
    %111 = tpu.matmul %11, %109, %cst_60 {dimension_numbers = #tpu.dot_dimension_numbers<[1], [0], [0], [1], [0, 0, 1, 1], [], []>} : vector<16x16xf32>, vector<16x16xf32>, vector<16x16xf32> -> vector<16x16xf32>
    %112 = arith.subf %110, %111 : vector<16x16xf32>
    %cst_61 = arith.constant dense<0.000000e+00> : vector<16x16xf32>
    %113 = tpu.matmul %9, %109, %cst_61 {dimension_numbers = #tpu.dot_dimension_numbers<[1], [0], [0], [1], [0, 0, 1, 1], [], []>} : vector<16x16xf32>, vector<16x16xf32>, vector<16x16xf32> -> vector<16x16xf32>
    %cst_62 = arith.constant dense<0.000000e+00> : vector<16x16xf32>
    %114 = tpu.matmul %11, %106, %cst_62 {dimension_numbers = #tpu.dot_dimension_numbers<[1], [0], [0], [1], [0, 0, 1, 1], [], []>} : vector<16x16xf32>, vector<16x16xf32>, vector<16x16xf32> -> vector<16x16xf32>
    %115 = arith.addf %113, %114 : vector<16x16xf32>
    %cst_63 = arith.constant dense<0.000000e+00> : vector<16x16xf32>
    %116 = tpu.matmul %112, %13, %cst_63 {dimension_numbers = #tpu.dot_dimension_numbers<[1], [0], [0], [1], [0, 0, 1, 1], [], []>} : vector<16x16xf32>, vector<16x16xf32>, vector<16x16xf32> -> vector<16x16xf32>
    %cst_64 = arith.constant dense<0.000000e+00> : vector<16x16xf32>
    %117 = tpu.matmul %115, %15, %cst_64 {dimension_numbers = #tpu.dot_dimension_numbers<[1], [0], [0], [1], [0, 0, 1, 1], [], []>} : vector<16x16xf32>, vector<16x16xf32>, vector<16x16xf32> -> vector<16x16xf32>
    %118 = arith.subf %116, %117 : vector<16x16xf32>
    %cst_65 = arith.constant dense<0.000000e+00> : vector<16x16xf32>
    %119 = tpu.matmul %112, %15, %cst_65 {dimension_numbers = #tpu.dot_dimension_numbers<[1], [0], [0], [1], [0, 0, 1, 1], [], []>} : vector<16x16xf32>, vector<16x16xf32>, vector<16x16xf32> -> vector<16x16xf32>
    %cst_66 = arith.constant dense<0.000000e+00> : vector<16x16xf32>
    %120 = tpu.matmul %115, %13, %cst_66 {dimension_numbers = #tpu.dot_dimension_numbers<[1], [0], [0], [1], [0, 0, 1, 1], [], []>} : vector<16x16xf32>, vector<16x16xf32>, vector<16x16xf32> -> vector<16x16xf32>
    %121 = arith.addf %119, %120 : vector<16x16xf32>
    %cst_67 = arith.constant dense<0.000000e+00> : vector<24x16xf32>
    %122 = tpu.matmul %19, %118, %cst_67 {dimension_numbers = #tpu.dot_dimension_numbers<[1], [0], [0], [1], [0, 0, 1, 1], [], []>} : vector<24x16xf32>, vector<16x16xf32>, vector<24x16xf32> -> vector<24x16xf32>
    %cst_68 = arith.constant dense<0.000000e+00> : vector<24x16xf32>
    %123 = tpu.matmul %21, %121, %cst_68 {dimension_numbers = #tpu.dot_dimension_numbers<[1], [0], [0], [1], [0, 0, 1, 1], [], []>} : vector<24x16xf32>, vector<16x16xf32>, vector<24x16xf32> -> vector<24x16xf32>
    %124 = arith.subf %122, %123 : vector<24x16xf32>
    %cst_69 = arith.constant dense<0.000000e+00> : vector<24x16xf32>
    %125 = tpu.matmul %19, %121, %cst_69 {dimension_numbers = #tpu.dot_dimension_numbers<[1], [0], [0], [1], [0, 0, 1, 1], [], []>} : vector<24x16xf32>, vector<16x16xf32>, vector<24x16xf32> -> vector<24x16xf32>
    %cst_70 = arith.constant dense<0.000000e+00> : vector<24x16xf32>
    %126 = tpu.matmul %21, %118, %cst_70 {dimension_numbers = #tpu.dot_dimension_numbers<[1], [0], [0], [1], [0, 0, 1, 1], [], []>} : vector<24x16xf32>, vector<16x16xf32>, vector<24x16xf32> -> vector<24x16xf32>
    %127 = arith.addf %125, %126 : vector<24x16xf32>
    %cst_71 = arith.constant dense<0.000000e+00> : vector<24x24xf32>
    %128 = tpu.matmul %124, %23, %cst_71 {dimension_numbers = #tpu.dot_dimension_numbers<[1], [0], [0], [1], [0, 0, 1, 1], [], []>} : vector<24x16xf32>, vector<16x24xf32>, vector<24x24xf32> -> vector<24x24xf32>
    %cst_72 = arith.constant dense<0.000000e+00> : vector<24x24xf32>
    %129 = tpu.matmul %127, %25, %cst_72 {dimension_numbers = #tpu.dot_dimension_numbers<[1], [0], [0], [1], [0, 0, 1, 1], [], []>} : vector<24x16xf32>, vector<16x24xf32>, vector<24x24xf32> -> vector<24x24xf32>
    %130 = arith.subf %128, %129 : vector<24x24xf32>
    %cst_73 = arith.constant dense<0.000000e+00> : vector<24x24xf32>
    %131 = tpu.matmul %124, %25, %cst_73 {dimension_numbers = #tpu.dot_dimension_numbers<[1], [0], [0], [1], [0, 0, 1, 1], [], []>} : vector<24x16xf32>, vector<16x24xf32>, vector<24x24xf32> -> vector<24x24xf32>
    %cst_74 = arith.constant dense<0.000000e+00> : vector<24x24xf32>
    %132 = tpu.matmul %127, %23, %cst_74 {dimension_numbers = #tpu.dot_dimension_numbers<[1], [0], [0], [1], [0, 0, 1, 1], [], []>} : vector<24x16xf32>, vector<16x24xf32>, vector<24x24xf32> -> vector<24x24xf32>
    %133 = arith.addf %131, %132 : vector<24x24xf32>
    %134 = vector.extract_strided_slice %37 {offsets = [1, 0, 0], sizes = [1, 24, 24], strides = [1, 1, 1]} : vector<3x24x24xf32> to vector<1x24x24xf32>
    %135 = vector.shape_cast %134 : vector<1x24x24xf32> to vector<24x24xf32>
    %136 = arith.mulf %130, %135 : vector<24x24xf32>
    %137 = arith.mulf %133, %135 : vector<24x24xf32>
    %cst_75 = arith.constant dense<0.000000e+00> : vector<16x24xf32>
    %138 = tpu.matmul %29, %136, %cst_75 {dimension_numbers = #tpu.dot_dimension_numbers<[1], [0], [0], [1], [0, 0, 1, 1], [], []>} : vector<16x24xf32>, vector<24x24xf32>, vector<16x24xf32> -> vector<16x24xf32>
    %cst_76 = arith.constant dense<0.000000e+00> : vector<16x24xf32>
    %139 = tpu.matmul %31, %137, %cst_76 {dimension_numbers = #tpu.dot_dimension_numbers<[1], [0], [0], [1], [0, 0, 1, 1], [], []>} : vector<16x24xf32>, vector<24x24xf32>, vector<16x24xf32> -> vector<16x24xf32>
    %140 = arith.subf %138, %139 : vector<16x24xf32>
    %cst_77 = arith.constant dense<0.000000e+00> : vector<16x24xf32>
    %141 = tpu.matmul %29, %137, %cst_77 {dimension_numbers = #tpu.dot_dimension_numbers<[1], [0], [0], [1], [0, 0, 1, 1], [], []>} : vector<16x24xf32>, vector<24x24xf32>, vector<16x24xf32> -> vector<16x24xf32>
    %cst_78 = arith.constant dense<0.000000e+00> : vector<16x24xf32>
    %142 = tpu.matmul %31, %136, %cst_78 {dimension_numbers = #tpu.dot_dimension_numbers<[1], [0], [0], [1], [0, 0, 1, 1], [], []>} : vector<16x24xf32>, vector<24x24xf32>, vector<16x24xf32> -> vector<16x24xf32>
    %143 = arith.addf %141, %142 : vector<16x24xf32>
    %cst_79 = arith.constant dense<0.000000e+00> : vector<16x16xf32>
    %144 = tpu.matmul %140, %33, %cst_79 {dimension_numbers = #tpu.dot_dimension_numbers<[1], [0], [0], [1], [0, 0, 1, 1], [], []>} : vector<16x24xf32>, vector<24x16xf32>, vector<16x16xf32> -> vector<16x16xf32>
    %cst_80 = arith.constant dense<0.000000e+00> : vector<16x16xf32>
    %145 = tpu.matmul %143, %35, %cst_80 {dimension_numbers = #tpu.dot_dimension_numbers<[1], [0], [0], [1], [0, 0, 1, 1], [], []>} : vector<16x24xf32>, vector<24x16xf32>, vector<16x16xf32> -> vector<16x16xf32>
    %146 = arith.subf %144, %145 : vector<16x16xf32>
    %cst_81 = arith.constant dense<0.000000e+00> : vector<16x16xf32>
    %147 = tpu.matmul %140, %35, %cst_81 {dimension_numbers = #tpu.dot_dimension_numbers<[1], [0], [0], [1], [0, 0, 1, 1], [], []>} : vector<16x24xf32>, vector<24x16xf32>, vector<16x16xf32> -> vector<16x16xf32>
    %cst_82 = arith.constant dense<0.000000e+00> : vector<16x16xf32>
    %148 = tpu.matmul %143, %33, %cst_82 {dimension_numbers = #tpu.dot_dimension_numbers<[1], [0], [0], [1], [0, 0, 1, 1], [], []>} : vector<16x24xf32>, vector<24x16xf32>, vector<16x16xf32> -> vector<16x16xf32>
    %149 = arith.addf %147, %148 : vector<16x16xf32>
    %cst_83 = arith.constant dense<0.000000e+00> : vector<16x16xf32>
    %150 = tpu.matmul %9, %146, %cst_83 {dimension_numbers = #tpu.dot_dimension_numbers<[1], [0], [0], [1], [0, 0, 1, 1], [], []>} : vector<16x16xf32>, vector<16x16xf32>, vector<16x16xf32> -> vector<16x16xf32>
    %cst_84 = arith.constant dense<0.000000e+00> : vector<16x16xf32>
    %151 = tpu.matmul %11, %149, %cst_84 {dimension_numbers = #tpu.dot_dimension_numbers<[1], [0], [0], [1], [0, 0, 1, 1], [], []>} : vector<16x16xf32>, vector<16x16xf32>, vector<16x16xf32> -> vector<16x16xf32>
    %152 = arith.subf %150, %151 : vector<16x16xf32>
    %cst_85 = arith.constant dense<0.000000e+00> : vector<16x16xf32>
    %153 = tpu.matmul %9, %149, %cst_85 {dimension_numbers = #tpu.dot_dimension_numbers<[1], [0], [0], [1], [0, 0, 1, 1], [], []>} : vector<16x16xf32>, vector<16x16xf32>, vector<16x16xf32> -> vector<16x16xf32>
    %cst_86 = arith.constant dense<0.000000e+00> : vector<16x16xf32>
    %154 = tpu.matmul %11, %146, %cst_86 {dimension_numbers = #tpu.dot_dimension_numbers<[1], [0], [0], [1], [0, 0, 1, 1], [], []>} : vector<16x16xf32>, vector<16x16xf32>, vector<16x16xf32> -> vector<16x16xf32>
    %155 = arith.addf %153, %154 : vector<16x16xf32>
    %cst_87 = arith.constant dense<0.000000e+00> : vector<16x16xf32>
    %156 = tpu.matmul %152, %13, %cst_87 {dimension_numbers = #tpu.dot_dimension_numbers<[1], [0], [0], [1], [0, 0, 1, 1], [], []>} : vector<16x16xf32>, vector<16x16xf32>, vector<16x16xf32> -> vector<16x16xf32>
    %cst_88 = arith.constant dense<0.000000e+00> : vector<16x16xf32>
    %157 = tpu.matmul %155, %15, %cst_88 {dimension_numbers = #tpu.dot_dimension_numbers<[1], [0], [0], [1], [0, 0, 1, 1], [], []>} : vector<16x16xf32>, vector<16x16xf32>, vector<16x16xf32> -> vector<16x16xf32>
    %158 = arith.subf %156, %157 : vector<16x16xf32>
    %cst_89 = arith.constant dense<0.000000e+00> : vector<16x16xf32>
    %159 = tpu.matmul %152, %15, %cst_89 {dimension_numbers = #tpu.dot_dimension_numbers<[1], [0], [0], [1], [0, 0, 1, 1], [], []>} : vector<16x16xf32>, vector<16x16xf32>, vector<16x16xf32> -> vector<16x16xf32>
    %cst_90 = arith.constant dense<0.000000e+00> : vector<16x16xf32>
    %160 = tpu.matmul %155, %13, %cst_90 {dimension_numbers = #tpu.dot_dimension_numbers<[1], [0], [0], [1], [0, 0, 1, 1], [], []>} : vector<16x16xf32>, vector<16x16xf32>, vector<16x16xf32> -> vector<16x16xf32>
    %161 = arith.addf %159, %160 : vector<16x16xf32>
    %162 = vector.extract_strided_slice %36 {offsets = [2, 0, 0, 0], sizes = [1, 1, 16, 16], strides = [1, 1, 1, 1]} : vector<4x2x16x16xf32> to vector<1x1x16x16xf32>
    %163 = vector.shape_cast %162 : vector<1x1x16x16xf32> to vector<16x16xf32>
    %164 = vector.extract_strided_slice %36 {offsets = [2, 1, 0, 0], sizes = [1, 1, 16, 16], strides = [1, 1, 1, 1]} : vector<4x2x16x16xf32> to vector<1x1x16x16xf32>
    %165 = vector.shape_cast %164 : vector<1x1x16x16xf32> to vector<16x16xf32>
    %166 = arith.mulf %158, %163 : vector<16x16xf32>
    %167 = arith.mulf %161, %165 : vector<16x16xf32>
    %168 = arith.subf %166, %167 : vector<16x16xf32>
    %169 = arith.mulf %158, %165 : vector<16x16xf32>
    %170 = arith.mulf %161, %163 : vector<16x16xf32>
    %171 = arith.addf %169, %170 : vector<16x16xf32>
    %cst_91 = arith.constant dense<0.000000e+00> : vector<16x16xf32>
    %172 = tpu.matmul %9, %168, %cst_91 {dimension_numbers = #tpu.dot_dimension_numbers<[1], [0], [0], [1], [0, 0, 1, 1], [], []>} : vector<16x16xf32>, vector<16x16xf32>, vector<16x16xf32> -> vector<16x16xf32>
    %cst_92 = arith.constant dense<0.000000e+00> : vector<16x16xf32>
    %173 = tpu.matmul %11, %171, %cst_92 {dimension_numbers = #tpu.dot_dimension_numbers<[1], [0], [0], [1], [0, 0, 1, 1], [], []>} : vector<16x16xf32>, vector<16x16xf32>, vector<16x16xf32> -> vector<16x16xf32>
    %174 = arith.subf %172, %173 : vector<16x16xf32>
    %cst_93 = arith.constant dense<0.000000e+00> : vector<16x16xf32>
    %175 = tpu.matmul %9, %171, %cst_93 {dimension_numbers = #tpu.dot_dimension_numbers<[1], [0], [0], [1], [0, 0, 1, 1], [], []>} : vector<16x16xf32>, vector<16x16xf32>, vector<16x16xf32> -> vector<16x16xf32>
    %cst_94 = arith.constant dense<0.000000e+00> : vector<16x16xf32>
    %176 = tpu.matmul %11, %168, %cst_94 {dimension_numbers = #tpu.dot_dimension_numbers<[1], [0], [0], [1], [0, 0, 1, 1], [], []>} : vector<16x16xf32>, vector<16x16xf32>, vector<16x16xf32> -> vector<16x16xf32>
    %177 = arith.addf %175, %176 : vector<16x16xf32>
    %cst_95 = arith.constant dense<0.000000e+00> : vector<16x16xf32>
    %178 = tpu.matmul %174, %13, %cst_95 {dimension_numbers = #tpu.dot_dimension_numbers<[1], [0], [0], [1], [0, 0, 1, 1], [], []>} : vector<16x16xf32>, vector<16x16xf32>, vector<16x16xf32> -> vector<16x16xf32>
    %cst_96 = arith.constant dense<0.000000e+00> : vector<16x16xf32>
    %179 = tpu.matmul %177, %15, %cst_96 {dimension_numbers = #tpu.dot_dimension_numbers<[1], [0], [0], [1], [0, 0, 1, 1], [], []>} : vector<16x16xf32>, vector<16x16xf32>, vector<16x16xf32> -> vector<16x16xf32>
    %180 = arith.subf %178, %179 : vector<16x16xf32>
    %cst_97 = arith.constant dense<0.000000e+00> : vector<16x16xf32>
    %181 = tpu.matmul %174, %15, %cst_97 {dimension_numbers = #tpu.dot_dimension_numbers<[1], [0], [0], [1], [0, 0, 1, 1], [], []>} : vector<16x16xf32>, vector<16x16xf32>, vector<16x16xf32> -> vector<16x16xf32>
    %cst_98 = arith.constant dense<0.000000e+00> : vector<16x16xf32>
    %182 = tpu.matmul %177, %13, %cst_98 {dimension_numbers = #tpu.dot_dimension_numbers<[1], [0], [0], [1], [0, 0, 1, 1], [], []>} : vector<16x16xf32>, vector<16x16xf32>, vector<16x16xf32> -> vector<16x16xf32>
    %183 = arith.addf %181, %182 : vector<16x16xf32>
    %cst_99 = arith.constant dense<0.000000e+00> : vector<24x16xf32>
    %184 = tpu.matmul %19, %180, %cst_99 {dimension_numbers = #tpu.dot_dimension_numbers<[1], [0], [0], [1], [0, 0, 1, 1], [], []>} : vector<24x16xf32>, vector<16x16xf32>, vector<24x16xf32> -> vector<24x16xf32>
    %cst_100 = arith.constant dense<0.000000e+00> : vector<24x16xf32>
    %185 = tpu.matmul %21, %183, %cst_100 {dimension_numbers = #tpu.dot_dimension_numbers<[1], [0], [0], [1], [0, 0, 1, 1], [], []>} : vector<24x16xf32>, vector<16x16xf32>, vector<24x16xf32> -> vector<24x16xf32>
    %186 = arith.subf %184, %185 : vector<24x16xf32>
    %cst_101 = arith.constant dense<0.000000e+00> : vector<24x16xf32>
    %187 = tpu.matmul %19, %183, %cst_101 {dimension_numbers = #tpu.dot_dimension_numbers<[1], [0], [0], [1], [0, 0, 1, 1], [], []>} : vector<24x16xf32>, vector<16x16xf32>, vector<24x16xf32> -> vector<24x16xf32>
    %cst_102 = arith.constant dense<0.000000e+00> : vector<24x16xf32>
    %188 = tpu.matmul %21, %180, %cst_102 {dimension_numbers = #tpu.dot_dimension_numbers<[1], [0], [0], [1], [0, 0, 1, 1], [], []>} : vector<24x16xf32>, vector<16x16xf32>, vector<24x16xf32> -> vector<24x16xf32>
    %189 = arith.addf %187, %188 : vector<24x16xf32>
    %cst_103 = arith.constant dense<0.000000e+00> : vector<24x24xf32>
    %190 = tpu.matmul %186, %23, %cst_103 {dimension_numbers = #tpu.dot_dimension_numbers<[1], [0], [0], [1], [0, 0, 1, 1], [], []>} : vector<24x16xf32>, vector<16x24xf32>, vector<24x24xf32> -> vector<24x24xf32>
    %cst_104 = arith.constant dense<0.000000e+00> : vector<24x24xf32>
    %191 = tpu.matmul %189, %25, %cst_104 {dimension_numbers = #tpu.dot_dimension_numbers<[1], [0], [0], [1], [0, 0, 1, 1], [], []>} : vector<24x16xf32>, vector<16x24xf32>, vector<24x24xf32> -> vector<24x24xf32>
    %192 = arith.subf %190, %191 : vector<24x24xf32>
    %cst_105 = arith.constant dense<0.000000e+00> : vector<24x24xf32>
    %193 = tpu.matmul %186, %25, %cst_105 {dimension_numbers = #tpu.dot_dimension_numbers<[1], [0], [0], [1], [0, 0, 1, 1], [], []>} : vector<24x16xf32>, vector<16x24xf32>, vector<24x24xf32> -> vector<24x24xf32>
    %cst_106 = arith.constant dense<0.000000e+00> : vector<24x24xf32>
    %194 = tpu.matmul %189, %23, %cst_106 {dimension_numbers = #tpu.dot_dimension_numbers<[1], [0], [0], [1], [0, 0, 1, 1], [], []>} : vector<24x16xf32>, vector<16x24xf32>, vector<24x24xf32> -> vector<24x24xf32>
    %195 = arith.addf %193, %194 : vector<24x24xf32>
    %196 = vector.extract_strided_slice %37 {offsets = [2, 0, 0], sizes = [1, 24, 24], strides = [1, 1, 1]} : vector<3x24x24xf32> to vector<1x24x24xf32>
    %197 = vector.shape_cast %196 : vector<1x24x24xf32> to vector<24x24xf32>
    %198 = arith.mulf %192, %197 : vector<24x24xf32>
    %199 = arith.mulf %195, %197 : vector<24x24xf32>
    %cst_107 = arith.constant dense<0.000000e+00> : vector<16x24xf32>
    %200 = tpu.matmul %29, %198, %cst_107 {dimension_numbers = #tpu.dot_dimension_numbers<[1], [0], [0], [1], [0, 0, 1, 1], [], []>} : vector<16x24xf32>, vector<24x24xf32>, vector<16x24xf32> -> vector<16x24xf32>
    %cst_108 = arith.constant dense<0.000000e+00> : vector<16x24xf32>
    %201 = tpu.matmul %31, %199, %cst_108 {dimension_numbers = #tpu.dot_dimension_numbers<[1], [0], [0], [1], [0, 0, 1, 1], [], []>} : vector<16x24xf32>, vector<24x24xf32>, vector<16x24xf32> -> vector<16x24xf32>
    %202 = arith.subf %200, %201 : vector<16x24xf32>
    %cst_109 = arith.constant dense<0.000000e+00> : vector<16x24xf32>
    %203 = tpu.matmul %29, %199, %cst_109 {dimension_numbers = #tpu.dot_dimension_numbers<[1], [0], [0], [1], [0, 0, 1, 1], [], []>} : vector<16x24xf32>, vector<24x24xf32>, vector<16x24xf32> -> vector<16x24xf32>
    %cst_110 = arith.constant dense<0.000000e+00> : vector<16x24xf32>
    %204 = tpu.matmul %31, %198, %cst_110 {dimension_numbers = #tpu.dot_dimension_numbers<[1], [0], [0], [1], [0, 0, 1, 1], [], []>} : vector<16x24xf32>, vector<24x24xf32>, vector<16x24xf32> -> vector<16x24xf32>
    %205 = arith.addf %203, %204 : vector<16x24xf32>
    %cst_111 = arith.constant dense<0.000000e+00> : vector<16x16xf32>
    %206 = tpu.matmul %202, %33, %cst_111 {dimension_numbers = #tpu.dot_dimension_numbers<[1], [0], [0], [1], [0, 0, 1, 1], [], []>} : vector<16x24xf32>, vector<24x16xf32>, vector<16x16xf32> -> vector<16x16xf32>
    %cst_112 = arith.constant dense<0.000000e+00> : vector<16x16xf32>
    %207 = tpu.matmul %205, %35, %cst_112 {dimension_numbers = #tpu.dot_dimension_numbers<[1], [0], [0], [1], [0, 0, 1, 1], [], []>} : vector<16x24xf32>, vector<24x16xf32>, vector<16x16xf32> -> vector<16x16xf32>
    %208 = arith.subf %206, %207 : vector<16x16xf32>
    %cst_113 = arith.constant dense<0.000000e+00> : vector<16x16xf32>
    %209 = tpu.matmul %202, %35, %cst_113 {dimension_numbers = #tpu.dot_dimension_numbers<[1], [0], [0], [1], [0, 0, 1, 1], [], []>} : vector<16x24xf32>, vector<24x16xf32>, vector<16x16xf32> -> vector<16x16xf32>
    %cst_114 = arith.constant dense<0.000000e+00> : vector<16x16xf32>
    %210 = tpu.matmul %205, %33, %cst_114 {dimension_numbers = #tpu.dot_dimension_numbers<[1], [0], [0], [1], [0, 0, 1, 1], [], []>} : vector<16x24xf32>, vector<24x16xf32>, vector<16x16xf32> -> vector<16x16xf32>
    %211 = arith.addf %209, %210 : vector<16x16xf32>
    %cst_115 = arith.constant dense<0.000000e+00> : vector<16x16xf32>
    %212 = tpu.matmul %9, %208, %cst_115 {dimension_numbers = #tpu.dot_dimension_numbers<[1], [0], [0], [1], [0, 0, 1, 1], [], []>} : vector<16x16xf32>, vector<16x16xf32>, vector<16x16xf32> -> vector<16x16xf32>
    %cst_116 = arith.constant dense<0.000000e+00> : vector<16x16xf32>
    %213 = tpu.matmul %11, %211, %cst_116 {dimension_numbers = #tpu.dot_dimension_numbers<[1], [0], [0], [1], [0, 0, 1, 1], [], []>} : vector<16x16xf32>, vector<16x16xf32>, vector<16x16xf32> -> vector<16x16xf32>
    %214 = arith.subf %212, %213 : vector<16x16xf32>
    %cst_117 = arith.constant dense<0.000000e+00> : vector<16x16xf32>
    %215 = tpu.matmul %9, %211, %cst_117 {dimension_numbers = #tpu.dot_dimension_numbers<[1], [0], [0], [1], [0, 0, 1, 1], [], []>} : vector<16x16xf32>, vector<16x16xf32>, vector<16x16xf32> -> vector<16x16xf32>
    %cst_118 = arith.constant dense<0.000000e+00> : vector<16x16xf32>
    %216 = tpu.matmul %11, %208, %cst_118 {dimension_numbers = #tpu.dot_dimension_numbers<[1], [0], [0], [1], [0, 0, 1, 1], [], []>} : vector<16x16xf32>, vector<16x16xf32>, vector<16x16xf32> -> vector<16x16xf32>
    %217 = arith.addf %215, %216 : vector<16x16xf32>
    %cst_119 = arith.constant dense<0.000000e+00> : vector<16x16xf32>
    %218 = tpu.matmul %214, %13, %cst_119 {dimension_numbers = #tpu.dot_dimension_numbers<[1], [0], [0], [1], [0, 0, 1, 1], [], []>} : vector<16x16xf32>, vector<16x16xf32>, vector<16x16xf32> -> vector<16x16xf32>
    %cst_120 = arith.constant dense<0.000000e+00> : vector<16x16xf32>
    %219 = tpu.matmul %217, %15, %cst_120 {dimension_numbers = #tpu.dot_dimension_numbers<[1], [0], [0], [1], [0, 0, 1, 1], [], []>} : vector<16x16xf32>, vector<16x16xf32>, vector<16x16xf32> -> vector<16x16xf32>
    %220 = arith.subf %218, %219 : vector<16x16xf32>
    %cst_121 = arith.constant dense<0.000000e+00> : vector<16x16xf32>
    %221 = tpu.matmul %214, %15, %cst_121 {dimension_numbers = #tpu.dot_dimension_numbers<[1], [0], [0], [1], [0, 0, 1, 1], [], []>} : vector<16x16xf32>, vector<16x16xf32>, vector<16x16xf32> -> vector<16x16xf32>
    %cst_122 = arith.constant dense<0.000000e+00> : vector<16x16xf32>
    %222 = tpu.matmul %217, %13, %cst_122 {dimension_numbers = #tpu.dot_dimension_numbers<[1], [0], [0], [1], [0, 0, 1, 1], [], []>} : vector<16x16xf32>, vector<16x16xf32>, vector<16x16xf32> -> vector<16x16xf32>
    %223 = arith.addf %221, %222 : vector<16x16xf32>
    %224 = vector.extract_strided_slice %36 {offsets = [3, 0, 0, 0], sizes = [1, 1, 16, 16], strides = [1, 1, 1, 1]} : vector<4x2x16x16xf32> to vector<1x1x16x16xf32>
    %225 = vector.shape_cast %224 : vector<1x1x16x16xf32> to vector<16x16xf32>
    %226 = vector.extract_strided_slice %36 {offsets = [3, 1, 0, 0], sizes = [1, 1, 16, 16], strides = [1, 1, 1, 1]} : vector<4x2x16x16xf32> to vector<1x1x16x16xf32>
    %227 = vector.shape_cast %226 : vector<1x1x16x16xf32> to vector<16x16xf32>
    %228 = arith.mulf %220, %225 : vector<16x16xf32>
    %229 = arith.mulf %223, %227 : vector<16x16xf32>
    %230 = arith.subf %228, %229 : vector<16x16xf32>
    %231 = arith.mulf %220, %227 : vector<16x16xf32>
    %232 = arith.mulf %223, %225 : vector<16x16xf32>
    %233 = arith.addf %231, %232 : vector<16x16xf32>
    %cst_123 = arith.constant dense<0.000000e+00> : vector<16x16xf32>
    %234 = tpu.matmul %9, %230, %cst_123 {dimension_numbers = #tpu.dot_dimension_numbers<[1], [0], [0], [1], [0, 0, 1, 1], [], []>} : vector<16x16xf32>, vector<16x16xf32>, vector<16x16xf32> -> vector<16x16xf32>
    %cst_124 = arith.constant dense<0.000000e+00> : vector<16x16xf32>
    %235 = tpu.matmul %11, %233, %cst_124 {dimension_numbers = #tpu.dot_dimension_numbers<[1], [0], [0], [1], [0, 0, 1, 1], [], []>} : vector<16x16xf32>, vector<16x16xf32>, vector<16x16xf32> -> vector<16x16xf32>
    %236 = arith.subf %234, %235 : vector<16x16xf32>
    %cst_125 = arith.constant dense<0.000000e+00> : vector<16x16xf32>
    %237 = tpu.matmul %9, %233, %cst_125 {dimension_numbers = #tpu.dot_dimension_numbers<[1], [0], [0], [1], [0, 0, 1, 1], [], []>} : vector<16x16xf32>, vector<16x16xf32>, vector<16x16xf32> -> vector<16x16xf32>
    %cst_126 = arith.constant dense<0.000000e+00> : vector<16x16xf32>
    %238 = tpu.matmul %11, %230, %cst_126 {dimension_numbers = #tpu.dot_dimension_numbers<[1], [0], [0], [1], [0, 0, 1, 1], [], []>} : vector<16x16xf32>, vector<16x16xf32>, vector<16x16xf32> -> vector<16x16xf32>
    %239 = arith.addf %237, %238 : vector<16x16xf32>
    %cst_127 = arith.constant dense<0.000000e+00> : vector<16x16xf32>
    %240 = tpu.matmul %236, %13, %cst_127 {dimension_numbers = #tpu.dot_dimension_numbers<[1], [0], [0], [1], [0, 0, 1, 1], [], []>} : vector<16x16xf32>, vector<16x16xf32>, vector<16x16xf32> -> vector<16x16xf32>
    %cst_128 = arith.constant dense<0.000000e+00> : vector<16x16xf32>
    %241 = tpu.matmul %239, %15, %cst_128 {dimension_numbers = #tpu.dot_dimension_numbers<[1], [0], [0], [1], [0, 0, 1, 1], [], []>} : vector<16x16xf32>, vector<16x16xf32>, vector<16x16xf32> -> vector<16x16xf32>
    %242 = arith.subf %240, %241 : vector<16x16xf32>
    %cst_129 = arith.constant dense<0.000000e+00> : vector<16x16xf32>
    %243 = tpu.matmul %236, %15, %cst_129 {dimension_numbers = #tpu.dot_dimension_numbers<[1], [0], [0], [1], [0, 0, 1, 1], [], []>} : vector<16x16xf32>, vector<16x16xf32>, vector<16x16xf32> -> vector<16x16xf32>
    %cst_130 = arith.constant dense<0.000000e+00> : vector<16x16xf32>
    %244 = tpu.matmul %239, %13, %cst_130 {dimension_numbers = #tpu.dot_dimension_numbers<[1], [0], [0], [1], [0, 0, 1, 1], [], []>} : vector<16x16xf32>, vector<16x16xf32>, vector<16x16xf32> -> vector<16x16xf32>
    %245 = arith.addf %243, %244 : vector<16x16xf32>
    %246 = arith.mulf %242, %242 : vector<16x16xf32>
    %247 = arith.mulf %245, %245 : vector<16x16xf32>
    %248 = arith.addf %246, %247 : vector<16x16xf32>
    %c0_131 = arith.constant 0 : index
    %c0_132 = arith.constant 0 : index
    %c0_133 = arith.constant 0 : index
    %249 = vector.load %arg10[%c0_131, %c0_132, %c0_133] : memref<1x16x16xf32, #tpu.memory_space<vmem>>, vector<1x16x16xf32>
    %250 = vector.shape_cast %249 : vector<1x16x16xf32> to vector<16x16xf32>
    %251 = vector.shape_cast %248 : vector<16x16xf32> to vector<1x16x16xf32>
    tpu.vector_store %arg10[%c0_131, %c0_132, %c0_133], %251 {strides = array<i32>} : memref<1x16x16xf32, #tpu.memory_space<vmem>>, vector<1x16x16xf32>,
    return
  }
  func.func @transform_0(%arg0: i32) -> (i32, i32, i32, i32) {
    %c0_i32 = arith.constant 0 : i32
    %c0_i32_0 = arith.constant 0 : i32
    %c0_i32_1 = arith.constant 0 : i32
    %c0_i32_2 = arith.constant 0 : i32
    return %arg0, %c0_i32, %c0_i32_0, %c0_i32_1 : i32, i32, i32, i32
  }
  func.func @transform_1(%arg0: i32) -> (i32, i32, i32) {
    %c0_i32 = arith.constant 0 : i32
    %c0_i32_0 = arith.constant 0 : i32
    %c0_i32_1 = arith.constant 0 : i32
    %c0_i32_2 = arith.constant 0 : i32
    return %c0_i32, %c0_i32_0, %c0_i32_1 : i32, i32, i32
  }
  func.func @transform_2(%arg0: i32) -> (i32, i32, i32) {
    %c0_i32 = arith.constant 0 : i32
    %c0_i32_0 = arith.constant 0 : i32
    %c0_i32_1 = arith.constant 0 : i32
    %c0_i32_2 = arith.constant 0 : i32
    return %c0_i32, %c0_i32_0, %c0_i32_1 : i32, i32, i32
  }
  func.func @transform_3(%arg0: i32) -> (i32, i32, i32, i32) {
    %c0_i32 = arith.constant 0 : i32
    %c0_i32_0 = arith.constant 0 : i32
    %c0_i32_1 = arith.constant 0 : i32
    %c0_i32_2 = arith.constant 0 : i32
    %c0_i32_3 = arith.constant 0 : i32
    return %c0_i32, %c0_i32_0, %c0_i32_1, %c0_i32_2 : i32, i32, i32, i32
  }
  func.func @transform_4(%arg0: i32) -> (i32, i32, i32) {
    %c0_i32 = arith.constant 0 : i32
    %c0_i32_0 = arith.constant 0 : i32
    %c0_i32_1 = arith.constant 0 : i32
    %c0_i32_2 = arith.constant 0 : i32
    return %c0_i32, %c0_i32_0, %c0_i32_1 : i32, i32, i32
  }
  func.func @transform_5(%arg0: i32) -> (i32, i32, i32) {
    %c0_i32 = arith.constant 0 : i32
    %c0_i32_0 = arith.constant 0 : i32
    %c0_i32_1 = arith.constant 0 : i32
    %c0_i32_2 = arith.constant 0 : i32
    return %c0_i32, %c0_i32_0, %c0_i32_1 : i32, i32, i32
  }
  func.func @transform_6(%arg0: i32) -> (i32, i32, i32) {
    %c0_i32 = arith.constant 0 : i32
    %c0_i32_0 = arith.constant 0 : i32
    %c0_i32_1 = arith.constant 0 : i32
    %c0_i32_2 = arith.constant 0 : i32
    return %c0_i32, %c0_i32_0, %c0_i32_1 : i32, i32, i32
  }
  func.func @transform_7(%arg0: i32) -> (i32, i32, i32) {
    %c0_i32 = arith.constant 0 : i32
    %c0_i32_0 = arith.constant 0 : i32
    %c0_i32_1 = arith.constant 0 : i32
    %c0_i32_2 = arith.constant 0 : i32
    return %c0_i32, %c0_i32_0, %c0_i32_1 : i32, i32, i32
  }
  func.func @transform_8(%arg0: i32) -> (i32, i32, i32) {
    %c0_i32 = arith.constant 0 : i32
    %c0_i32_0 = arith.constant 0 : i32
    %c0_i32_1 = arith.constant 0 : i32
    %c0_i32_2 = arith.constant 0 : i32
    return %c0_i32, %c0_i32_0, %c0_i32_1 : i32, i32, i32
  }
  func.func @transform_9(%arg0: i32) -> (i32, i32, i32) {
    %c0_i32 = arith.constant 0 : i32
    %c0_i32_0 = arith.constant 0 : i32
    %c0_i32_1 = arith.constant 0 : i32
    return %arg0, %c0_i32, %c0_i32_0 : i32, i32, i32
  }
}

</mosaic_0001>

<llo_original>
// kernel: custom-call
$region0: #{custom-call}
  %s0 = inlined_call_operand.vmem [shape: c64[2,15,15], index: 0, kind: input, shape index: {}]
  %s1 = inlined_call_operand.vmem [shape: f32[2,15,15], index: 1, kind: output, shape index: {}]
  %v2 = vld [vmem:[%s0] sm:$0xff]
  %3 = vst [vmem:[%s1] sm:$0xff] %v2
  %s4 = scalar_lea.vmem %s1, 8
  %s5 = scalar_lea.vmem %s0, 8
  %v6 = vld [vmem:[%s5] sm:$0xff]
  %7 = vst [vmem:[%s4] sm:$0xff] %v6
  %s8 = scalar_lea.vmem %s1, 16
  %s9 = scalar_lea.vmem %s0, 16
  %v10 = vld [vmem:[%s9] sm:$0xff]
  %11 = vst [vmem:[%s8] sm:$0xff] %v10
  %s12 = scalar_lea.vmem %s1, 24
  %s13 = scalar_lea.vmem %s0, 24
  %v14 = vld [vmem:[%s13] sm:$0xff]
  %15 = vst [vmem:[%s12] sm:$0xff] %v14

// kernel: custom-call.1
$region0: #{custom-call.1}
  %s0 = inlined_call_operand.vmem [shape: c64[2,15,15], index: 0, kind: input, shape index: {}]
  %s1 = inlined_call_operand.vmem [shape: f32[2,15,15], index: 1, kind: output, shape index: {}]
  %s2 = scalar_lea.vmem %s0, 32
  %v3 = vld [vmem:[%s2] sm:$0xff]
  %4 = vst [vmem:[%s1] sm:$0xff] %v3
  %s5 = scalar_lea.vmem %s1, 8
  %s6 = scalar_lea.vmem %s2, 8
  %v7 = vld [vmem:[%s6] sm:$0xff]
  %8 = vst [vmem:[%s5] sm:$0xff] %v7
  %s9 = scalar_lea.vmem %s1, 16
  %s10 = scalar_lea.vmem %s2, 16
  %v11 = vld [vmem:[%s10] sm:$0xff]
  %12 = vst [vmem:[%s9] sm:$0xff] %v11
  %s13 = scalar_lea.vmem %s1, 24
  %s14 = scalar_lea.vmem %s2, 24
  %v15 = vld [vmem:[%s14] sm:$0xff]
  %16 = vst [vmem:[%s13] sm:$0xff] %v15

// kernel: optical_network_forward.1
$region0: #{optical_network_forward.1}
  #allocation0 [shape = 'u32[]', space=smem, size = 0x4, offset = 0x4, fixed_abs, tag = 'smem constant byte address 0x4 - core index']
  #allocation1 [shape = 'u32[72,128]{1,0:T(1,128)}', space=vmem, size = 0x9000, scoped, tag = 'internal scratch']
  %s0 = inlined_call_operand.vmem [shape: f32[2,2,16,16], index: 0, kind: input, shape index: {}]
  %s1 = inlined_call_operand.vmem [shape: f32[2,16,16], index: 1, kind: input, shape index: {}]
  %s2 = inlined_call_operand.vmem [shape: f32[2,16,16], index: 2, kind: input, shape index: {}]
  %s3 = inlined_call_operand.vmem [shape: f32[4,2,16,16], index: 3, kind: input, shape index: {}]
  %s4 = inlined_call_operand.vmem [shape: f32[2,24,16], index: 4, kind: input, shape index: {}]
  %s5 = inlined_call_operand.vmem [shape: f32[2,16,24], index: 5, kind: input, shape index: {}]
  %s6 = inlined_call_operand.vmem [shape: f32[3,24,24], index: 6, kind: input, shape index: {}]
  %s7 = inlined_call_operand.vmem [shape: f32[2,16,24], index: 7, kind: input, shape index: {}]
  %s8 = inlined_call_operand.vmem [shape: f32[2,24,16], index: 8, kind: input, shape index: {}]
  %s9 = inlined_call_operand.vmem [shape: f32[2,16,16], index: 9, kind: output, shape index: {}]
  %s10 = sld [smem:[#allocation0]]
  $region69: #{optical_network_forward.1} parent=0
    _
  %s12 = ssub.s32 1, %s10
  %s13 = scalar_select 0, %s12, %s10
  loop: start=0, step=1, limit=4
  $region2: #{optical_network_forward.1} parent=0 // loop_pre_header
    _
  $region3: #{optical_network_forward.1} parent=0 // loop_header
    %s15 = sphi 0, %s19
    %p16 = scmp.ge.s32.totalorder %s15, 4
    %s25 = sphi 0, %s27
    %s28 = sphi 0, %s25
    %s29 = sphi 0, %s28
    %s45 = sphi 0, %s29
    %s49 = sphi 0, %s49
    %s51 = sphi 0, %s49
    %s52 = sphi 0, %s51
    %s66 = sphi 0, %s52
    %s70 = sphi 0, %s70
    %s72 = sphi 0, %s70
    %s73 = sphi 0, %s72
    %s87 = sphi 0, %s73
    %s91 = sphi 0, %s91
    %s93 = sphi 0, %s91
    %s94 = sphi 0, %s93
    %s108 = sphi 0, %s94
    %s112 = sphi 0, %s112
    %s114 = sphi 0, %s112
    %s115 = sphi 0, %s114
    %s129 = sphi 0, %s115
    %s133 = sphi 0, %s133
    %s135 = sphi 0, %s133
    %s136 = sphi 0, %s135
    %s150 = sphi 0, %s136
    %s154 = sphi 0, %s154
    %s156 = sphi 0, %s154
    %s157 = sphi 0, %s156
    %s171 = sphi 0, %s157
    %s175 = sphi 0, %s175
    %s177 = sphi 0, %s175
    %s178 = sphi 0, %s177
    %s192 = sphi 0, %s178
    %s196 = sphi 0, %s196
    %s198 = sphi 0, %s196
    %s199 = sphi 0, %s198
    %s213 = sphi 0, %s199
    %s219 = sphi 0, %s221
    %s222 = sphi 0, %s219
    %s223 = sphi 0, %s222
    %s239 = sphi 0, %s223
  $region4: #{optical_network_forward.1} parent=0 // loop_header_branch
    %18 = sbr.rel (%p16) target = $region8
  $region5: #{optical_network_forward.1} parent=0 // loop_body
    %s20 = ssub.s32 %s15, 1
    %s21 = ssub.s32 %s15, 2
    %s22 = sadd.s32 %s15, 1
    %s23 = ssub.s32 %s15, %s22
    %p24 = scmp.eq.s32.totalorder %s23, 0
    %s26 = sadd.s32 %s25, 1
    %s27 = scalar_select %p24, %s25, %s26
    %p30 = pneg %p24
    %p31 = scmp.eq.s32.totalorder %s15, 1
    %p32 = por %p30, %p31
    %p33 = scmp.ne.s32.totalorder %s25, %s28
    %p34 = scmp.eq.s32.totalorder %s15, 0
    %p35 = por %p33, %p34
    %p36 = scmp.ne.s32.totalorder %s25, %s28
    %p37 = scmp.eq.s32.totalorder %s20, 1
    %p38 = por %p36, %p37
    %p39 = scmp.ne.s32.totalorder %s28, %s29
    %p40 = scmp.eq.s32.totalorder %s20, 0
    %p41 = por %p39, %p40
    %p42 = scmp.ne.s32.totalorder %s28, %s29
    %p43 = scmp.eq.s32.totalorder %s21, 1
    %p44 = por %p42, %p43
    %p46 = scmp.ne.s32.totalorder %s29, %s45
    %p47 = scmp.eq.s32.totalorder %s21, 0
    %p48 = por %p46, %p47
    %s50 = sadd.s32 %s49, 1
    %p53 = scmp.eq.s32.totalorder %s15, 1
    %p54 = scmp.ne.s32.totalorder %s49, %s51
    %p55 = scmp.eq.s32.totalorder %s15, 0
    %p56 = por %p54, %p55
    %p57 = scmp.ne.s32.totalorder %s49, %s51
    %p58 = scmp.eq.s32.totalorder %s20, 1
    %p59 = por %p57, %p58
    %p60 = scmp.ne.s32.totalorder %s51, %s52
    %p61 = scmp.eq.s32.totalorder %s20, 0
    %p62 = por %p60, %p61
    %p63 = scmp.ne.s32.totalorder %s51, %s52
    %p64 = scmp.eq.s32.totalorder %s21, 1
    %p65 = por %p63, %p64
    %p67 = scmp.ne.s32.totalorder %s52, %s66
    %p68 = scmp.eq.s32.totalorder %s21, 0
    %p69 = por %p67, %p68
    %s71 = sadd.s32 %s70, 1
    %p74 = scmp.eq.s32.totalorder %s15, 1
    %p75 = scmp.ne.s32.totalorder %s70, %s72
    %p76 = scmp.eq.s32.totalorder %s15, 0
    %p77 = por %p75, %p76
    %p78 = scmp.ne.s32.totalorder %s70, %s72
    %p79 = scmp.eq.s32.totalorder %s20, 1
    %p80 = por %p78, %p79
    %p81 = scmp.ne.s32.totalorder %s72, %s73
    %p82 = scmp.eq.s32.totalorder %s20, 0
    %p83 = por %p81, %p82
    %p84 = scmp.ne.s32.totalorder %s72, %s73
    %p85 = scmp.eq.s32.totalorder %s21, 1
    %p86 = por %p84, %p85
    %p88 = scmp.ne.s32.totalorder %s73, %s87
    %p89 = scmp.eq.s32.totalorder %s21, 0
    %p90 = por %p88, %p89
    %s92 = sadd.s32 %s91, 1
    %p95 = scmp.eq.s32.totalorder %s15, 1
    %p96 = scmp.ne.s32.totalorder %s91, %s93
    %p97 = scmp.eq.s32.totalorder %s15, 0
    %p98 = por %p96, %p97
    %p99 = scmp.ne.s32.totalorder %s91, %s93
    %p100 = scmp.eq.s32.totalorder %s20, 1
    %p101 = por %p99, %p100
    %p102 = scmp.ne.s32.totalorder %s93, %s94
    %p103 = scmp.eq.s32.totalorder %s20, 0
    %p104 = por %p102, %p103
    %p105 = scmp.ne.s32.totalorder %s93, %s94
    %p106 = scmp.eq.s32.totalorder %s21, 1
    %p107 = por %p105, %p106
    %p109 = scmp.ne.s32.totalorder %s94, %s108
    %p110 = scmp.eq.s32.totalorder %s21, 0
    %p111 = por %p109, %p110
    %s113 = sadd.s32 %s112, 1
    %p116 = scmp.eq.s32.totalorder %s15, 1
    %p117 = scmp.ne.s32.totalorder %s112, %s114
    %p118 = scmp.eq.s32.totalorder %s15, 0
    %p119 = por %p117, %p118
    %p120 = scmp.ne.s32.totalorder %s112, %s114
    %p121 = scmp.eq.s32.totalorder %s20, 1
    %p122 = por %p120, %p121
    %p123 = scmp.ne.s32.totalorder %s114, %s115
    %p124 = scmp.eq.s32.totalorder %s20, 0
    %p125 = por %p123, %p124
    %p126 = scmp.ne.s32.totalorder %s114, %s115
    %p127 = scmp.eq.s32.totalorder %s21, 1
    %p128 = por %p126, %p127
    %p130 = scmp.ne.s32.totalorder %s115, %s129
    %p131 = scmp.eq.s32.totalorder %s21, 0
    %p132 = por %p130, %p131
    %s134 = sadd.s32 %s133, 1
    %p137 = scmp.eq.s32.totalorder %s15, 1
    %p138 = scmp.ne.s32.totalorder %s133, %s135
    %p139 = scmp.eq.s32.totalorder %s15, 0
    %p140 = por %p138, %p139
    %p141 = scmp.ne.s32.totalorder %s133, %s135
    %p142 = scmp.eq.s32.totalorder %s20, 1
    %p143 = por %p141, %p142
    %p144 = scmp.ne.s32.totalorder %s135, %s136
    %p145 = scmp.eq.s32.totalorder %s20, 0
    %p146 = por %p144, %p145
    %p147 = scmp.ne.s32.totalorder %s135, %s136
    %p148 = scmp.eq.s32.totalorder %s21, 1
    %p149 = por %p147, %p148
    %p151 = scmp.ne.s32.totalorder %s136, %s150
    %p152 = scmp.eq.s32.totalorder %s21, 0
    %p153 = por %p151, %p152
    %s155 = sadd.s32 %s154, 1
    %p158 = scmp.eq.s32.totalorder %s15, 1
    %p159 = scmp.ne.s32.totalorder %s154, %s156
    %p160 = scmp.eq.s32.totalorder %s15, 0
    %p161 = por %p159, %p160
    %p162 = scmp.ne.s32.totalorder %s154, %s156
    %p163 = scmp.eq.s32.totalorder %s20, 1
    %p164 = por %p162, %p163
    %p165 = scmp.ne.s32.totalorder %s156, %s157
    %p166 = scmp.eq.s32.totalorder %s20, 0
    %p167 = por %p165, %p166
    %p168 = scmp.ne.s32.totalorder %s156, %s157
    %p169 = scmp.eq.s32.totalorder %s21, 1
    %p170 = por %p168, %p169
    %p172 = scmp.ne.s32.totalorder %s157, %s171
    %p173 = scmp.eq.s32.totalorder %s21, 0
    %p174 = por %p172, %p173
    %s176 = sadd.s32 %s175, 1
    %p179 = scmp.eq.s32.totalorder %s15, 1
    %p180 = scmp.ne.s32.totalorder %s175, %s177
    %p181 = scmp.eq.s32.totalorder %s15, 0
    %p182 = por %p180, %p181
    %p183 = scmp.ne.s32.totalorder %s175, %s177
    %p184 = scmp.eq.s32.totalorder %s20, 1
    %p185 = por %p183, %p184
    %p186 = scmp.ne.s32.totalorder %s177, %s178
    %p187 = scmp.eq.s32.totalorder %s20, 0
    %p188 = por %p186, %p187
    %p189 = scmp.ne.s32.totalorder %s177, %s178
    %p190 = scmp.eq.s32.totalorder %s21, 1
    %p191 = por %p189, %p190
    %p193 = scmp.ne.s32.totalorder %s178, %s192
    %p194 = scmp.eq.s32.totalorder %s21, 0
    %p195 = por %p193, %p194
    %s197 = sadd.s32 %s196, 1
    %p200 = scmp.eq.s32.totalorder %s15, 1
    %p201 = scmp.ne.s32.totalorder %s196, %s198
    %p202 = scmp.eq.s32.totalorder %s15, 0
    %p203 = por %p201, %p202
    %p204 = scmp.ne.s32.totalorder %s196, %s198
    %p205 = scmp.eq.s32.totalorder %s20, 1
    %p206 = por %p204, %p205
    %p207 = scmp.ne.s32.totalorder %s198, %s199
    %p208 = scmp.eq.s32.totalorder %s20, 0
    %p209 = por %p207, %p208
    %p210 = scmp.ne.s32.totalorder %s198, %s199
    %p211 = scmp.eq.s32.totalorder %s21, 1
    %p212 = por %p210, %p211
    %p214 = scmp.ne.s32.totalorder %s199, %s213
    %p215 = scmp.eq.s32.totalorder %s21, 0
    %p216 = por %p214, %p215
    %s217 = ssub.s32 %s15, %s22
    %p218 = scmp.eq.s32.totalorder %s217, 0
    %s220 = sadd.s32 %s219, 1
    %s221 = scalar_select %p218, %s219, %s220
    %p224 = pneg %p218
    %p225 = scmp.eq.s32.totalorder %s15, 1
    %p226 = por %p224, %p225
    %p227 = scmp.ne.s32.totalorder %s219, %s222
    %p228 = scmp.eq.s32.totalorder %s15, 0
    %p229 = por %p227, %p228
    %p230 = scmp.ne.s32.totalorder %s219, %s222
    %p231 = scmp.eq.s32.totalorder %s20, 1
    %p232 = por %p230, %p231
    %p233 = scmp.ne.s32.totalorder %s222, %s223
    %p234 = scmp.eq.s32.totalorder %s20, 0
    %p235 = por %p233, %p234
    %p236 = scmp.ne.s32.totalorder %s222, %s223
    %p237 = scmp.eq.s32.totalorder %s21, 1
    %p238 = por %p236, %p237
    %p240 = scmp.ne.s32.totalorder %s223, %s239
    %p241 = scmp.eq.s32.totalorder %s21, 0
    %p242 = por %p240, %p241
    %p243 = scmp.le.s32.totalorder 1, %s15
    %p244 = scmp.lt.s32.totalorder %s15, 3
    %p245 = pnand %p243, %p244
    %p246 = pneg %p245
    // Predicated region
    $region9: #{optical_network_forward.1} parent=5 // pred_check
      _
    $region10: #{optical_network_forward.1} parent=5 // pred_check_branch
      %248 = sbr.rel (%p245) target = $region12
    $region11: #{optical_network_forward.1} parent=5 // pred_region
      %s249 = ssub.s32 %s15, 1
      // Predicated region
      $region13: #{optical_network_forward.1} parent=11 // pred_check
        %p250 = pneg %p62
      $region14: #{optical_network_forward.1} parent=11 // pred_check_branch
        %252 = sbr.rel (%p250) target = $region16
      $region15: #{optical_network_forward.1} parent=11 // pred_region
        _
      $region16: #{optical_network_forward.1} parent=11 // pred_fallthru
        _
      // Predicated region
      $region17: #{optical_network_forward.1} parent=11 // pred_check
        %p253 = pneg %p83
      $region18: #{optical_network_forward.1} parent=11 // pred_check_branch
        %255 = sbr.rel (%p253) target = $region20
      $region19: #{optical_network_forward.1} parent=11 // pred_region
        _
      $region20: #{optical_network_forward.1} parent=11 // pred_fallthru
        _
      // Predicated region
      $region21: #{optical_network_forward.1} parent=11 // pred_check
        %p256 = pneg %p104
      $region22: #{optical_network_forward.1} parent=11 // pred_check_branch
        %258 = sbr.rel (%p256) target = $region24
      $region23: #{optical_network_forward.1} parent=11 // pred_region
        _
      $region24: #{optical_network_forward.1} parent=11 // pred_fallthru
        _
      // Predicated region
      $region25: #{optical_network_forward.1} parent=11 // pred_check
        %p259 = pneg %p125
      $region26: #{optical_network_forward.1} parent=11 // pred_check_branch
        %261 = sbr.rel (%p259) target = $region28
      $region27: #{optical_network_forward.1} parent=11 // pred_region
        _
      $region28: #{optical_network_forward.1} parent=11 // pred_fallthru
        _
      // Predicated region
      $region29: #{optical_network_forward.1} parent=11 // pred_check
        %p262 = pneg %p146
      $region30: #{optical_network_forward.1} parent=11 // pred_check_branch
        %264 = sbr.rel (%p262) target = $region32
      $region31: #{optical_network_forward.1} parent=11 // pred_region
        _
      $region32: #{optical_network_forward.1} parent=11 // pred_fallthru
        _
      // Predicated region
      $region33: #{optical_network_forward.1} parent=11 // pred_check
        %p265 = pneg %p167
      $region34: #{optical_network_forward.1} parent=11 // pred_check_branch
        %267 = sbr.rel (%p265) target = $region36
      $region35: #{optical_network_forward.1} parent=11 // pred_region
        _
      $region36: #{optical_network_forward.1} parent=11 // pred_fallthru
        _
      // Predicated region
      $region37: #{optical_network_forward.1} parent=11 // pred_check
        %p268 = pneg %p188
      $region38: #{optical_network_forward.1} parent=11 // pred_check_branch
        %270 = sbr.rel (%p268) target = $region40
      $region39: #{optical_network_forward.1} parent=11 // pred_region
        _
      $region40: #{optical_network_forward.1} parent=11 // pred_fallthru
        _
      // Predicated region
      $region41: #{optical_network_forward.1} parent=11 // pred_check
        %p271 = pneg %p209
      $region42: #{optical_network_forward.1} parent=11 // pred_check_branch
        %273 = sbr.rel (%p271) target = $region44
      $region43: #{optical_network_forward.1} parent=11 // pred_region
        _
      $region44: #{optical_network_forward.1} parent=11 // pred_fallthru
        _
    $region12: #{optical_network_forward.1} parent=5 // pred_fallthru
      _
    %p274 = scmp.lt.s32.totalorder %s15, 2
    // Predicated region
    $region45: #{optical_network_forward.1} parent=5 // pred_check
      %p275 = pneg %p274
    $region46: #{optical_network_forward.1} parent=5 // pred_check_branch
      %277 = sbr.rel (%p275) target = $region48
    $region47: #{optical_network_forward.1} parent=5 // pred_region
      // Predicated region
      $region49: #{optical_network_forward.1} parent=47 // pred_check
        %p278 = pneg %p35
      $region50: #{optical_network_forward.1} parent=47 // pred_check_branch
        %280 = sbr.rel (%p278) target = $region52
      $region51: #{optical_network_forward.1} parent=47 // pred_region
        %p281 = scmp.lt.s32.totalorder %s15, 1
        %s282 = scalar_select %p281, %s15, 1
        %s283 = smul.addr %s282, 4
        %s284 = smul.addr %s283, 8
        %s285 = scalar_lea.vmem %s0, %s284
      $region52: #{optical_network_forward.1} parent=47 // pred_fallthru
        _
    $region48: #{optical_network_forward.1} parent=5 // pred_fallthru
      _
    %p286 = scmp.le.s32.totalorder 1, %s15
    %p287 = scmp.lt.s32.totalorder %s15, 3
    %p288 = pnand %p286, %p287
    %p289 = pneg %p288
    // Predicated region
    $region53: #{optical_network_forward.1} parent=5 // pred_check
      _
    $region54: #{optical_network_forward.1} parent=5 // pred_check_branch
      %291 = sbr.rel (%p288) target = $region56
    $region55: #{optical_network_forward.1} parent=5 // pred_region
      %s292 = ssub.s32 %s15, 1
      %p293 = scmp.lt.s32.totalorder %s20, 1
      %s294 = scalar_select %p293, %s20, 1
      %s295 = smul.addr %s294, 4
      %s296 = smul.addr %s295, 8
      %s297 = scalar_lea.vmem %s0, %s296
      %p298 = pneg %p41
      %p299 = pneg %p38
      %p300 = pneg %p62
      %p301 = pneg %p59
      %p302 = pneg %p83
      %p303 = pneg %p80
      %p304 = pneg %p104
      %p305 = pneg %p101
      %p306 = pneg %p125
      %p307 = pneg %p122
      %p308 = pneg %p146
      %p309 = pneg %p143
      %p310 = pneg %p167
      %p311 = pneg %p164
      %p312 = pneg %p188
      %p313 = pneg %p185
      %p314 = pneg %p209
      %p315 = pneg %p206
      %p316 = pneg %p235
      %p317 = pneg %p232
      %p318 = scmp.lt.s32.totalorder %s20, 1
      %s319 = scalar_select %p318, %s20, 1
      %s320 = smul.addr %s319, 2
      %s321 = smul.addr %s320, 8
      %s322 = scalar_lea.vmem %s9, %s321
      %p323 = scmp.lt.s32.totalorder %s20, 1
      %s324 = scalar_select %p323, %s20, 1
      %s325 = smul.addr %s324, 4
      %s326 = smul.addr %s325, 8
      %s327 = scalar_lea.vmem %s0, %s326
      %p328 = scmp.lt.s32.totalorder %s20, 1
      %s329 = scalar_select %p328, %s20, 1
      %s330 = smul.addr %s329, 2
      %s331 = smul.addr %s330, 8
      %s332 = scalar_lea.vmem %s9, %s331
      %v333 = vld [vmem:[%s327] sm:$0xff]
      %v334 = vld [vmem:[%s327 + $0x8] sm:$0xff]
      %v335 = vld [vmem:[%s327 + $0x10] sm:$0xff]
      %v336 = vld [vmem:[%s327 + $0x18] sm:$0xff]
      %v337 = vld [vmem:[%s1] sm:$0xff]
      %v338 = vld [vmem:[%s1 + $0x8] sm:$0xff]
      %v339 = vld [vmem:[%s1 + $0x10] sm:$0xff]
      %v340 = vld [vmem:[%s1 + $0x18] sm:$0xff]
      %v341 = vld [vmem:[%s2] sm:$0xff]
      %v342 = vld [vmem:[%s2 + $0x8] sm:$0xff]
      %v343 = vld [vmem:[%s2 + $0x10] sm:$0xff]
      %v344 = vld [vmem:[%s2 + $0x18] sm:$0xff]
      %v345 = vld [vmem:[%s4] sm:$0xff]
      %v346 = vld [vmem:[%s4 + $0x8] sm:$0xff]
      %v347 = vld [vmem:[%s4 + $0x10] sm:$0xff]
      %v348 = vld [vmem:[%s4 + $0x18] sm:$0xff]
      %v349 = vld [vmem:[%s4 + $0x20] sm:$0xff]
      %v350 = vld [vmem:[%s4 + $0x28] sm:$0xff]
      %v351 = vld [vmem:[%s5] sm:$0xff]
      %v352 = vld [vmem:[%s5 + $0x8] sm:$0xff]
      %v353 = vld [vmem:[%s5 + $0x10] sm:$0xff]
      %v354 = vld [vmem:[%s5 + $0x18] sm:$0xff]
      %v355 = vld [vmem:[%s7] sm:$0xff]
      %v356 = vld [vmem:[%s7 + $0x8] sm:$0xff]
      %v357 = vld [vmem:[%s7 + $0x10] sm:$0xff]
      %v358 = vld [vmem:[%s7 + $0x18] sm:$0xff]
      %v359 = vld [vmem:[%s8] sm:$0xff]
      %v360 = vld [vmem:[%s8 + $0x8] sm:$0xff]
      %v361 = vld [vmem:[%s8 + $0x10] sm:$0xff]
      %v362 = vld [vmem:[%s8 + $0x18] sm:$0xff]
      %v363 = vld [vmem:[%s8 + $0x20] sm:$0xff]
      %v364 = vld [vmem:[%s8 + $0x28] sm:$0xff]
      %v365 = vld [vmem:[%s3] sm:$0xff]
      %v366 = vld [vmem:[%s3 + $0x8] sm:$0xff]
      %v367 = vld [vmem:[%s3 + $0x10] sm:$0xff]
      %v368 = vld [vmem:[%s3 + $0x18] sm:$0xff]
      %v369 = vld [vmem:[%s3 + $0x20] sm:$0xff]
      %v370 = vld [vmem:[%s3 + $0x28] sm:$0xff]
      %v371 = vld [vmem:[%s3 + $0x30] sm:$0xff]
      %v372 = vld [vmem:[%s3 + $0x38] sm:$0xff]
      %v373 = vld [vmem:[%s3 + $0x40] sm:$0xff]
      %v374 = vld [vmem:[%s3 + $0x48] sm:$0xff]
      %v375 = vld [vmem:[%s3 + $0x50] sm:$0xff]
      %v376 = vld [vmem:[%s3 + $0x58] sm:$0xff]
      %v377 = vld [vmem:[%s3 + $0x60] sm:$0xff]
      %v378 = vld [vmem:[%s3 + $0x68] sm:$0xff]
      %v379 = vld [vmem:[%s3 + $0x70] sm:$0xff]
      %v380 = vld [vmem:[%s3 + $0x78] sm:$0xff]
      %v381 = vld [vmem:[%s6] sm:$0xff]
      %v382 = vld [vmem:[%s6 + $0x8] sm:$0xff]
      %v383 = vld [vmem:[%s6 + $0x10] sm:$0xff]
      %v384 = vld [vmem:[%s6 + $0x18] sm:$0xff]
      %v385 = vld [vmem:[%s6 + $0x20] sm:$0xff]
      %v386 = vld [vmem:[%s6 + $0x28] sm:$0xff]
      %v387 = vld [vmem:[%s6 + $0x30] sm:$0xff]
      %v388 = vld [vmem:[%s6 + $0x38] sm:$0xff]
      %v389 = vld [vmem:[%s6 + $0x40] sm:$0xff]
      %v390 = vmul.f32 %v333, %v365
      %v391 = vmul.f32 %v334, %v366
      %v392 = vmul.f32 %v335, %v367
      %v393 = vmul.f32 %v336, %v368
      %v394 = vsub.f32 %v390, %v392
      %v395 = vsub.f32 %v391, %v393
      %v396 = vmul.f32 %v333, %v367
      %v397 = vmul.f32 %v334, %v368
      %v398 = vmul.f32 %v335, %v365
      %v399 = vmul.f32 %v336, %v366
      %v400 = vadd.f32 %v396, %v398
      %v401 = vadd.f32 %v397, %v399
      %vm402 = vcmask 130048
      %v404 = vsel %vm402, %v337, 0
      %v407 = vsel %vm402, %v338, 0
      %409 = vmatpush.msra.mxu0 0.0
      %410 = vmatpush.msra.mxu0 0.0
      %411 = vmatpush.msra.mxu0 0.0
      %412 = vmatpush.msra.mxu0 0.0
      %413 = vmatpush.msra.mxu0 0.0
      %414 = vmatpush.msra.mxu0 0.0
      %415 = vmatpush.msra.mxu0 0.0
      %416 = vmatpush.msra.mxu0 0.0
      %417 = vmatpush.msra.mxu0 0.0
      %418 = vmatpush.msra.mxu0 0.0
      %419 = vmatpush.msra.mxu0 0.0
      %420 = vmatpush.msra.mxu0 0.0
      %421 = vmatpush.msra.mxu0 0.0
      %422 = vmatpush.msra.mxu0 0.0
      %423 = vmatpush.msra.mxu0 %v395
      %424 = vmatpush.msra.mxu0 %v394
      %425 = vmatmul.f32.gmra.mxu0 %v404
      %v426 = vpop.f32.mrf.mxu0
      %v427 = vadd.f32 0.0, %v426
      %428 = vmatmul.f32.gmra.mxu0 %v407
      %v429 = vpop.f32.mrf.mxu0
      %v430 = vadd.f32 0.0, %v429
      %431 = vdwg.mxu0
      %v433 = vsel %vm402, %v339, 0
      %v436 = vsel %vm402, %v340, 0
      %438 = vmatpush.msra.mxu0 0.0
      %439 = vmatpush.msra.mxu0 0.0
      %440 = vmatpush.msra.mxu0 0.0
      %441 = vmatpush.msra.mxu0 0.0
      %442 = vmatpush.msra.mxu0 0.0
      %443 = vmatpush.msra.mxu0 0.0
      %444 = vmatpush.msra.mxu0 0.0
      %445 = vmatpush.msra.mxu0 0.0
      %446 = vmatpush.msra.mxu0 0.0
      %447 = vmatpush.msra.mxu0 0.0
      %448 = vmatpush.msra.mxu0 0.0
      %449 = vmatpush.msra.mxu0 0.0
      %450 = vmatpush.msra.mxu0 0.0
      %451 = vmatpush.msra.mxu0 0.0
      %452 = vmatpush.msra.mxu0 %v401
      %453 = vmatpush.msra.mxu0 %v400
      %454 = vmatmul.f32.gmra.mxu0 %v433
      %v455 = vpop.f32.mrf.mxu0
      %v456 = vadd.f32 0.0, %v455
      %457 = vmatmul.f32.gmra.mxu0 %v436
      %v458 = vpop.f32.mrf.mxu0
      %v459 = vadd.f32 0.0, %v458
      %460 = vdwg.mxu0
      %v461 = vsub.f32 %v427, %v456
      %v462 = vsub.f32 %v430, %v459
      %463 = vmatpush.msra.mxu0 0.0
      %464 = vmatpush.msra.mxu0 0.0
      %465 = vmatpush.msra.mxu0 0.0
      %466 = vmatpush.msra.mxu0 0.0
      %467 = vmatpush.msra.mxu0 0.0
      %468 = vmatpush.msra.mxu0 0.0
      %469 = vmatpush.msra.mxu0 0.0
      %470 = vmatpush.msra.mxu0 0.0
      %471 = vmatpush.msra.mxu0 0.0
      %472 = vmatpush.msra.mxu0 0.0
      %473 = vmatpush.msra.mxu0 0.0
      %474 = vmatpush.msra.mxu0 0.0
      %475 = vmatpush.msra.mxu0 0.0
      %476 = vmatpush.msra.mxu0 0.0
      %477 = vmatpush.msra.mxu0 %v395
      %478 = vmatpush.msra.mxu0 %v394
      %479 = vmatmul.f32.gmra.mxu0 %v433
      %v480 = vpop.f32.mrf.mxu0
      %v481 = vadd.f32 0.0, %v480
      %482 = vmatmul.f32.gmra.mxu0 %v436
      %v483 = vpop.f32.mrf.mxu0
      %v484 = vadd.f32 0.0, %v483
      %485 = vdwg.mxu0
      %486 = vmatpush.msra.mxu0 0.0
      %487 = vmatpush.msra.mxu0 0.0
      %488 = vmatpush.msra.mxu0 0.0
      %489 = vmatpush.msra.mxu0 0.0
      %490 = vmatpush.msra.mxu0 0.0
      %491 = vmatpush.msra.mxu0 0.0
      %492 = vmatpush.msra.mxu0 0.0
      %493 = vmatpush.msra.mxu0 0.0
      %494 = vmatpush.msra.mxu0 0.0
      %495 = vmatpush.msra.mxu0 0.0
      %496 = vmatpush.msra.mxu0 0.0
      %497 = vmatpush.msra.mxu0 0.0
      %498 = vmatpush.msra.mxu0 0.0
      %499 = vmatpush.msra.mxu0 0.0
      %500 = vmatpush.msra.mxu0 %v401
      %501 = vmatpush.msra.mxu0 %v400
      %502 = vmatmul.f32.gmra.mxu0 %v404
      %v503 = vpop.f32.mrf.mxu0
      %v504 = vadd.f32 %v481, %v503
      %505 = vmatmul.f32.gmra.mxu0 %v407
      %v506 = vpop.f32.mrf.mxu0
      %v507 = vadd.f32 %v484, %v506
      %508 = vdwg.mxu0
      %v510 = vsel %vm402, %v461, 0
      %v513 = vsel %vm402, %v462, 0
      %515 = vmatpush.msra.mxu0 0.0
      %516 = vmatpush.msra.mxu0 0.0
      %517 = vmatpush.msra.mxu0 0.0
      %518 = vmatpush.msra.mxu0 0.0
      %519 = vmatpush.msra.mxu0 0.0
      %520 = vmatpush.msra.mxu0 0.0
      %521 = vmatpush.msra.mxu0 0.0
      %522 = vmatpush.msra.mxu0 0.0
      %523 = vmatpush.msra.mxu0 0.0
      %524 = vmatpush.msra.mxu0 0.0
      %525 = vmatpush.msra.mxu0 0.0
      %526 = vmatpush.msra.mxu0 0.0
      %527 = vmatpush.msra.mxu0 0.0
      %528 = vmatpush.msra.mxu0 0.0
      %529 = vmatpush.msra.mxu0 %v342
      %530 = vmatpush.msra.mxu0 %v341
      %531 = vmatmul.f32.gmra.mxu0 %v510
      %v532 = vpop.f32.mrf.mxu0
      %v533 = vadd.f32 0.0, %v532
      %534 = vmatmul.f32.gmra.mxu0 %v513
      %v535 = vpop.f32.mrf.mxu0
      %v536 = vadd.f32 0.0, %v535
      %537 = vdwg.mxu0
      %v539 = vsel %vm402, %v504, 0
      %v542 = vsel %vm402, %v507, 0
      %544 = vmatpush.msra.mxu0 0.0
      %545 = vmatpush.msra.mxu0 0.0
      %546 = vmatpush.msra.mxu0 0.0
      %547 = vmatpush.msra.mxu0 0.0
      %548 = vmatpush.msra.mxu0 0.0
      %549 = vmatpush.msra.mxu0 0.0
      %550 = vmatpush.msra.mxu0 0.0
      %551 = vmatpush.msra.mxu0 0.0
      %552 = vmatpush.msra.mxu0 0.0
      %553 = vmatpush.msra.mxu0 0.0
      %554 = vmatpush.msra.mxu0 0.0
      %555 = vmatpush.msra.mxu0 0.0
      %556 = vmatpush.msra.mxu0 0.0
      %557 = vmatpush.msra.mxu0 0.0
      %558 = vmatpush.msra.mxu0 %v344
      %559 = vmatpush.msra.mxu0 %v343
      %560 = vmatmul.f32.gmra.mxu0 %v539
      %v561 = vpop.f32.mrf.mxu0
      %v562 = vadd.f32 0.0, %v561
      %563 = vmatmul.f32.gmra.mxu0 %v542
      %v564 = vpop.f32.mrf.mxu0
      %v565 = vadd.f32 0.0, %v564
      %566 = vdwg.mxu0
      %v567 = vsub.f32 %v533, %v562
      %v568 = vsub.f32 %v536, %v565
      %569 = vmatpush.msra.mxu0 0.0
      %570 = vmatpush.msra.mxu0 0.0
      %571 = vmatpush.msra.mxu0 0.0
      %572 = vmatpush.msra.mxu0 0.0
      %573 = vmatpush.msra.mxu0 0.0
      %574 = vmatpush.msra.mxu0 0.0
      %575 = vmatpush.msra.mxu0 0.0
      %576 = vmatpush.msra.mxu0 0.0
      %577 = vmatpush.msra.mxu0 0.0
      %578 = vmatpush.msra.mxu0 0.0
      %579 = vmatpush.msra.mxu0 0.0
      %580 = vmatpush.msra.mxu0 0.0
      %581 = vmatpush.msra.mxu0 0.0
      %582 = vmatpush.msra.mxu0 0.0
      %583 = vmatpush.msra.mxu0 %v342
      %584 = vmatpush.msra.mxu0 %v341
      %585 = vmatmul.f32.gmra.mxu0 %v539
      %v586 = vpop.f32.mrf.mxu0
      %v587 = vadd.f32 0.0, %v586
      %588 = vmatmul.f32.gmra.mxu0 %v542
      %v589 = vpop.f32.mrf.mxu0
      %v590 = vadd.f32 0.0, %v589
      %591 = vdwg.mxu0
      %592 = vmatpush.msra.mxu0 0.0
      %593 = vmatpush.msra.mxu0 0.0
      %594 = vmatpush.msra.mxu0 0.0
      %595 = vmatpush.msra.mxu0 0.0
      %596 = vmatpush.msra.mxu0 0.0
      %597 = vmatpush.msra.mxu0 0.0
      %598 = vmatpush.msra.mxu0 0.0
      %599 = vmatpush.msra.mxu0 0.0
      %600 = vmatpush.msra.mxu0 0.0
      %601 = vmatpush.msra.mxu0 0.0
      %602 = vmatpush.msra.mxu0 0.0
      %603 = vmatpush.msra.mxu0 0.0
      %604 = vmatpush.msra.mxu0 0.0
      %605 = vmatpush.msra.mxu0 0.0
      %606 = vmatpush.msra.mxu0 %v344
      %607 = vmatpush.msra.mxu0 %v343
      %608 = vmatmul.f32.gmra.mxu0 %v510
      %v609 = vpop.f32.mrf.mxu0
      %v610 = vadd.f32 %v587, %v609
      %611 = vmatmul.f32.gmra.mxu0 %v513
      %v612 = vpop.f32.mrf.mxu0
      %v613 = vadd.f32 %v590, %v612
      %614 = vdwg.mxu0
      %v616 = vsel %vm402, %v345, 0
      %v619 = vsel %vm402, %v346, 0
      %v622 = vsel %vm402, %v347, 0
      %624 = vmatpush.msra.mxu0 0.0
      %625 = vmatpush.msra.mxu0 0.0
      %626 = vmatpush.msra.mxu0 0.0
      %627 = vmatpush.msra.mxu0 0.0
      %628 = vmatpush.msra.mxu0 0.0
      %629 = vmatpush.msra.mxu0 0.0
      %630 = vmatpush.msra.mxu0 0.0
      %631 = vmatpush.msra.mxu0 0.0
      %632 = vmatpush.msra.mxu0 0.0
      %633 = vmatpush.msra.mxu0 0.0
      %634 = vmatpush.msra.mxu0 0.0
      %635 = vmatpush.msra.mxu0 0.0
      %636 = vmatpush.msra.mxu0 0.0
      %637 = vmatpush.msra.mxu0 0.0
      %638 = vmatpush.msra.mxu0 %v568
      %639 = vmatpush.msra.mxu0 %v567
      %640 = vmatmul.f32.gmra.mxu0 %v616
      %v641 = vpop.f32.mrf.mxu0
      %v642 = vadd.f32 0.0, %v641
      %643 = vmatmul.f32.gmra.mxu0 %v619
      %v644 = vpop.f32.mrf.mxu0
      %v645 = vadd.f32 0.0, %v644
      %646 = vmatmul.f32.gmra.mxu0 %v622
      %v647 = vpop.f32.mrf.mxu0
      %v648 = vadd.f32 0.0, %v647
      %649 = vdwg.mxu0
      %v651 = vsel %vm402, %v348, 0
      %v654 = vsel %vm402, %v349, 0
      %v657 = vsel %vm402, %v350, 0
      %659 = vmatpush.msra.mxu0 0.0
      %660 = vmatpush.msra.mxu0 0.0
      %661 = vmatpush.msra.mxu0 0.0
      %662 = vmatpush.msra.mxu0 0.0
      %663 = vmatpush.msra.mxu0 0.0
      %664 = vmatpush.msra.mxu0 0.0
      %665 = vmatpush.msra.mxu0 0.0
      %666 = vmatpush.msra.mxu0 0.0
      %667 = vmatpush.msra.mxu0 0.0
      %668 = vmatpush.msra.mxu0 0.0
      %669 = vmatpush.msra.mxu0 0.0
      %670 = vmatpush.msra.mxu0 0.0
      %671 = vmatpush.msra.mxu0 0.0
      %672 = vmatpush.msra.mxu0 0.0
      %673 = vmatpush.msra.mxu0 %v613
      %674 = vmatpush.msra.mxu0 %v610
      %675 = vmatmul.f32.gmra.mxu0 %v651
      %v676 = vpop.f32.mrf.mxu0
      %v677 = vadd.f32 0.0, %v676
      %678 = vmatmul.f32.gmra.mxu0 %v654
      %v679 = vpop.f32.mrf.mxu0
      %v680 = vadd.f32 0.0, %v679
      %681 = vmatmul.f32.gmra.mxu0 %v657
      %v682 = vpop.f32.mrf.mxu0
      %v683 = vadd.f32 0.0, %v682
      %684 = vdwg.mxu0
      %v685 = vsub.f32 %v642, %v677
      %v686 = vsub.f32 %v645, %v680
      %v687 = vsub.f32 %v648, %v683
      %688 = vmatpush.msra.mxu0 0.0
      %689 = vmatpush.msra.mxu0 0.0
      %690 = vmatpush.msra.mxu0 0.0
      %691 = vmatpush.msra.mxu0 0.0
      %692 = vmatpush.msra.mxu0 0.0
      %693 = vmatpush.msra.mxu0 0.0
      %694 = vmatpush.msra.mxu0 0.0
      %695 = vmatpush.msra.mxu0 0.0
      %696 = vmatpush.msra.mxu0 0.0
      %697 = vmatpush.msra.mxu0 0.0
      %698 = vmatpush.msra.mxu0 0.0
      %699 = vmatpush.msra.mxu0 0.0
      %700 = vmatpush.msra.mxu0 0.0
      %701 = vmatpush.msra.mxu0 0.0
      %702 = vmatpush.msra.mxu0 %v568
      %703 = vmatpush.msra.mxu0 %v567
      %704 = vmatmul.f32.gmra.mxu0 %v651
      %v705 = vpop.f32.mrf.mxu0
      %v706 = vadd.f32 0.0, %v705
      %707 = vmatmul.f32.gmra.mxu0 %v654
      %v708 = vpop.f32.mrf.mxu0
      %v709 = vadd.f32 0.0, %v708
      %710 = vmatmul.f32.gmra.mxu0 %v657
      %v711 = vpop.f32.mrf.mxu0
      %v712 = vadd.f32 0.0, %v711
      %713 = vdwg.mxu0
      %714 = vmatpush.msra.mxu0 0.0
      %715 = vmatpush.msra.mxu0 0.0
      %716 = vmatpush.msra.mxu0 0.0
      %717 = vmatpush.msra.mxu0 0.0
      %718 = vmatpush.msra.mxu0 0.0
      %719 = vmatpush.msra.mxu0 0.0
      %720 = vmatpush.msra.mxu0 0.0
      %721 = vmatpush.msra.mxu0 0.0
      %722 = vmatpush.msra.mxu0 0.0
      %723 = vmatpush.msra.mxu0 0.0
      %724 = vmatpush.msra.mxu0 0.0
      %725 = vmatpush.msra.mxu0 0.0
      %726 = vmatpush.msra.mxu0 0.0
      %727 = vmatpush.msra.mxu0 0.0
      %728 = vmatpush.msra.mxu0 %v613
      %729 = vmatpush.msra.mxu0 %v610
      %730 = vmatmul.f32.gmra.mxu0 %v616
      %v731 = vpop.f32.mrf.mxu0
      %v732 = vadd.f32 %v706, %v731
      %733 = vmatmul.f32.gmra.mxu0 %v619
      %v734 = vpop.f32.mrf.mxu0
      %v735 = vadd.f32 %v709, %v734
      %736 = vmatmul.f32.gmra.mxu0 %v622
      %v737 = vpop.f32.mrf.mxu0
      %v738 = vadd.f32 %v712, %v737
      %739 = vdwg.mxu0
      %v741 = vsel %vm402, %v685, 0
      %v744 = vsel %vm402, %v686, 0
      %v747 = vsel %vm402, %v687, 0
      %749 = vmatpush.msra.mxu0 0.0
      %750 = vmatpush.msra.mxu0 0.0
      %751 = vmatpush.msra.mxu0 0.0
      %752 = vmatpush.msra.mxu0 0.0
      %753 = vmatpush.msra.mxu0 0.0
      %754 = vmatpush.msra.mxu0 0.0
      %755 = vmatpush.msra.mxu0 0.0
      %756 = vmatpush.msra.mxu0 0.0
      %757 = vmatpush.msra.mxu0 0.0
      %758 = vmatpush.msra.mxu0 0.0
      %759 = vmatpush.msra.mxu0 0.0
      %760 = vmatpush.msra.mxu0 0.0
      %761 = vmatpush.msra.mxu0 0.0
      %762 = vmatpush.msra.mxu0 0.0
      %763 = vmatpush.msra.mxu0 %v352
      %764 = vmatpush.msra.mxu0 %v351
      %765 = vmatmul.f32.gmra.mxu0 %v741
      %v766 = vpop.f32.mrf.mxu0
      %v767 = vadd.f32 0.0, %v766
      %768 = vmatmul.f32.gmra.mxu0 %v744
      %v769 = vpop.f32.mrf.mxu0
      %v770 = vadd.f32 0.0, %v769
      %771 = vmatmul.f32.gmra.mxu0 %v747
      %v772 = vpop.f32.mrf.mxu0
      %v773 = vadd.f32 0.0, %v772
      %774 = vdwg.mxu0
      %v776 = vsel %vm402, %v732, 0
      %v779 = vsel %vm402, %v735, 0
      %v782 = vsel %vm402, %v738, 0
      %784 = vmatpush.msra.mxu0 0.0
      %785 = vmatpush.msra.mxu0 0.0
      %786 = vmatpush.msra.mxu0 0.0
      %787 = vmatpush.msra.mxu0 0.0
      %788 = vmatpush.msra.mxu0 0.0
      %789 = vmatpush.msra.mxu0 0.0
      %790 = vmatpush.msra.mxu0 0.0
      %791 = vmatpush.msra.mxu0 0.0
      %792 = vmatpush.msra.mxu0 0.0
      %793 = vmatpush.msra.mxu0 0.0
      %794 = vmatpush.msra.mxu0 0.0
      %795 = vmatpush.msra.mxu0 0.0
      %796 = vmatpush.msra.mxu0 0.0
      %797 = vmatpush.msra.mxu0 0.0
      %798 = vmatpush.msra.mxu0 %v354
      %799 = vmatpush.msra.mxu0 %v353
      %800 = vmatmul.f32.gmra.mxu0 %v776
      %v801 = vpop.f32.mrf.mxu0
      %v802 = vadd.f32 0.0, %v801
      %803 = vmatmul.f32.gmra.mxu0 %v779
      %v804 = vpop.f32.mrf.mxu0
      %v805 = vadd.f32 0.0, %v804
      %806 = vmatmul.f32.gmra.mxu0 %v782
      %v807 = vpop.f32.mrf.mxu0
      %v808 = vadd.f32 0.0, %v807
      %809 = vdwg.mxu0
      %v810 = vsub.f32 %v767, %v802
      %v811 = vsub.f32 %v770, %v805
      %v812 = vsub.f32 %v773, %v808
      %813 = vmatpush.msra.mxu0 0.0
      %814 = vmatpush.msra.mxu0 0.0
      %815 = vmatpush.msra.mxu0 0.0
      %816 = vmatpush.msra.mxu0 0.0
      %817 = vmatpush.msra.mxu0 0.0
      %818 = vmatpush.msra.mxu0 0.0
      %819 = vmatpush.msra.mxu0 0.0
      %820 = vmatpush.msra.mxu0 0.0
      %821 = vmatpush.msra.mxu0 0.0
      %822 = vmatpush.msra.mxu0 0.0
      %823 = vmatpush.msra.mxu0 0.0
      %824 = vmatpush.msra.mxu0 0.0
      %825 = vmatpush.msra.mxu0 0.0
      %826 = vmatpush.msra.mxu0 0.0
      %827 = vmatpush.msra.mxu0 %v352
      %828 = vmatpush.msra.mxu0 %v351
      %829 = vmatmul.f32.gmra.mxu0 %v776
      %v830 = vpop.f32.mrf.mxu0
      %v831 = vadd.f32 0.0, %v830
      %832 = vmatmul.f32.gmra.mxu0 %v779
      %v833 = vpop.f32.mrf.mxu0
      %v834 = vadd.f32 0.0, %v833
      %835 = vmatmul.f32.gmra.mxu0 %v782
      %v836 = vpop.f32.mrf.mxu0
      %v837 = vadd.f32 0.0, %v836
      %838 = vdwg.mxu0
      %839 = vmatpush.msra.mxu0 0.0
      %840 = vmatpush.msra.mxu0 0.0
      %841 = vmatpush.msra.mxu0 0.0
      %842 = vmatpush.msra.mxu0 0.0
      %843 = vmatpush.msra.mxu0 0.0
      %844 = vmatpush.msra.mxu0 0.0
      %845 = vmatpush.msra.mxu0 0.0
      %846 = vmatpush.msra.mxu0 0.0
      %847 = vmatpush.msra.mxu0 0.0
      %848 = vmatpush.msra.mxu0 0.0
      %849 = vmatpush.msra.mxu0 0.0
      %850 = vmatpush.msra.mxu0 0.0
      %851 = vmatpush.msra.mxu0 0.0
      %852 = vmatpush.msra.mxu0 0.0
      %853 = vmatpush.msra.mxu0 %v354
      %854 = vmatpush.msra.mxu0 %v353
      %855 = vmatmul.f32.gmra.mxu0 %v741
      %v856 = vpop.f32.mrf.mxu0
      %v857 = vadd.f32 %v831, %v856
      %858 = vmatmul.f32.gmra.mxu0 %v744
      %v859 = vpop.f32.mrf.mxu0
      %v860 = vadd.f32 %v834, %v859
      %861 = vmatmul.f32.gmra.mxu0 %v747
      %v862 = vpop.f32.mrf.mxu0
      %v863 = vadd.f32 %v837, %v862
      %864 = vdwg.mxu0
      %v865 = vmul.f32 %v810, %v381
      %v866 = vmul.f32 %v811, %v382
      %v867 = vmul.f32 %v812, %v383
      %v868 = vmul.f32 %v857, %v381
      %v869 = vmul.f32 %v860, %v382
      %v870 = vmul.f32 %v863, %v383
      %vm871 = vcmask 195584
      %v873 = vsel %vm871, %v355, 0
      %v876 = vsel %vm871, %v356, 0
      %878 = vmatpush.msra.mxu0 0.0
      %879 = vmatpush.msra.mxu0 0.0
      %880 = vmatpush.msra.mxu0 0.0
      %881 = vmatpush.msra.mxu0 0.0
      %882 = vmatpush.msra.mxu0 0.0
      %883 = vmatpush.msra.mxu0 0.0
      %884 = vmatpush.msra.mxu0 0.0
      %885 = vmatpush.msra.mxu0 0.0
      %886 = vmatpush.msra.mxu0 0.0
      %887 = vmatpush.msra.mxu0 0.0
      %888 = vmatpush.msra.mxu0 0.0
      %889 = vmatpush.msra.mxu0 0.0
      %890 = vmatpush.msra.mxu0 0.0
      %891 = vmatpush.msra.mxu0 %v867
      %892 = vmatpush.msra.mxu0 %v866
      %893 = vmatpush.msra.mxu0 %v865
      %894 = vmatmul.f32.gmra.mxu0 %v873
      %v895 = vpop.f32.mrf.mxu0
      %v896 = vadd.f32 0.0, %v895
      %897 = vmatmul.f32.gmra.mxu0 %v876
      %v898 = vpop.f32.mrf.mxu0
      %v899 = vadd.f32 0.0, %v898
      %900 = vdwg.mxu0
      %v902 = vsel %vm871, %v357, 0
      %v905 = vsel %vm871, %v358, 0
      %907 = vmatpush.msra.mxu0 0.0
      %908 = vmatpush.msra.mxu0 0.0
      %909 = vmatpush.msra.mxu0 0.0
      %910 = vmatpush.msra.mxu0 0.0
      %911 = vmatpush.msra.mxu0 0.0
      %912 = vmatpush.msra.mxu0 0.0
      %913 = vmatpush.msra.mxu0 0.0
      %914 = vmatpush.msra.mxu0 0.0
      %915 = vmatpush.msra.mxu0 0.0
      %916 = vmatpush.msra.mxu0 0.0
      %917 = vmatpush.msra.mxu0 0.0
      %918 = vmatpush.msra.mxu0 0.0
      %919 = vmatpush.msra.mxu0 0.0
      %920 = vmatpush.msra.mxu0 %v870
      %921 = vmatpush.msra.mxu0 %v869
      %922 = vmatpush.msra.mxu0 %v868
      %923 = vmatmul.f32.gmra.mxu0 %v902
      %v924 = vpop.f32.mrf.mxu0
      %v925 = vadd.f32 0.0, %v924
      %926 = vmatmul.f32.gmra.mxu0 %v905
      %v927 = vpop.f32.mrf.mxu0
      %v928 = vadd.f32 0.0, %v927
      %929 = vdwg.mxu0
      %v930 = vsub.f32 %v896, %v925
      %v931 = vsub.f32 %v899, %v928
      %932 = vmatpush.msra.mxu0 0.0
      %933 = vmatpush.msra.mxu0 0.0
      %934 = vmatpush.msra.mxu0 0.0
      %935 = vmatpush.msra.mxu0 0.0
      %936 = vmatpush.msra.mxu0 0.0
      %937 = vmatpush.msra.mxu0 0.0
      %938 = vmatpush.msra.mxu0 0.0
      %939 = vmatpush.msra.mxu0 0.0
      %940 = vmatpush.msra.mxu0 0.0
      %941 = vmatpush.msra.mxu0 0.0
      %942 = vmatpush.msra.mxu0 0.0
      %943 = vmatpush.msra.mxu0 0.0
      %944 = vmatpush.msra.mxu0 0.0
      %945 = vmatpush.msra.mxu0 %v867
      %946 = vmatpush.msra.mxu0 %v866
      %947 = vmatpush.msra.mxu0 %v865
      %948 = vmatmul.f32.gmra.mxu0 %v902
      %v949 = vpop.f32.mrf.mxu0
      %v950 = vadd.f32 0.0, %v949
      %951 = vmatmul.f32.gmra.mxu0 %v905
      %v952 = vpop.f32.mrf.mxu0
      %v953 = vadd.f32 0.0, %v952
      %954 = vdwg.mxu0
      %955 = vmatpush.msra.mxu0 0.0
      %956 = vmatpush.msra.mxu0 0.0
      %957 = vmatpush.msra.mxu0 0.0
      %958 = vmatpush.msra.mxu0 0.0
      %959 = vmatpush.msra.mxu0 0.0
      %960 = vmatpush.msra.mxu0 0.0
      %961 = vmatpush.msra.mxu0 0.0
      %962 = vmatpush.msra.mxu0 0.0
      %963 = vmatpush.msra.mxu0 0.0
      %964 = vmatpush.msra.mxu0 0.0
      %965 = vmatpush.msra.mxu0 0.0
      %966 = vmatpush.msra.mxu0 0.0
      %967 = vmatpush.msra.mxu0 0.0
      %968 = vmatpush.msra.mxu0 %v870
      %969 = vmatpush.msra.mxu0 %v869
      %970 = vmatpush.msra.mxu0 %v868
      %971 = vmatmul.f32.gmra.mxu0 %v873
      %v972 = vpop.f32.mrf.mxu0
      %v973 = vadd.f32 %v950, %v972
      %974 = vmatmul.f32.gmra.mxu0 %v876
      %v975 = vpop.f32.mrf.mxu0
      %v976 = vadd.f32 %v953, %v975
      %977 = vdwg.mxu0
      %v979 = vsel %vm871, %v930, 0
      %v982 = vsel %vm871, %v931, 0
      %984 = vmatpush.msra.mxu0 0.0
      %985 = vmatpush.msra.mxu0 0.0
      %986 = vmatpush.msra.mxu0 0.0
      %987 = vmatpush.msra.mxu0 0.0
      %988 = vmatpush.msra.mxu0 0.0
      %989 = vmatpush.msra.mxu0 0.0
      %990 = vmatpush.msra.mxu0 0.0
      %991 = vmatpush.msra.mxu0 0.0
      %992 = vmatpush.msra.mxu0 0.0
      %993 = vmatpush.msra.mxu0 0.0
      %994 = vmatpush.msra.mxu0 0.0
      %995 = vmatpush.msra.mxu0 0.0
      %996 = vmatpush.msra.mxu0 0.0
      %997 = vmatpush.msra.mxu0 %v361
      %998 = vmatpush.msra.mxu0 %v360
      %999 = vmatpush.msra.mxu0 %v359
      %1000 = vmatmul.f32.gmra.mxu0 %v979
      %v1001 = vpop.f32.mrf.mxu0
      %v1002 = vadd.f32 0.0, %v1001
      %1003 = vmatmul.f32.gmra.mxu0 %v982
      %v1004 = vpop.f32.mrf.mxu0
      %v1005 = vadd.f32 0.0, %v1004
      %1006 = vdwg.mxu0
      %v1008 = vsel %vm871, %v973, 0
      %v1011 = vsel %vm871, %v976, 0
      %1013 = vmatpush.msra.mxu0 0.0
      %1014 = vmatpush.msra.mxu0 0.0
      %1015 = vmatpush.msra.mxu0 0.0
      %1016 = vmatpush.msra.mxu0 0.0
      %1017 = vmatpush.msra.mxu0 0.0
      %1018 = vmatpush.msra.mxu0 0.0
      %1019 = vmatpush.msra.mxu0 0.0
      %1020 = vmatpush.msra.mxu0 0.0
      %1021 = vmatpush.msra.mxu0 0.0
      %1022 = vmatpush.msra.mxu0 0.0
      %1023 = vmatpush.msra.mxu0 0.0
      %1024 = vmatpush.msra.mxu0 0.0
      %1025 = vmatpush.msra.mxu0 0.0
      %1026 = vmatpush.msra.mxu0 %v364
      %1027 = vmatpush.msra.mxu0 %v363
      %1028 = vmatpush.msra.mxu0 %v362
      %1029 = vmatmul.f32.gmra.mxu0 %v1008
      %v1030 = vpop.f32.mrf.mxu0
      %v1031 = vadd.f32 0.0, %v1030
      %1032 = vmatmul.f32.gmra.mxu0 %v1011
      %v1033 = vpop.f32.mrf.mxu0
      %v1034 = vadd.f32 0.0, %v1033
      %1035 = vdwg.mxu0
      %v1036 = vsub.f32 %v1002, %v1031
      %v1037 = vsub.f32 %v1005, %v1034
      %1038 = vmatpush.msra.mxu0 0.0
      %1039 = vmatpush.msra.mxu0 0.0
      %1040 = vmatpush.msra.mxu0 0.0
      %1041 = vmatpush.msra.mxu0 0.0
      %1042 = vmatpush.msra.mxu0 0.0
      %1043 = vmatpush.msra.mxu0 0.0
      %1044 = vmatpush.msra.mxu0 0.0
      %1045 = vmatpush.msra.mxu0 0.0
      %1046 = vmatpush.msra.mxu0 0.0
      %1047 = vmatpush.msra.mxu0 0.0
      %1048 = vmatpush.msra.mxu0 0.0
      %1049 = vmatpush.msra.mxu0 0.0
      %1050 = vmatpush.msra.mxu0 0.0
      %1051 = vmatpush.msra.mxu0 %v361
      %1052 = vmatpush.msra.mxu0 %v360
      %1053 = vmatpush.msra.mxu0 %v359
      %1054 = vmatmul.f32.gmra.mxu0 %v1008
      %v1055 = vpop.f32.mrf.mxu0
      %v1056 = vadd.f32 0.0, %v1055
      %1057 = vmatmul.f32.gmra.mxu0 %v1011
      %v1058 = vpop.f32.mrf.mxu0
      %v1059 = vadd.f32 0.0, %v1058
      %1060 = vdwg.mxu0
      %1061 = vmatpush.msra.mxu0 0.0
      %1062 = vmatpush.msra.mxu0 0.0
      %1063 = vmatpush.msra.mxu0 0.0
      %1064 = vmatpush.msra.mxu0 0.0
      %1065 = vmatpush.msra.mxu0 0.0
      %1066 = vmatpush.msra.mxu0 0.0
      %1067 = vmatpush.msra.mxu0 0.0
      %1068 = vmatpush.msra.mxu0 0.0
      %1069 = vmatpush.msra.mxu0 0.0
      %1070 = vmatpush.msra.mxu0 0.0
      %1071 = vmatpush.msra.mxu0 0.0
      %1072 = vmatpush.msra.mxu0 0.0
      %1073 = vmatpush.msra.mxu0 0.0
      %1074 = vmatpush.msra.mxu0 %v364
      %1075 = vmatpush.msra.mxu0 %v363
      %1076 = vmatpush.msra.mxu0 %v362
      %1077 = vmatmul.f32.gmra.mxu0 %v979
      %v1078 = vpop.f32.mrf.mxu0
      %v1079 = vadd.f32 %v1056, %v1078
      %1080 = vmatmul.f32.gmra.mxu0 %v982
      %v1081 = vpop.f32.mrf.mxu0
      %v1082 = vadd.f32 %v1059, %v1081
      %1083 = vdwg.mxu0
      %1084 = vmatpush.msra.mxu0 0.0
      %1085 = vmatpush.msra.mxu0 0.0
      %1086 = vmatpush.msra.mxu0 0.0
      %1087 = vmatpush.msra.mxu0 0.0
      %1088 = vmatpush.msra.mxu0 0.0
      %1089 = vmatpush.msra.mxu0 0.0
      %1090 = vmatpush.msra.mxu0 0.0
      %1091 = vmatpush.msra.mxu0 0.0
      %1092 = vmatpush.msra.mxu0 0.0
      %1093 = vmatpush.msra.mxu0 0.0
      %1094 = vmatpush.msra.mxu0 0.0
      %1095 = vmatpush.msra.mxu0 0.0
      %1096 = vmatpush.msra.mxu0 0.0
      %1097 = vmatpush.msra.mxu0 0.0
      %1098 = vmatpush.msra.mxu0 %v1037
      %1099 = vmatpush.msra.mxu0 %v1036
      %1100 = vmatmul.f32.gmra.mxu0 %v404
      %v1101 = vpop.f32.mrf.mxu0
      %v1102 = vadd.f32 0.0, %v1101
      %1103 = vmatmul.f32.gmra.mxu0 %v407
      %v1104 = vpop.f32.mrf.mxu0
      %v1105 = vadd.f32 0.0, %v1104
      %1106 = vdwg.mxu0
      %1107 = vmatpush.msra.mxu0 0.0
      %1108 = vmatpush.msra.mxu0 0.0
      %1109 = vmatpush.msra.mxu0 0.0
      %1110 = vmatpush.msra.mxu0 0.0
      %1111 = vmatpush.msra.mxu0 0.0
      %1112 = vmatpush.msra.mxu0 0.0
      %1113 = vmatpush.msra.mxu0 0.0
      %1114 = vmatpush.msra.mxu0 0.0
      %1115 = vmatpush.msra.mxu0 0.0
      %1116 = vmatpush.msra.mxu0 0.0
      %1117 = vmatpush.msra.mxu0 0.0
      %1118 = vmatpush.msra.mxu0 0.0
      %1119 = vmatpush.msra.mxu0 0.0
      %1120 = vmatpush.msra.mxu0 0.0
      %1121 = vmatpush.msra.mxu0 %v1082
      %1122 = vmatpush.msra.mxu0 %v1079
      %1123 = vmatmul.f32.gmra.mxu0 %v433
      %v1124 = vpop.f32.mrf.mxu0
      %v1125 = vadd.f32 0.0, %v1124
      %1126 = vmatmul.f32.gmra.mxu0 %v436
      %v1127 = vpop.f32.mrf.mxu0
      %v1128 = vadd.f32 0.0, %v1127
      %1129 = vdwg.mxu0
      %v1130 = vsub.f32 %v1102, %v1125
      %v1131 = vsub.f32 %v1105, %v1128
      %1132 = vmatpush.msra.mxu0 0.0
      %1133 = vmatpush.msra.mxu0 0.0
      %1134 = vmatpush.msra.mxu0 0.0
      %1135 = vmatpush.msra.mxu0 0.0
      %1136 = vmatpush.msra.mxu0 0.0
      %1137 = vmatpush.msra.mxu0 0.0
      %1138 = vmatpush.msra.mxu0 0.0
      %1139 = vmatpush.msra.mxu0 0.0
      %1140 = vmatpush.msra.mxu0 0.0
      %1141 = vmatpush.msra.mxu0 0.0
      %1142 = vmatpush.msra.mxu0 0.0
      %1143 = vmatpush.msra.mxu0 0.0
      %1144 = vmatpush.msra.mxu0 0.0
      %1145 = vmatpush.msra.mxu0 0.0
      %1146 = vmatpush.msra.mxu0 %v1037
      %1147 = vmatpush.msra.mxu0 %v1036
      %1148 = vmatmul.f32.gmra.mxu0 %v433
      %v1149 = vpop.f32.mrf.mxu0
      %v1150 = vadd.f32 0.0, %v1149
      %1151 = vmatmul.f32.gmra.mxu0 %v436
      %v1152 = vpop.f32.mrf.mxu0
      %v1153 = vadd.f32 0.0, %v1152
      %1154 = vdwg.mxu0
      %1155 = vmatpush.msra.mxu0 0.0
      %1156 = vmatpush.msra.mxu0 0.0
      %1157 = vmatpush.msra.mxu0 0.0
      %1158 = vmatpush.msra.mxu0 0.0
      %1159 = vmatpush.msra.mxu0 0.0
      %1160 = vmatpush.msra.mxu0 0.0
      %1161 = vmatpush.msra.mxu0 0.0
      %1162 = vmatpush.msra.mxu0 0.0
      %1163 = vmatpush.msra.mxu0 0.0
      %1164 = vmatpush.msra.mxu0 0.0
      %1165 = vmatpush.msra.mxu0 0.0
      %1166 = vmatpush.msra.mxu0 0.0
      %1167 = vmatpush.msra.mxu0 0.0
      %1168 = vmatpush.msra.mxu0 0.0
      %1169 = vmatpush.msra.mxu0 %v1082
      %1170 = vmatpush.msra.mxu0 %v1079
      %1171 = vmatmul.f32.gmra.mxu0 %v404
      %v1172 = vpop.f32.mrf.mxu0
      %v1173 = vadd.f32 %v1150, %v1172
      %1174 = vmatmul.f32.gmra.mxu0 %v407
      %v1175 = vpop.f32.mrf.mxu0
      %v1176 = vadd.f32 %v1153, %v1175
      %1177 = vdwg.mxu0
      %v1179 = vsel %vm402, %v1130, 0
      %v1182 = vsel %vm402, %v1131, 0
      %1184 = vmatpush.msra.mxu0 0.0
      %1185 = vmatpush.msra.mxu0 0.0
      %1186 = vmatpush.msra.mxu0 0.0
      %1187 = vmatpush.msra.mxu0 0.0
      %1188 = vmatpush.msra.mxu0 0.0
      %1189 = vmatpush.msra.mxu0 0.0
      %1190 = vmatpush.msra.mxu0 0.0
      %1191 = vmatpush.msra.mxu0 0.0
      %1192 = vmatpush.msra.mxu0 0.0
      %1193 = vmatpush.msra.mxu0 0.0
      %1194 = vmatpush.msra.mxu0 0.0
      %1195 = vmatpush.msra.mxu0 0.0
      %1196 = vmatpush.msra.mxu0 0.0
      %1197 = vmatpush.msra.mxu0 0.0
      %1198 = vmatpush.msra.mxu0 %v342
      %1199 = vmatpush.msra.mxu0 %v341
      %1200 = vmatmul.f32.gmra.mxu0 %v1179
      %v1201 = vpop.f32.mrf.mxu0
      %v1202 = vadd.f32 0.0, %v1201
      %1203 = vmatmul.f32.gmra.mxu0 %v1182
      %v1204 = vpop.f32.mrf.mxu0
      %v1205 = vadd.f32 0.0, %v1204
      %1206 = vdwg.mxu0
      %v1208 = vsel %vm402, %v1173, 0
      %v1211 = vsel %vm402, %v1176, 0
      %1213 = vmatpush.msra.mxu0 0.0
      %1214 = vmatpush.msra.mxu0 0.0
      %1215 = vmatpush.msra.mxu0 0.0
      %1216 = vmatpush.msra.mxu0 0.0
      %1217 = vmatpush.msra.mxu0 0.0
      %1218 = vmatpush.msra.mxu0 0.0
      %1219 = vmatpush.msra.mxu0 0.0
      %1220 = vmatpush.msra.mxu0 0.0
      %1221 = vmatpush.msra.mxu0 0.0
      %1222 = vmatpush.msra.mxu0 0.0
      %1223 = vmatpush.msra.mxu0 0.0
      %1224 = vmatpush.msra.mxu0 0.0
      %1225 = vmatpush.msra.mxu0 0.0
      %1226 = vmatpush.msra.mxu0 0.0
      %1227 = vmatpush.msra.mxu0 %v344
      %1228 = vmatpush.msra.mxu0 %v343
      %1229 = vmatmul.f32.gmra.mxu0 %v1208
      %v1230 = vpop.f32.mrf.mxu0
      %v1231 = vadd.f32 0.0, %v1230
      %1232 = vmatmul.f32.gmra.mxu0 %v1211
      %v1233 = vpop.f32.mrf.mxu0
      %v1234 = vadd.f32 0.0, %v1233
      %1235 = vdwg.mxu0
      %v1236 = vsub.f32 %v1202, %v1231
      %v1237 = vsub.f32 %v1205, %v1234
      %1238 = vmatpush.msra.mxu0 0.0
      %1239 = vmatpush.msra.mxu0 0.0
      %1240 = vmatpush.msra.mxu0 0.0
      %1241 = vmatpush.msra.mxu0 0.0
      %1242 = vmatpush.msra.mxu0 0.0
      %1243 = vmatpush.msra.mxu0 0.0
      %1244 = vmatpush.msra.mxu0 0.0
      %1245 = vmatpush.msra.mxu0 0.0
      %1246 = vmatpush.msra.mxu0 0.0
      %1247 = vmatpush.msra.mxu0 0.0
      %1248 = vmatpush.msra.mxu0 0.0
      %1249 = vmatpush.msra.mxu0 0.0
      %1250 = vmatpush.msra.mxu0 0.0
      %1251 = vmatpush.msra.mxu0 0.0
      %1252 = vmatpush.msra.mxu0 %v342
      %1253 = vmatpush.msra.mxu0 %v341
      %1254 = vmatmul.f32.gmra.mxu0 %v1208
      %v1255 = vpop.f32.mrf.mxu0
      %v1256 = vadd.f32 0.0, %v1255
      %1257 = vmatmul.f32.gmra.mxu0 %v1211
      %v1258 = vpop.f32.mrf.mxu0
      %v1259 = vadd.f32 0.0, %v1258
      %1260 = vdwg.mxu0
      %1261 = vmatpush.msra.mxu0 0.0
      %1262 = vmatpush.msra.mxu0 0.0
      %1263 = vmatpush.msra.mxu0 0.0
      %1264 = vmatpush.msra.mxu0 0.0
      %1265 = vmatpush.msra.mxu0 0.0
      %1266 = vmatpush.msra.mxu0 0.0
      %1267 = vmatpush.msra.mxu0 0.0
      %1268 = vmatpush.msra.mxu0 0.0
      %1269 = vmatpush.msra.mxu0 0.0
      %1270 = vmatpush.msra.mxu0 0.0
      %1271 = vmatpush.msra.mxu0 0.0
      %1272 = vmatpush.msra.mxu0 0.0
      %1273 = vmatpush.msra.mxu0 0.0
      %1274 = vmatpush.msra.mxu0 0.0
      %1275 = vmatpush.msra.mxu0 %v344
      %1276 = vmatpush.msra.mxu0 %v343
      %1277 = vmatmul.f32.gmra.mxu0 %v1179
      %v1278 = vpop.f32.mrf.mxu0
      %v1279 = vadd.f32 %v1256, %v1278
      %1280 = vmatmul.f32.gmra.mxu0 %v1182
      %v1281 = vpop.f32.mrf.mxu0
      %v1282 = vadd.f32 %v1259, %v1281
      %1283 = vdwg.mxu0
      %v1284 = vmul.f32 %v1236, %v369
      %v1285 = vmul.f32 %v1237, %v370
      %v1286 = vmul.f32 %v1279, %v371
      %v1287 = vmul.f32 %v1282, %v372
      %v1288 = vsub.f32 %v1284, %v1286
      %v1289 = vsub.f32 %v1285, %v1287
      %v1290 = vmul.f32 %v1236, %v371
      %v1291 = vmul.f32 %v1237, %v372
      %v1292 = vmul.f32 %v1279, %v369
      %v1293 = vmul.f32 %v1282, %v370
      %v1294 = vadd.f32 %v1290, %v1292
      %v1295 = vadd.f32 %v1291, %v1293
      %1296 = vmatpush.msra.mxu0 0.0
      %1297 = vmatpush.msra.mxu0 0.0
      %1298 = vmatpush.msra.mxu0 0.0
      %1299 = vmatpush.msra.mxu0 0.0
      %1300 = vmatpush.msra.mxu0 0.0
      %1301 = vmatpush.msra.mxu0 0.0
      %1302 = vmatpush.msra.mxu0 0.0
      %1303 = vmatpush.msra.mxu0 0.0
      %1304 = vmatpush.msra.mxu0 0.0
      %1305 = vmatpush.msra.mxu0 0.0
      %1306 = vmatpush.msra.mxu0 0.0
      %1307 = vmatpush.msra.mxu0 0.0
      %1308 = vmatpush.msra.mxu0 0.0
      %1309 = vmatpush.msra.mxu0 0.0
      %1310 = vmatpush.msra.mxu0 %v1289
      %1311 = vmatpush.msra.mxu0 %v1288
      %1312 = vmatmul.f32.gmra.mxu0 %v404
      %v1313 = vpop.f32.mrf.mxu0
      %v1314 = vadd.f32 0.0, %v1313
      %1315 = vmatmul.f32.gmra.mxu0 %v407
      %v1316 = vpop.f32.mrf.mxu0
      %v1317 = vadd.f32 0.0, %v1316
      %1318 = vdwg.mxu0
      %1319 = vmatpush.msra.mxu0 0.0
      %1320 = vmatpush.msra.mxu0 0.0
      %1321 = vmatpush.msra.mxu0 0.0
      %1322 = vmatpush.msra.mxu0 0.0
      %1323 = vmatpush.msra.mxu0 0.0
      %1324 = vmatpush.msra.mxu0 0.0
      %1325 = vmatpush.msra.mxu0 0.0
      %1326 = vmatpush.msra.mxu0 0.0
      %1327 = vmatpush.msra.mxu0 0.0
      %1328 = vmatpush.msra.mxu0 0.0
      %1329 = vmatpush.msra.mxu0 0.0
      %1330 = vmatpush.msra.mxu0 0.0
      %1331 = vmatpush.msra.mxu0 0.0
      %1332 = vmatpush.msra.mxu0 0.0
      %1333 = vmatpush.msra.mxu0 %v1295
      %1334 = vmatpush.msra.mxu0 %v1294
      %1335 = vmatmul.f32.gmra.mxu0 %v433
      %v1336 = vpop.f32.mrf.mxu0
      %v1337 = vadd.f32 0.0, %v1336
      %1338 = vmatmul.f32.gmra.mxu0 %v436
      %v1339 = vpop.f32.mrf.mxu0
      %v1340 = vadd.f32 0.0, %v1339
      %1341 = vdwg.mxu0
      %v1342 = vsub.f32 %v1314, %v1337
      %v1343 = vsub.f32 %v1317, %v1340
      %1344 = vmatpush.msra.mxu0 0.0
      %1345 = vmatpush.msra.mxu0 0.0
      %1346 = vmatpush.msra.mxu0 0.0
      %1347 = vmatpush.msra.mxu0 0.0
      %1348 = vmatpush.msra.mxu0 0.0
      %1349 = vmatpush.msra.mxu0 0.0
      %1350 = vmatpush.msra.mxu0 0.0
      %1351 = vmatpush.msra.mxu0 0.0
      %1352 = vmatpush.msra.mxu0 0.0
      %1353 = vmatpush.msra.mxu0 0.0
      %1354 = vmatpush.msra.mxu0 0.0
      %1355 = vmatpush.msra.mxu0 0.0
      %1356 = vmatpush.msra.mxu0 0.0
      %1357 = vmatpush.msra.mxu0 0.0
      %1358 = vmatpush.msra.mxu0 %v1289
      %1359 = vmatpush.msra.mxu0 %v1288
      %1360 = vmatmul.f32.gmra.mxu0 %v433
      %v1361 = vpop.f32.mrf.mxu0
      %v1362 = vadd.f32 0.0, %v1361
      %1363 = vmatmul.f32.gmra.mxu0 %v436
      %v1364 = vpop.f32.mrf.mxu0
      %v1365 = vadd.f32 0.0, %v1364
      %1366 = vdwg.mxu0
      %1367 = vmatpush.msra.mxu0 0.0
      %1368 = vmatpush.msra.mxu0 0.0
      %1369 = vmatpush.msra.mxu0 0.0
      %1370 = vmatpush.msra.mxu0 0.0
      %1371 = vmatpush.msra.mxu0 0.0
      %1372 = vmatpush.msra.mxu0 0.0
      %1373 = vmatpush.msra.mxu0 0.0
      %1374 = vmatpush.msra.mxu0 0.0
      %1375 = vmatpush.msra.mxu0 0.0
      %1376 = vmatpush.msra.mxu0 0.0
      %1377 = vmatpush.msra.mxu0 0.0
      %1378 = vmatpush.msra.mxu0 0.0
      %1379 = vmatpush.msra.mxu0 0.0
      %1380 = vmatpush.msra.mxu0 0.0
      %1381 = vmatpush.msra.mxu0 %v1295
      %1382 = vmatpush.msra.mxu0 %v1294
      %1383 = vmatmul.f32.gmra.mxu0 %v404
      %v1384 = vpop.f32.mrf.mxu0
      %v1385 = vadd.f32 %v1362, %v1384
      %1386 = vmatmul.f32.gmra.mxu0 %v407
      %v1387 = vpop.f32.mrf.mxu0
      %v1388 = vadd.f32 %v1365, %v1387
      %1389 = vdwg.mxu0
      %v1391 = vsel %vm402, %v1342, 0
      %v1394 = vsel %vm402, %v1343, 0
      %1396 = vmatpush.msra.mxu0 0.0
      %1397 = vmatpush.msra.mxu0 0.0
      %1398 = vmatpush.msra.mxu0 0.0
      %1399 = vmatpush.msra.mxu0 0.0
      %1400 = vmatpush.msra.mxu0 0.0
      %1401 = vmatpush.msra.mxu0 0.0
      %1402 = vmatpush.msra.mxu0 0.0
      %1403 = vmatpush.msra.mxu0 0.0
      %1404 = vmatpush.msra.mxu0 0.0
      %1405 = vmatpush.msra.mxu0 0.0
      %1406 = vmatpush.msra.mxu0 0.0
      %1407 = vmatpush.msra.mxu0 0.0
      %1408 = vmatpush.msra.mxu0 0.0
      %1409 = vmatpush.msra.mxu0 0.0
      %1410 = vmatpush.msra.mxu0 %v342
      %1411 = vmatpush.msra.mxu0 %v341
      %1412 = vmatmul.f32.gmra.mxu0 %v1391
      %v1413 = vpop.f32.mrf.mxu0
      %v1414 = vadd.f32 0.0, %v1413
      %1415 = vmatmul.f32.gmra.mxu0 %v1394
      %v1416 = vpop.f32.mrf.mxu0
      %v1417 = vadd.f32 0.0, %v1416
      %1418 = vdwg.mxu0
      %v1420 = vsel %vm402, %v1385, 0
      %v1423 = vsel %vm402, %v1388, 0
      %1425 = vmatpush.msra.mxu0 0.0
      %1426 = vmatpush.msra.mxu0 0.0
      %1427 = vmatpush.msra.mxu0 0.0
      %1428 = vmatpush.msra.mxu0 0.0
      %1429 = vmatpush.msra.mxu0 0.0
      %1430 = vmatpush.msra.mxu0 0.0
      %1431 = vmatpush.msra.mxu0 0.0
      %1432 = vmatpush.msra.mxu0 0.0
      %1433 = vmatpush.msra.mxu0 0.0
      %1434 = vmatpush.msra.mxu0 0.0
      %1435 = vmatpush.msra.mxu0 0.0
      %1436 = vmatpush.msra.mxu0 0.0
      %1437 = vmatpush.msra.mxu0 0.0
      %1438 = vmatpush.msra.mxu0 0.0
      %1439 = vmatpush.msra.mxu0 %v344
      %1440 = vmatpush.msra.mxu0 %v343
      %1441 = vmatmul.f32.gmra.mxu0 %v1420
      %v1442 = vpop.f32.mrf.mxu0
      %v1443 = vadd.f32 0.0, %v1442
      %1444 = vmatmul.f32.gmra.mxu0 %v1423
      %v1445 = vpop.f32.mrf.mxu0
      %v1446 = vadd.f32 0.0, %v1445
      %1447 = vdwg.mxu0
      %v1448 = vsub.f32 %v1414, %v1443
      %v1449 = vsub.f32 %v1417, %v1446
      %1450 = vmatpush.msra.mxu0 0.0
      %1451 = vmatpush.msra.mxu0 0.0
      %1452 = vmatpush.msra.mxu0 0.0
      %1453 = vmatpush.msra.mxu0 0.0
      %1454 = vmatpush.msra.mxu0 0.0
      %1455 = vmatpush.msra.mxu0 0.0
      %1456 = vmatpush.msra.mxu0 0.0
      %1457 = vmatpush.msra.mxu0 0.0
      %1458 = vmatpush.msra.mxu0 0.0
      %1459 = vmatpush.msra.mxu0 0.0
      %1460 = vmatpush.msra.mxu0 0.0
      %1461 = vmatpush.msra.mxu0 0.0
      %1462 = vmatpush.msra.mxu0 0.0
      %1463 = vmatpush.msra.mxu0 0.0
      %1464 = vmatpush.msra.mxu0 %v342
      %1465 = vmatpush.msra.mxu0 %v341
      %1466 = vmatmul.f32.gmra.mxu0 %v1420
      %v1467 = vpop.f32.mrf.mxu0
      %v1468 = vadd.f32 0.0, %v1467
      %1469 = vmatmul.f32.gmra.mxu0 %v1423
      %v1470 = vpop.f32.mrf.mxu0
      %v1471 = vadd.f32 0.0, %v1470
      %1472 = vdwg.mxu0
      %1473 = vmatpush.msra.mxu0 0.0
      %1474 = vmatpush.msra.mxu0 0.0
      %1475 = vmatpush.msra.mxu0 0.0
      %1476 = vmatpush.msra.mxu0 0.0
      %1477 = vmatpush.msra.mxu0 0.0
      %1478 = vmatpush.msra.mxu0 0.0
      %1479 = vmatpush.msra.mxu0 0.0
      %1480 = vmatpush.msra.mxu0 0.0
      %1481 = vmatpush.msra.mxu0 0.0
      %1482 = vmatpush.msra.mxu0 0.0
      %1483 = vmatpush.msra.mxu0 0.0
      %1484 = vmatpush.msra.mxu0 0.0
      %1485 = vmatpush.msra.mxu0 0.0
      %1486 = vmatpush.msra.mxu0 0.0
      %1487 = vmatpush.msra.mxu0 %v344
      %1488 = vmatpush.msra.mxu0 %v343
      %1489 = vmatmul.f32.gmra.mxu0 %v1391
      %v1490 = vpop.f32.mrf.mxu0
      %v1491 = vadd.f32 %v1468, %v1490
      %1492 = vmatmul.f32.gmra.mxu0 %v1394
      %v1493 = vpop.f32.mrf.mxu0
      %v1494 = vadd.f32 %v1471, %v1493
      %1495 = vdwg.mxu0
      %1496 = vmatpush.msra.mxu0 0.0
      %1497 = vmatpush.msra.mxu0 0.0
      %1498 = vmatpush.msra.mxu0 0.0
      %1499 = vmatpush.msra.mxu0 0.0
      %1500 = vmatpush.msra.mxu0 0.0
      %1501 = vmatpush.msra.mxu0 0.0
      %1502 = vmatpush.msra.mxu0 0.0
      %1503 = vmatpush.msra.mxu0 0.0
      %1504 = vmatpush.msra.mxu0 0.0
      %1505 = vmatpush.msra.mxu0 0.0
      %1506 = vmatpush.msra.mxu0 0.0
      %1507 = vmatpush.msra.mxu0 0.0
      %1508 = vmatpush.msra.mxu0 0.0
      %1509 = vmatpush.msra.mxu0 0.0
      %1510 = vmatpush.msra.mxu0 %v1449
      %1511 = vmatpush.msra.mxu0 %v1448
      %1512 = vmatmul.f32.gmra.mxu0 %v616
      %v1513 = vpop.f32.mrf.mxu0
      %v1514 = vadd.f32 0.0, %v1513
      %1515 = vmatmul.f32.gmra.mxu0 %v619
      %v1516 = vpop.f32.mrf.mxu0
      %v1517 = vadd.f32 0.0, %v1516
      %1518 = vmatmul.f32.gmra.mxu0 %v622
      %v1519 = vpop.f32.mrf.mxu0
      %v1520 = vadd.f32 0.0, %v1519
      %1521 = vdwg.mxu0
      %1522 = vmatpush.msra.mxu0 0.0
      %1523 = vmatpush.msra.mxu0 0.0
      %1524 = vmatpush.msra.mxu0 0.0
      %1525 = vmatpush.msra.mxu0 0.0
      %1526 = vmatpush.msra.mxu0 0.0
      %1527 = vmatpush.msra.mxu0 0.0
      %1528 = vmatpush.msra.mxu0 0.0
      %1529 = vmatpush.msra.mxu0 0.0
      %1530 = vmatpush.msra.mxu0 0.0
      %1531 = vmatpush.msra.mxu0 0.0
      %1532 = vmatpush.msra.mxu0 0.0
      %1533 = vmatpush.msra.mxu0 0.0
      %1534 = vmatpush.msra.mxu0 0.0
      %1535 = vmatpush.msra.mxu0 0.0
      %1536 = vmatpush.msra.mxu0 %v1494
      %1537 = vmatpush.msra.mxu0 %v1491
      %1538 = vmatmul.f32.gmra.mxu0 %v651
      %v1539 = vpop.f32.mrf.mxu0
      %v1540 = vadd.f32 0.0, %v1539
      %1541 = vmatmul.f32.gmra.mxu0 %v654
      %v1542 = vpop.f32.mrf.mxu0
      %v1543 = vadd.f32 0.0, %v1542
      %1544 = vmatmul.f32.gmra.mxu0 %v657
      %v1545 = vpop.f32.mrf.mxu0
      %v1546 = vadd.f32 0.0, %v1545
      %1547 = vdwg.mxu0
      %v1548 = vsub.f32 %v1514, %v1540
      %v1549 = vsub.f32 %v1517, %v1543
      %v1550 = vsub.f32 %v1520, %v1546
      %1551 = vmatpush.msra.mxu0 0.0
      %1552 = vmatpush.msra.mxu0 0.0
      %1553 = vmatpush.msra.mxu0 0.0
      %1554 = vmatpush.msra.mxu0 0.0
      %1555 = vmatpush.msra.mxu0 0.0
      %1556 = vmatpush.msra.mxu0 0.0
      %1557 = vmatpush.msra.mxu0 0.0
      %1558 = vmatpush.msra.mxu0 0.0
      %1559 = vmatpush.msra.mxu0 0.0
      %1560 = vmatpush.msra.mxu0 0.0
      %1561 = vmatpush.msra.mxu0 0.0
      %1562 = vmatpush.msra.mxu0 0.0
      %1563 = vmatpush.msra.mxu0 0.0
      %1564 = vmatpush.msra.mxu0 0.0
      %1565 = vmatpush.msra.mxu0 %v1449
      %1566 = vmatpush.msra.mxu0 %v1448
      %1567 = vmatmul.f32.gmra.mxu0 %v651
      %v1568 = vpop.f32.mrf.mxu0
      %v1569 = vadd.f32 0.0, %v1568
      %1570 = vmatmul.f32.gmra.mxu0 %v654
      %v1571 = vpop.f32.mrf.mxu0
      %v1572 = vadd.f32 0.0, %v1571
      %1573 = vmatmul.f32.gmra.mxu0 %v657
      %v1574 = vpop.f32.mrf.mxu0
      %v1575 = vadd.f32 0.0, %v1574
      %1576 = vdwg.mxu0
      %1577 = vmatpush.msra.mxu0 0.0
      %1578 = vmatpush.msra.mxu0 0.0
      %1579 = vmatpush.msra.mxu0 0.0
      %1580 = vmatpush.msra.mxu0 0.0
      %1581 = vmatpush.msra.mxu0 0.0
      %1582 = vmatpush.msra.mxu0 0.0
      %1583 = vmatpush.msra.mxu0 0.0
      %1584 = vmatpush.msra.mxu0 0.0
      %1585 = vmatpush.msra.mxu0 0.0
      %1586 = vmatpush.msra.mxu0 0.0
      %1587 = vmatpush.msra.mxu0 0.0
      %1588 = vmatpush.msra.mxu0 0.0
      %1589 = vmatpush.msra.mxu0 0.0
      %1590 = vmatpush.msra.mxu0 0.0
      %1591 = vmatpush.msra.mxu0 %v1494
      %1592 = vmatpush.msra.mxu0 %v1491
      %1593 = vmatmul.f32.gmra.mxu0 %v616
      %v1594 = vpop.f32.mrf.mxu0
      %v1595 = vadd.f32 %v1569, %v1594
      %1596 = vmatmul.f32.gmra.mxu0 %v619
      %v1597 = vpop.f32.mrf.mxu0
      %v1598 = vadd.f32 %v1572, %v1597
      %1599 = vmatmul.f32.gmra.mxu0 %v622
      %v1600 = vpop.f32.mrf.mxu0
      %v1601 = vadd.f32 %v1575, %v1600
      %1602 = vdwg.mxu0
      %v1604 = vsel %vm402, %v1548, 0
      %v1607 = vsel %vm402, %v1549, 0
      %v1610 = vsel %vm402, %v1550, 0
      %1612 = vmatpush.msra.mxu0 0.0
      %1613 = vmatpush.msra.mxu0 0.0
      %1614 = vmatpush.msra.mxu0 0.0
      %1615 = vmatpush.msra.mxu0 0.0
      %1616 = vmatpush.msra.mxu0 0.0
      %1617 = vmatpush.msra.mxu0 0.0
      %1618 = vmatpush.msra.mxu0 0.0
      %1619 = vmatpush.msra.mxu0 0.0
      %1620 = vmatpush.msra.mxu0 0.0
      %1621 = vmatpush.msra.mxu0 0.0
      %1622 = vmatpush.msra.mxu0 0.0
      %1623 = vmatpush.msra.mxu0 0.0
      %1624 = vmatpush.msra.mxu0 0.0
      %1625 = vmatpush.msra.mxu0 0.0
      %1626 = vmatpush.msra.mxu0 %v352
      %1627 = vmatpush.msra.mxu0 %v351
      %1628 = vmatmul.f32.gmra.mxu0 %v1604
      %v1629 = vpop.f32.mrf.mxu0
      %v1630 = vadd.f32 0.0, %v1629
      %1631 = vmatmul.f32.gmra.mxu0 %v1607
      %v1632 = vpop.f32.mrf.mxu0
      %v1633 = vadd.f32 0.0, %v1632
      %1634 = vmatmul.f32.gmra.mxu0 %v1610
      %v1635 = vpop.f32.mrf.mxu0
      %v1636 = vadd.f32 0.0, %v1635
      %1637 = vdwg.mxu0
      %v1639 = vsel %vm402, %v1595, 0
      %v1642 = vsel %vm402, %v1598, 0
      %v1645 = vsel %vm402, %v1601, 0
      %1647 = vmatpush.msra.mxu0 0.0
      %1648 = vmatpush.msra.mxu0 0.0
      %1649 = vmatpush.msra.mxu0 0.0
      %1650 = vmatpush.msra.mxu0 0.0
      %1651 = vmatpush.msra.mxu0 0.0
      %1652 = vmatpush.msra.mxu0 0.0
      %1653 = vmatpush.msra.mxu0 0.0
      %1654 = vmatpush.msra.mxu0 0.0
      %1655 = vmatpush.msra.mxu0 0.0
      %1656 = vmatpush.msra.mxu0 0.0
      %1657 = vmatpush.msra.mxu0 0.0
      %1658 = vmatpush.msra.mxu0 0.0
      %1659 = vmatpush.msra.mxu0 0.0
      %1660 = vmatpush.msra.mxu0 0.0
      %1661 = vmatpush.msra.mxu0 %v354
      %1662 = vmatpush.msra.mxu0 %v353
      %1663 = vmatmul.f32.gmra.mxu0 %v1639
      %v1664 = vpop.f32.mrf.mxu0
      %v1665 = vadd.f32 0.0, %v1664
      %1666 = vmatmul.f32.gmra.mxu0 %v1642
      %v1667 = vpop.f32.mrf.mxu0
      %v1668 = vadd.f32 0.0, %v1667
      %1669 = vmatmul.f32.gmra.mxu0 %v1645
      %v1670 = vpop.f32.mrf.mxu0
      %v1671 = vadd.f32 0.0, %v1670
      %1672 = vdwg.mxu0
      %v1673 = vsub.f32 %v1630, %v1665
      %v1674 = vsub.f32 %v1633, %v1668
      %v1675 = vsub.f32 %v1636, %v1671
      %1676 = vmatpush.msra.mxu0 0.0
      %1677 = vmatpush.msra.mxu0 0.0
      %1678 = vmatpush.msra.mxu0 0.0
      %1679 = vmatpush.msra.mxu0 0.0
      %1680 = vmatpush.msra.mxu0 0.0
      %1681 = vmatpush.msra.mxu0 0.0
      %1682 = vmatpush.msra.mxu0 0.0
      %1683 = vmatpush.msra.mxu0 0.0
      %1684 = vmatpush.msra.mxu0 0.0
      %1685 = vmatpush.msra.mxu0 0.0
      %1686 = vmatpush.msra.mxu0 0.0
      %1687 = vmatpush.msra.mxu0 0.0
      %1688 = vmatpush.msra.mxu0 0.0
      %1689 = vmatpush.msra.mxu0 0.0
      %1690 = vmatpush.msra.mxu0 %v352
      %1691 = vmatpush.msra.mxu0 %v351
      %1692 = vmatmul.f32.gmra.mxu0 %v1639
      %v1693 = vpop.f32.mrf.mxu0
      %v1694 = vadd.f32 0.0, %v1693
      %1695 = vmatmul.f32.gmra.mxu0 %v1642
      %v1696 = vpop.f32.mrf.mxu0
      %v1697 = vadd.f32 0.0, %v1696
      %1698 = vmatmul.f32.gmra.mxu0 %v1645
      %v1699 = vpop.f32.mrf.mxu0
      %v1700 = vadd.f32 0.0, %v1699
      %1701 = vdwg.mxu0
      %1702 = vmatpush.msra.mxu0 0.0
      %1703 = vmatpush.msra.mxu0 0.0
      %1704 = vmatpush.msra.mxu0 0.0
      %1705 = vmatpush.msra.mxu0 0.0
      %1706 = vmatpush.msra.mxu0 0.0
      %1707 = vmatpush.msra.mxu0 0.0
      %1708 = vmatpush.msra.mxu0 0.0
      %1709 = vmatpush.msra.mxu0 0.0
      %1710 = vmatpush.msra.mxu0 0.0
      %1711 = vmatpush.msra.mxu0 0.0
      %1712 = vmatpush.msra.mxu0 0.0
      %1713 = vmatpush.msra.mxu0 0.0
      %1714 = vmatpush.msra.mxu0 0.0
      %1715 = vmatpush.msra.mxu0 0.0
      %1716 = vmatpush.msra.mxu0 %v354
      %1717 = vmatpush.msra.mxu0 %v353
      %1718 = vmatmul.f32.gmra.mxu0 %v1604
      %v1719 = vpop.f32.mrf.mxu0
      %v1720 = vadd.f32 %v1694, %v1719
      %1721 = vmatmul.f32.gmra.mxu0 %v1607
      %v1722 = vpop.f32.mrf.mxu0
      %v1723 = vadd.f32 %v1697, %v1722
      %1724 = vmatmul.f32.gmra.mxu0 %v1610
      %v1725 = vpop.f32.mrf.mxu0
      %v1726 = vadd.f32 %v1700, %v1725
      %1727 = vdwg.mxu0
      %v1728 = vmul.f32 %v1673, %v384
      %v1729 = vmul.f32 %v1674, %v385
      %v1730 = vmul.f32 %v1675, %v386
      %v1731 = vmul.f32 %v1720, %v384
      %v1732 = vmul.f32 %v1723, %v385
      %v1733 = vmul.f32 %v1726, %v386
      %1734 = vmatpush.msra.mxu0 0.0
      %1735 = vmatpush.msra.mxu0 0.0
      %1736 = vmatpush.msra.mxu0 0.0
      %1737 = vmatpush.msra.mxu0 0.0
      %1738 = vmatpush.msra.mxu0 0.0
      %1739 = vmatpush.msra.mxu0 0.0
      %1740 = vmatpush.msra.mxu0 0.0
      %1741 = vmatpush.msra.mxu0 0.0
      %1742 = vmatpush.msra.mxu0 0.0
      %1743 = vmatpush.msra.mxu0 0.0
      %1744 = vmatpush.msra.mxu0 0.0
      %1745 = vmatpush.msra.mxu0 0.0
      %1746 = vmatpush.msra.mxu0 0.0
      %1747 = vmatpush.msra.mxu0 %v1730
      %1748 = vmatpush.msra.mxu0 %v1729
      %1749 = vmatpush.msra.mxu0 %v1728
      %1750 = vmatmul.f32.gmra.mxu0 %v873
      %v1751 = vpop.f32.mrf.mxu0
      %v1752 = vadd.f32 0.0, %v1751
      %1753 = vmatmul.f32.gmra.mxu0 %v876
      %v1754 = vpop.f32.mrf.mxu0
      %v1755 = vadd.f32 0.0, %v1754
      %1756 = vdwg.mxu0
      %1757 = vmatpush.msra.mxu0 0.0
      %1758 = vmatpush.msra.mxu0 0.0
      %1759 = vmatpush.msra.mxu0 0.0
      %1760 = vmatpush.msra.mxu0 0.0
      %1761 = vmatpush.msra.mxu0 0.0
      %1762 = vmatpush.msra.mxu0 0.0
      %1763 = vmatpush.msra.mxu0 0.0
      %1764 = vmatpush.msra.mxu0 0.0
      %1765 = vmatpush.msra.mxu0 0.0
      %1766 = vmatpush.msra.mxu0 0.0
      %1767 = vmatpush.msra.mxu0 0.0
      %1768 = vmatpush.msra.mxu0 0.0
      %1769 = vmatpush.msra.mxu0 0.0
      %1770 = vmatpush.msra.mxu0 %v1733
      %1771 = vmatpush.msra.mxu0 %v1732
      %1772 = vmatpush.msra.mxu0 %v1731
      %1773 = vmatmul.f32.gmra.mxu0 %v902
      %v1774 = vpop.f32.mrf.mxu0
      %v1775 = vadd.f32 0.0, %v1774
      %1776 = vmatmul.f32.gmra.mxu0 %v905
      %v1777 = vpop.f32.mrf.mxu0
      %v1778 = vadd.f32 0.0, %v1777
      %1779 = vdwg.mxu0
      %v1780 = vsub.f32 %v1752, %v1775
      %v1781 = vsub.f32 %v1755, %v1778
      %1782 = vmatpush.msra.mxu0 0.0
      %1783 = vmatpush.msra.mxu0 0.0
      %1784 = vmatpush.msra.mxu0 0.0
      %1785 = vmatpush.msra.mxu0 0.0
      %1786 = vmatpush.msra.mxu0 0.0
      %1787 = vmatpush.msra.mxu0 0.0
      %1788 = vmatpush.msra.mxu0 0.0
      %1789 = vmatpush.msra.mxu0 0.0
      %1790 = vmatpush.msra.mxu0 0.0
      %1791 = vmatpush.msra.mxu0 0.0
      %1792 = vmatpush.msra.mxu0 0.0
      %1793 = vmatpush.msra.mxu0 0.0
      %1794 = vmatpush.msra.mxu0 0.0
      %1795 = vmatpush.msra.mxu0 %v1730
      %1796 = vmatpush.msra.mxu0 %v1729
      %1797 = vmatpush.msra.mxu0 %v1728
      %1798 = vmatmul.f32.gmra.mxu0 %v902
      %v1799 = vpop.f32.mrf.mxu0
      %v1800 = vadd.f32 0.0, %v1799
      %1801 = vmatmul.f32.gmra.mxu0 %v905
      %v1802 = vpop.f32.mrf.mxu0
      %v1803 = vadd.f32 0.0, %v1802
      %1804 = vdwg.mxu0
      %1805 = vmatpush.msra.mxu0 0.0
      %1806 = vmatpush.msra.mxu0 0.0
      %1807 = vmatpush.msra.mxu0 0.0
      %1808 = vmatpush.msra.mxu0 0.0
      %1809 = vmatpush.msra.mxu0 0.0
      %1810 = vmatpush.msra.mxu0 0.0
      %1811 = vmatpush.msra.mxu0 0.0
      %1812 = vmatpush.msra.mxu0 0.0
      %1813 = vmatpush.msra.mxu0 0.0
      %1814 = vmatpush.msra.mxu0 0.0
      %1815 = vmatpush.msra.mxu0 0.0
      %1816 = vmatpush.msra.mxu0 0.0
      %1817 = vmatpush.msra.mxu0 0.0
      %1818 = vmatpush.msra.mxu0 %v1733
      %1819 = vmatpush.msra.mxu0 %v1732
      %1820 = vmatpush.msra.mxu0 %v1731
      %1821 = vmatmul.f32.gmra.mxu0 %v873
      %v1822 = vpop.f32.mrf.mxu0
      %v1823 = vadd.f32 %v1800, %v1822
      %1824 = vmatmul.f32.gmra.mxu0 %v876
      %v1825 = vpop.f32.mrf.mxu0
      %v1826 = vadd.f32 %v1803, %v1825
      %1827 = vdwg.mxu0
      %v1829 = vsel %vm871, %v1780, 0
      %v1832 = vsel %vm871, %v1781, 0
      %1834 = vmatpush.msra.mxu0 0.0
      %1835 = vmatpush.msra.mxu0 0.0
      %1836 = vmatpush.msra.mxu0 0.0
      %1837 = vmatpush.msra.mxu0 0.0
      %1838 = vmatpush.msra.mxu0 0.0
      %1839 = vmatpush.msra.mxu0 0.0
      %1840 = vmatpush.msra.mxu0 0.0
      %1841 = vmatpush.msra.mxu0 0.0
      %1842 = vmatpush.msra.mxu0 0.0
      %1843 = vmatpush.msra.mxu0 0.0
      %1844 = vmatpush.msra.mxu0 0.0
      %1845 = vmatpush.msra.mxu0 0.0
      %1846 = vmatpush.msra.mxu0 0.0
      %1847 = vmatpush.msra.mxu0 %v361
      %1848 = vmatpush.msra.mxu0 %v360
      %1849 = vmatpush.msra.mxu0 %v359
      %1850 = vmatmul.f32.gmra.mxu0 %v1829
      %v1851 = vpop.f32.mrf.mxu0
      %v1852 = vadd.f32 0.0, %v1851
      %1853 = vmatmul.f32.gmra.mxu0 %v1832
      %v1854 = vpop.f32.mrf.mxu0
      %v1855 = vadd.f32 0.0, %v1854
      %1856 = vdwg.mxu0
      %v1858 = vsel %vm871, %v1823, 0
      %v1861 = vsel %vm871, %v1826, 0
      %1863 = vmatpush.msra.mxu0 0.0
      %1864 = vmatpush.msra.mxu0 0.0
      %1865 = vmatpush.msra.mxu0 0.0
      %1866 = vmatpush.msra.mxu0 0.0
      %1867 = vmatpush.msra.mxu0 0.0
      %1868 = vmatpush.msra.mxu0 0.0
      %1869 = vmatpush.msra.mxu0 0.0
      %1870 = vmatpush.msra.mxu0 0.0
      %1871 = vmatpush.msra.mxu0 0.0
      %1872 = vmatpush.msra.mxu0 0.0
      %1873 = vmatpush.msra.mxu0 0.0
      %1874 = vmatpush.msra.mxu0 0.0
      %1875 = vmatpush.msra.mxu0 0.0
      %1876 = vmatpush.msra.mxu0 %v364
      %1877 = vmatpush.msra.mxu0 %v363
      %1878 = vmatpush.msra.mxu0 %v362
      %1879 = vmatmul.f32.gmra.mxu0 %v1858
      %v1880 = vpop.f32.mrf.mxu0
      %v1881 = vadd.f32 0.0, %v1880
      %1882 = vmatmul.f32.gmra.mxu0 %v1861
      %v1883 = vpop.f32.mrf.mxu0
      %v1884 = vadd.f32 0.0, %v1883
      %1885 = vdwg.mxu0
      %v1886 = vsub.f32 %v1852, %v1881
      %v1887 = vsub.f32 %v1855, %v1884
      %1888 = vmatpush.msra.mxu0 0.0
      %1889 = vmatpush.msra.mxu0 0.0
      %1890 = vmatpush.msra.mxu0 0.0
      %1891 = vmatpush.msra.mxu0 0.0
      %1892 = vmatpush.msra.mxu0 0.0
      %1893 = vmatpush.msra.mxu0 0.0
      %1894 = vmatpush.msra.mxu0 0.0
      %1895 = vmatpush.msra.mxu0 0.0
      %1896 = vmatpush.msra.mxu0 0.0
      %1897 = vmatpush.msra.mxu0 0.0
      %1898 = vmatpush.msra.mxu0 0.0
      %1899 = vmatpush.msra.mxu0 0.0
      %1900 = vmatpush.msra.mxu0 0.0
      %1901 = vmatpush.msra.mxu0 %v361
      %1902 = vmatpush.msra.mxu0 %v360
      %1903 = vmatpush.msra.mxu0 %v359
      %1904 = vmatmul.f32.gmra.mxu0 %v1858
      %v1905 = vpop.f32.mrf.mxu0
      %v1906 = vadd.f32 0.0, %v1905
      %1907 = vmatmul.f32.gmra.mxu0 %v1861
      %v1908 = vpop.f32.mrf.mxu0
      %v1909 = vadd.f32 0.0, %v1908
      %1910 = vdwg.mxu0
      %1911 = vmatpush.msra.mxu0 0.0
      %1912 = vmatpush.msra.mxu0 0.0
      %1913 = vmatpush.msra.mxu0 0.0
      %1914 = vmatpush.msra.mxu0 0.0
      %1915 = vmatpush.msra.mxu0 0.0
      %1916 = vmatpush.msra.mxu0 0.0
      %1917 = vmatpush.msra.mxu0 0.0
      %1918 = vmatpush.msra.mxu0 0.0
      %1919 = vmatpush.msra.mxu0 0.0
      %1920 = vmatpush.msra.mxu0 0.0
      %1921 = vmatpush.msra.mxu0 0.0
      %1922 = vmatpush.msra.mxu0 0.0
      %1923 = vmatpush.msra.mxu0 0.0
      %1924 = vmatpush.msra.mxu0 %v364
      %1925 = vmatpush.msra.mxu0 %v363
      %1926 = vmatpush.msra.mxu0 %v362
      %1927 = vmatmul.f32.gmra.mxu0 %v1829
      %v1928 = vpop.f32.mrf.mxu0
      %v1929 = vadd.f32 %v1906, %v1928
      %1930 = vmatmul.f32.gmra.mxu0 %v1832
      %v1931 = vpop.f32.mrf.mxu0
      %v1932 = vadd.f32 %v1909, %v1931
      %1933 = vdwg.mxu0
      %1934 = vmatpush.msra.mxu0 0.0
      %1935 = vmatpush.msra.mxu0 0.0
      %1936 = vmatpush.msra.mxu0 0.0
      %1937 = vmatpush.msra.mxu0 0.0
      %1938 = vmatpush.msra.mxu0 0.0
      %1939 = vmatpush.msra.mxu0 0.0
      %1940 = vmatpush.msra.mxu0 0.0
      %1941 = vmatpush.msra.mxu0 0.0
      %1942 = vmatpush.msra.mxu0 0.0
      %1943 = vmatpush.msra.mxu0 0.0
      %1944 = vmatpush.msra.mxu0 0.0
      %1945 = vmatpush.msra.mxu0 0.0
      %1946 = vmatpush.msra.mxu0 0.0
      %1947 = vmatpush.msra.mxu0 0.0
      %1948 = vmatpush.msra.mxu0 %v1887
      %1949 = vmatpush.msra.mxu0 %v1886
      %1950 = vmatmul.f32.gmra.mxu0 %v404
      %v1951 = vpop.f32.mrf.mxu0
      %v1952 = vadd.f32 0.0, %v1951
      %1953 = vmatmul.f32.gmra.mxu0 %v407
      %v1954 = vpop.f32.mrf.mxu0
      %v1955 = vadd.f32 0.0, %v1954
      %1956 = vdwg.mxu0
      %1957 = vmatpush.msra.mxu0 0.0
      %1958 = vmatpush.msra.mxu0 0.0
      %1959 = vmatpush.msra.mxu0 0.0
      %1960 = vmatpush.msra.mxu0 0.0
      %1961 = vmatpush.msra.mxu0 0.0
      %1962 = vmatpush.msra.mxu0 0.0
      %1963 = vmatpush.msra.mxu0 0.0
      %1964 = vmatpush.msra.mxu0 0.0
      %1965 = vmatpush.msra.mxu0 0.0
      %1966 = vmatpush.msra.mxu0 0.0
      %1967 = vmatpush.msra.mxu0 0.0
      %1968 = vmatpush.msra.mxu0 0.0
      %1969 = vmatpush.msra.mxu0 0.0
      %1970 = vmatpush.msra.mxu0 0.0
      %1971 = vmatpush.msra.mxu0 %v1932
      %1972 = vmatpush.msra.mxu0 %v1929
      %1973 = vmatmul.f32.gmra.mxu0 %v433
      %v1974 = vpop.f32.mrf.mxu0
      %v1975 = vadd.f32 0.0, %v1974
      %1976 = vmatmul.f32.gmra.mxu0 %v436
      %v1977 = vpop.f32.mrf.mxu0
      %v1978 = vadd.f32 0.0, %v1977
      %1979 = vdwg.mxu0
      %v1980 = vsub.f32 %v1952, %v1975
      %v1981 = vsub.f32 %v1955, %v1978
      %1982 = vmatpush.msra.mxu0 0.0
      %1983 = vmatpush.msra.mxu0 0.0
      %1984 = vmatpush.msra.mxu0 0.0
      %1985 = vmatpush.msra.mxu0 0.0
      %1986 = vmatpush.msra.mxu0 0.0
      %1987 = vmatpush.msra.mxu0 0.0
      %1988 = vmatpush.msra.mxu0 0.0
      %1989 = vmatpush.msra.mxu0 0.0
      %1990 = vmatpush.msra.mxu0 0.0
      %1991 = vmatpush.msra.mxu0 0.0
      %1992 = vmatpush.msra.mxu0 0.0
      %1993 = vmatpush.msra.mxu0 0.0
      %1994 = vmatpush.msra.mxu0 0.0
      %1995 = vmatpush.msra.mxu0 0.0
      %1996 = vmatpush.msra.mxu0 %v1887
      %1997 = vmatpush.msra.mxu0 %v1886
      %1998 = vmatmul.f32.gmra.mxu0 %v433
      %v1999 = vpop.f32.mrf.mxu0
      %v2000 = vadd.f32 0.0, %v1999
      %2001 = vmatmul.f32.gmra.mxu0 %v436
      %v2002 = vpop.f32.mrf.mxu0
      %v2003 = vadd.f32 0.0, %v2002
      %2004 = vdwg.mxu0
      %2005 = vmatpush.msra.mxu0 0.0
      %2006 = vmatpush.msra.mxu0 0.0
      %2007 = vmatpush.msra.mxu0 0.0
      %2008 = vmatpush.msra.mxu0 0.0
      %2009 = vmatpush.msra.mxu0 0.0
      %2010 = vmatpush.msra.mxu0 0.0
      %2011 = vmatpush.msra.mxu0 0.0
      %2012 = vmatpush.msra.mxu0 0.0
      %2013 = vmatpush.msra.mxu0 0.0
      %2014 = vmatpush.msra.mxu0 0.0
      %2015 = vmatpush.msra.mxu0 0.0
      %2016 = vmatpush.msra.mxu0 0.0
      %2017 = vmatpush.msra.mxu0 0.0
      %2018 = vmatpush.msra.mxu0 0.0
      %2019 = vmatpush.msra.mxu0 %v1932
      %2020 = vmatpush.msra.mxu0 %v1929
      %2021 = vmatmul.f32.gmra.mxu0 %v404
      %v2022 = vpop.f32.mrf.mxu0
      %v2023 = vadd.f32 %v2000, %v2022
      %2024 = vmatmul.f32.gmra.mxu0 %v407
      %v2025 = vpop.f32.mrf.mxu0
      %v2026 = vadd.f32 %v2003, %v2025
      %2027 = vdwg.mxu0
      %v2029 = vsel %vm402, %v1980, 0
      %v2032 = vsel %vm402, %v1981, 0
      %2034 = vmatpush.msra.mxu0 0.0
      %2035 = vmatpush.msra.mxu0 0.0
      %2036 = vmatpush.msra.mxu0 0.0
      %2037 = vmatpush.msra.mxu0 0.0
      %2038 = vmatpush.msra.mxu0 0.0
      %2039 = vmatpush.msra.mxu0 0.0
      %2040 = vmatpush.msra.mxu0 0.0
      %2041 = vmatpush.msra.mxu0 0.0
      %2042 = vmatpush.msra.mxu0 0.0
      %2043 = vmatpush.msra.mxu0 0.0
      %2044 = vmatpush.msra.mxu0 0.0
      %2045 = vmatpush.msra.mxu0 0.0
      %2046 = vmatpush.msra.mxu0 0.0
      %2047 = vmatpush.msra.mxu0 0.0
      %2048 = vmatpush.msra.mxu0 %v342
      %2049 = vmatpush.msra.mxu0 %v341
      %2050 = vmatmul.f32.gmra.mxu0 %v2029
      %v2051 = vpop.f32.mrf.mxu0
      %v2052 = vadd.f32 0.0, %v2051
      %2053 = vmatmul.f32.gmra.mxu0 %v2032
      %v2054 = vpop.f32.mrf.mxu0
      %v2055 = vadd.f32 0.0, %v2054
      %2056 = vdwg.mxu0
      %v2058 = vsel %vm402, %v2023, 0
      %v2061 = vsel %vm402, %v2026, 0
      %2063 = vmatpush.msra.mxu0 0.0
      %2064 = vmatpush.msra.mxu0 0.0
      %2065 = vmatpush.msra.mxu0 0.0
      %2066 = vmatpush.msra.mxu0 0.0
      %2067 = vmatpush.msra.mxu0 0.0
      %2068 = vmatpush.msra.mxu0 0.0
      %2069 = vmatpush.msra.mxu0 0.0
      %2070 = vmatpush.msra.mxu0 0.0
      %2071 = vmatpush.msra.mxu0 0.0
      %2072 = vmatpush.msra.mxu0 0.0
      %2073 = vmatpush.msra.mxu0 0.0
      %2074 = vmatpush.msra.mxu0 0.0
      %2075 = vmatpush.msra.mxu0 0.0
      %2076 = vmatpush.msra.mxu0 0.0
      %2077 = vmatpush.msra.mxu0 %v344
      %2078 = vmatpush.msra.mxu0 %v343
      %2079 = vmatmul.f32.gmra.mxu0 %v2058
      %v2080 = vpop.f32.mrf.mxu0
      %v2081 = vadd.f32 0.0, %v2080
      %2082 = vmatmul.f32.gmra.mxu0 %v2061
      %v2083 = vpop.f32.mrf.mxu0
      %v2084 = vadd.f32 0.0, %v2083
      %2085 = vdwg.mxu0
      %v2086 = vsub.f32 %v2052, %v2081
      %v2087 = vsub.f32 %v2055, %v2084
      %2088 = vmatpush.msra.mxu0 0.0
      %2089 = vmatpush.msra.mxu0 0.0
      %2090 = vmatpush.msra.mxu0 0.0
      %2091 = vmatpush.msra.mxu0 0.0
      %2092 = vmatpush.msra.mxu0 0.0
      %2093 = vmatpush.msra.mxu0 0.0
      %2094 = vmatpush.msra.mxu0 0.0
      %2095 = vmatpush.msra.mxu0 0.0
      %2096 = vmatpush.msra.mxu0 0.0
      %2097 = vmatpush.msra.mxu0 0.0
      %2098 = vmatpush.msra.mxu0 0.0
      %2099 = vmatpush.msra.mxu0 0.0
      %2100 = vmatpush.msra.mxu0 0.0
      %2101 = vmatpush.msra.mxu0 0.0
      %2102 = vmatpush.msra.mxu0 %v342
      %2103 = vmatpush.msra.mxu0 %v341
      %2104 = vmatmul.f32.gmra.mxu0 %v2058
      %v2105 = vpop.f32.mrf.mxu0
      %v2106 = vadd.f32 0.0, %v2105
      %2107 = vmatmul.f32.gmra.mxu0 %v2061
      %v2108 = vpop.f32.mrf.mxu0
      %v2109 = vadd.f32 0.0, %v2108
      %2110 = vdwg.mxu0
      %2111 = vmatpush.msra.mxu0 0.0
      %2112 = vmatpush.msra.mxu0 0.0
      %2113 = vmatpush.msra.mxu0 0.0
      %2114 = vmatpush.msra.mxu0 0.0
      %2115 = vmatpush.msra.mxu0 0.0
      %2116 = vmatpush.msra.mxu0 0.0
      %2117 = vmatpush.msra.mxu0 0.0
      %2118 = vmatpush.msra.mxu0 0.0
      %2119 = vmatpush.msra.mxu0 0.0
      %2120 = vmatpush.msra.mxu0 0.0
      %2121 = vmatpush.msra.mxu0 0.0
      %2122 = vmatpush.msra.mxu0 0.0
      %2123 = vmatpush.msra.mxu0 0.0
      %2124 = vmatpush.msra.mxu0 0.0
      %2125 = vmatpush.msra.mxu0 %v344
      %2126 = vmatpush.msra.mxu0 %v343
      %2127 = vmatmul.f32.gmra.mxu0 %v2029
      %v2128 = vpop.f32.mrf.mxu0
      %v2129 = vadd.f32 %v2106, %v2128
      %2130 = vmatmul.f32.gmra.mxu0 %v2032
      %v2131 = vpop.f32.mrf.mxu0
      %v2132 = vadd.f32 %v2109, %v2131
      %2133 = vdwg.mxu0
      %v2134 = vmul.f32 %v2086, %v373
      %v2135 = vmul.f32 %v2087, %v374
      %v2136 = vmul.f32 %v2129, %v375
      %v2137 = vmul.f32 %v2132, %v376
      %v2138 = vsub.f32 %v2134, %v2136
      %v2139 = vsub.f32 %v2135, %v2137
      %v2140 = vmul.f32 %v2086, %v375
      %v2141 = vmul.f32 %v2087, %v376
      %v2142 = vmul.f32 %v2129, %v373
      %v2143 = vmul.f32 %v2132, %v374
      %v2144 = vadd.f32 %v2140, %v2142
      %v2145 = vadd.f32 %v2141, %v2143
      %2146 = vmatpush.msra.mxu0 0.0
      %2147 = vmatpush.msra.mxu0 0.0
      %2148 = vmatpush.msra.mxu0 0.0
      %2149 = vmatpush.msra.mxu0 0.0
      %2150 = vmatpush.msra.mxu0 0.0
      %2151 = vmatpush.msra.mxu0 0.0
      %2152 = vmatpush.msra.mxu0 0.0
      %2153 = vmatpush.msra.mxu0 0.0
      %2154 = vmatpush.msra.mxu0 0.0
      %2155 = vmatpush.msra.mxu0 0.0
      %2156 = vmatpush.msra.mxu0 0.0
      %2157 = vmatpush.msra.mxu0 0.0
      %2158 = vmatpush.msra.mxu0 0.0
      %2159 = vmatpush.msra.mxu0 0.0
      %2160 = vmatpush.msra.mxu0 %v2139
      %2161 = vmatpush.msra.mxu0 %v2138
      %2162 = vmatmul.f32.gmra.mxu0 %v404
      %v2163 = vpop.f32.mrf.mxu0
      %v2164 = vadd.f32 0.0, %v2163
      %2165 = vmatmul.f32.gmra.mxu0 %v407
      %v2166 = vpop.f32.mrf.mxu0
      %v2167 = vadd.f32 0.0, %v2166
      %2168 = vdwg.mxu0
      %2169 = vmatpush.msra.mxu0 0.0
      %2170 = vmatpush.msra.mxu0 0.0
      %2171 = vmatpush.msra.mxu0 0.0
      %2172 = vmatpush.msra.mxu0 0.0
      %2173 = vmatpush.msra.mxu0 0.0
      %2174 = vmatpush.msra.mxu0 0.0
      %2175 = vmatpush.msra.mxu0 0.0
      %2176 = vmatpush.msra.mxu0 0.0
      %2177 = vmatpush.msra.mxu0 0.0
      %2178 = vmatpush.msra.mxu0 0.0
      %2179 = vmatpush.msra.mxu0 0.0
      %2180 = vmatpush.msra.mxu0 0.0
      %2181 = vmatpush.msra.mxu0 0.0
      %2182 = vmatpush.msra.mxu0 0.0
      %2183 = vmatpush.msra.mxu0 %v2145
      %2184 = vmatpush.msra.mxu0 %v2144
      %2185 = vmatmul.f32.gmra.mxu0 %v433
      %v2186 = vpop.f32.mrf.mxu0
      %v2187 = vadd.f32 0.0, %v2186
      %2188 = vmatmul.f32.gmra.mxu0 %v436
      %v2189 = vpop.f32.mrf.mxu0
      %v2190 = vadd.f32 0.0, %v2189
      %2191 = vdwg.mxu0
      %v2192 = vsub.f32 %v2164, %v2187
      %v2193 = vsub.f32 %v2167, %v2190
      %2194 = vmatpush.msra.mxu0 0.0
      %2195 = vmatpush.msra.mxu0 0.0
      %2196 = vmatpush.msra.mxu0 0.0
      %2197 = vmatpush.msra.mxu0 0.0
      %2198 = vmatpush.msra.mxu0 0.0
      %2199 = vmatpush.msra.mxu0 0.0
      %2200 = vmatpush.msra.mxu0 0.0
      %2201 = vmatpush.msra.mxu0 0.0
      %2202 = vmatpush.msra.mxu0 0.0
      %2203 = vmatpush.msra.mxu0 0.0
      %2204 = vmatpush.msra.mxu0 0.0
      %2205 = vmatpush.msra.mxu0 0.0
      %2206 = vmatpush.msra.mxu0 0.0
      %2207 = vmatpush.msra.mxu0 0.0
      %2208 = vmatpush.msra.mxu0 %v2139
      %2209 = vmatpush.msra.mxu0 %v2138
      %2210 = vmatmul.f32.gmra.mxu0 %v433
      %v2211 = vpop.f32.mrf.mxu0
      %v2212 = vadd.f32 0.0, %v2211
      %2213 = vmatmul.f32.gmra.mxu0 %v436
      %v2214 = vpop.f32.mrf.mxu0
      %v2215 = vadd.f32 0.0, %v2214
      %2216 = vdwg.mxu0
      %2217 = vmatpush.msra.mxu0 0.0
      %2218 = vmatpush.msra.mxu0 0.0
      %2219 = vmatpush.msra.mxu0 0.0
      %2220 = vmatpush.msra.mxu0 0.0
      %2221 = vmatpush.msra.mxu0 0.0
      %2222 = vmatpush.msra.mxu0 0.0
      %2223 = vmatpush.msra.mxu0 0.0
      %2224 = vmatpush.msra.mxu0 0.0
      %2225 = vmatpush.msra.mxu0 0.0
      %2226 = vmatpush.msra.mxu0 0.0
      %2227 = vmatpush.msra.mxu0 0.0
      %2228 = vmatpush.msra.mxu0 0.0
      %2229 = vmatpush.msra.mxu0 0.0
      %2230 = vmatpush.msra.mxu0 0.0
      %2231 = vmatpush.msra.mxu0 %v2145
      %2232 = vmatpush.msra.mxu0 %v2144
      %2233 = vmatmul.f32.gmra.mxu0 %v404
      %v2234 = vpop.f32.mrf.mxu0
      %v2235 = vadd.f32 %v2212, %v2234
      %2236 = vmatmul.f32.gmra.mxu0 %v407
      %v2237 = vpop.f32.mrf.mxu0
      %v2238 = vadd.f32 %v2215, %v2237
      %2239 = vdwg.mxu0
      %v2241 = vsel %vm402, %v2192, 0
      %v2244 = vsel %vm402, %v2193, 0
      %2246 = vmatpush.msra.mxu0 0.0
      %2247 = vmatpush.msra.mxu0 0.0
      %2248 = vmatpush.msra.mxu0 0.0
      %2249 = vmatpush.msra.mxu0 0.0
      %2250 = vmatpush.msra.mxu0 0.0
      %2251 = vmatpush.msra.mxu0 0.0
      %2252 = vmatpush.msra.mxu0 0.0
      %2253 = vmatpush.msra.mxu0 0.0
      %2254 = vmatpush.msra.mxu0 0.0
      %2255 = vmatpush.msra.mxu0 0.0
      %2256 = vmatpush.msra.mxu0 0.0
      %2257 = vmatpush.msra.mxu0 0.0
      %2258 = vmatpush.msra.mxu0 0.0
      %2259 = vmatpush.msra.mxu0 0.0
      %2260 = vmatpush.msra.mxu0 %v342
      %2261 = vmatpush.msra.mxu0 %v341
      %2262 = vmatmul.f32.gmra.mxu0 %v2241
      %v2263 = vpop.f32.mrf.mxu0
      %v2264 = vadd.f32 0.0, %v2263
      %2265 = vmatmul.f32.gmra.mxu0 %v2244
      %v2266 = vpop.f32.mrf.mxu0
      %v2267 = vadd.f32 0.0, %v2266
      %2268 = vdwg.mxu0
      %v2270 = vsel %vm402, %v2235, 0
      %v2273 = vsel %vm402, %v2238, 0
      %2275 = vmatpush.msra.mxu0 0.0
      %2276 = vmatpush.msra.mxu0 0.0
      %2277 = vmatpush.msra.mxu0 0.0
      %2278 = vmatpush.msra.mxu0 0.0
      %2279 = vmatpush.msra.mxu0 0.0
      %2280 = vmatpush.msra.mxu0 0.0
      %2281 = vmatpush.msra.mxu0 0.0
      %2282 = vmatpush.msra.mxu0 0.0
      %2283 = vmatpush.msra.mxu0 0.0
      %2284 = vmatpush.msra.mxu0 0.0
      %2285 = vmatpush.msra.mxu0 0.0
      %2286 = vmatpush.msra.mxu0 0.0
      %2287 = vmatpush.msra.mxu0 0.0
      %2288 = vmatpush.msra.mxu0 0.0
      %2289 = vmatpush.msra.mxu0 %v344
      %2290 = vmatpush.msra.mxu0 %v343
      %2291 = vmatmul.f32.gmra.mxu0 %v2270
      %v2292 = vpop.f32.mrf.mxu0
      %v2293 = vadd.f32 0.0, %v2292
      %2294 = vmatmul.f32.gmra.mxu0 %v2273
      %v2295 = vpop.f32.mrf.mxu0
      %v2296 = vadd.f32 0.0, %v2295
      %2297 = vdwg.mxu0
      %v2298 = vsub.f32 %v2264, %v2293
      %v2299 = vsub.f32 %v2267, %v2296
      %2300 = vmatpush.msra.mxu0 0.0
      %2301 = vmatpush.msra.mxu0 0.0
      %2302 = vmatpush.msra.mxu0 0.0
      %2303 = vmatpush.msra.mxu0 0.0
      %2304 = vmatpush.msra.mxu0 0.0
      %2305 = vmatpush.msra.mxu0 0.0
      %2306 = vmatpush.msra.mxu0 0.0
      %2307 = vmatpush.msra.mxu0 0.0
      %2308 = vmatpush.msra.mxu0 0.0
      %2309 = vmatpush.msra.mxu0 0.0
      %2310 = vmatpush.msra.mxu0 0.0
      %2311 = vmatpush.msra.mxu0 0.0
      %2312 = vmatpush.msra.mxu0 0.0
      %2313 = vmatpush.msra.mxu0 0.0
      %2314 = vmatpush.msra.mxu0 %v342
      %2315 = vmatpush.msra.mxu0 %v341
      %2316 = vmatmul.f32.gmra.mxu0 %v2270
      %v2317 = vpop.f32.mrf.mxu0
      %v2318 = vadd.f32 0.0, %v2317
      %2319 = vmatmul.f32.gmra.mxu0 %v2273
      %v2320 = vpop.f32.mrf.mxu0
      %v2321 = vadd.f32 0.0, %v2320
      %2322 = vdwg.mxu0
      %2323 = vmatpush.msra.mxu0 0.0
      %2324 = vmatpush.msra.mxu0 0.0
      %2325 = vmatpush.msra.mxu0 0.0
      %2326 = vmatpush.msra.mxu0 0.0
      %2327 = vmatpush.msra.mxu0 0.0
      %2328 = vmatpush.msra.mxu0 0.0
      %2329 = vmatpush.msra.mxu0 0.0
      %2330 = vmatpush.msra.mxu0 0.0
      %2331 = vmatpush.msra.mxu0 0.0
      %2332 = vmatpush.msra.mxu0 0.0
      %2333 = vmatpush.msra.mxu0 0.0
      %2334 = vmatpush.msra.mxu0 0.0
      %2335 = vmatpush.msra.mxu0 0.0
      %2336 = vmatpush.msra.mxu0 0.0
      %2337 = vmatpush.msra.mxu0 %v344
      %2338 = vmatpush.msra.mxu0 %v343
      %2339 = vmatmul.f32.gmra.mxu0 %v2241
      %v2340 = vpop.f32.mrf.mxu0
      %v2341 = vadd.f32 %v2318, %v2340
      %2342 = vmatmul.f32.gmra.mxu0 %v2244
      %v2343 = vpop.f32.mrf.mxu0
      %v2344 = vadd.f32 %v2321, %v2343
      %2345 = vdwg.mxu0
      %2346 = vmatpush.msra.mxu0 0.0
      %2347 = vmatpush.msra.mxu0 0.0
      %2348 = vmatpush.msra.mxu0 0.0
      %2349 = vmatpush.msra.mxu0 0.0
      %2350 = vmatpush.msra.mxu0 0.0
      %2351 = vmatpush.msra.mxu0 0.0
      %2352 = vmatpush.msra.mxu0 0.0
      %2353 = vmatpush.msra.mxu0 0.0
      %2354 = vmatpush.msra.mxu0 0.0
      %2355 = vmatpush.msra.mxu0 0.0
      %2356 = vmatpush.msra.mxu0 0.0
      %2357 = vmatpush.msra.mxu0 0.0
      %2358 = vmatpush.msra.mxu0 0.0
      %2359 = vmatpush.msra.mxu0 0.0
      %2360 = vmatpush.msra.mxu0 %v2299
      %2361 = vmatpush.msra.mxu0 %v2298
      %2362 = vmatmul.f32.gmra.mxu0 %v616
      %v2363 = vpop.f32.mrf.mxu0
      %v2364 = vadd.f32 0.0, %v2363
      %2365 = vmatmul.f32.gmra.mxu0 %v619
      %v2366 = vpop.f32.mrf.mxu0
      %v2367 = vadd.f32 0.0, %v2366
      %2368 = vmatmul.f32.gmra.mxu0 %v622
      %v2369 = vpop.f32.mrf.mxu0
      %v2370 = vadd.f32 0.0, %v2369
      %2371 = vdwg.mxu0
      %2372 = vmatpush.msra.mxu0 0.0
      %2373 = vmatpush.msra.mxu0 0.0
      %2374 = vmatpush.msra.mxu0 0.0
      %2375 = vmatpush.msra.mxu0 0.0
      %2376 = vmatpush.msra.mxu0 0.0
      %2377 = vmatpush.msra.mxu0 0.0
      %2378 = vmatpush.msra.mxu0 0.0
      %2379 = vmatpush.msra.mxu0 0.0
      %2380 = vmatpush.msra.mxu0 0.0
      %2381 = vmatpush.msra.mxu0 0.0
      %2382 = vmatpush.msra.mxu0 0.0
      %2383 = vmatpush.msra.mxu0 0.0
      %2384 = vmatpush.msra.mxu0 0.0
      %2385 = vmatpush.msra.mxu0 0.0
      %2386 = vmatpush.msra.mxu0 %v2344
      %2387 = vmatpush.msra.mxu0 %v2341
      %2388 = vmatmul.f32.gmra.mxu0 %v651
      %v2389 = vpop.f32.mrf.mxu0
      %v2390 = vadd.f32 0.0, %v2389
      %2391 = vmatmul.f32.gmra.mxu0 %v654
      %v2392 = vpop.f32.mrf.mxu0
      %v2393 = vadd.f32 0.0, %v2392
      %2394 = vmatmul.f32.gmra.mxu0 %v657
      %v2395 = vpop.f32.mrf.mxu0
      %v2396 = vadd.f32 0.0, %v2395
      %2397 = vdwg.mxu0
      %v2398 = vsub.f32 %v2364, %v2390
      %v2399 = vsub.f32 %v2367, %v2393
      %v2400 = vsub.f32 %v2370, %v2396
      %2401 = vmatpush.msra.mxu0 0.0
      %2402 = vmatpush.msra.mxu0 0.0
      %2403 = vmatpush.msra.mxu0 0.0
      %2404 = vmatpush.msra.mxu0 0.0
      %2405 = vmatpush.msra.mxu0 0.0
      %2406 = vmatpush.msra.mxu0 0.0
      %2407 = vmatpush.msra.mxu0 0.0
      %2408 = vmatpush.msra.mxu0 0.0
      %2409 = vmatpush.msra.mxu0 0.0
      %2410 = vmatpush.msra.mxu0 0.0
      %2411 = vmatpush.msra.mxu0 0.0
      %2412 = vmatpush.msra.mxu0 0.0
      %2413 = vmatpush.msra.mxu0 0.0
      %2414 = vmatpush.msra.mxu0 0.0
      %2415 = vmatpush.msra.mxu0 %v2299
      %2416 = vmatpush.msra.mxu0 %v2298
      %2417 = vmatmul.f32.gmra.mxu0 %v651
      %v2418 = vpop.f32.mrf.mxu0
      %v2419 = vadd.f32 0.0, %v2418
      %2420 = vmatmul.f32.gmra.mxu0 %v654
      %v2421 = vpop.f32.mrf.mxu0
      %v2422 = vadd.f32 0.0, %v2421
      %2423 = vmatmul.f32.gmra.mxu0 %v657
      %v2424 = vpop.f32.mrf.mxu0
      %v2425 = vadd.f32 0.0, %v2424
      %2426 = vdwg.mxu0
      %2427 = vmatpush.msra.mxu0 0.0
      %2428 = vmatpush.msra.mxu0 0.0
      %2429 = vmatpush.msra.mxu0 0.0
      %2430 = vmatpush.msra.mxu0 0.0
      %2431 = vmatpush.msra.mxu0 0.0
      %2432 = vmatpush.msra.mxu0 0.0
      %2433 = vmatpush.msra.mxu0 0.0
      %2434 = vmatpush.msra.mxu0 0.0
      %2435 = vmatpush.msra.mxu0 0.0
      %2436 = vmatpush.msra.mxu0 0.0
      %2437 = vmatpush.msra.mxu0 0.0
      %2438 = vmatpush.msra.mxu0 0.0
      %2439 = vmatpush.msra.mxu0 0.0
      %2440 = vmatpush.msra.mxu0 0.0
      %2441 = vmatpush.msra.mxu0 %v2344
      %2442 = vmatpush.msra.mxu0 %v2341
      %2443 = vmatmul.f32.gmra.mxu0 %v616
      %v2444 = vpop.f32.mrf.mxu0
      %v2445 = vadd.f32 %v2419, %v2444
      %2446 = vmatmul.f32.gmra.mxu0 %v619
      %v2447 = vpop.f32.mrf.mxu0
      %v2448 = vadd.f32 %v2422, %v2447
      %2449 = vmatmul.f32.gmra.mxu0 %v622
      %v2450 = vpop.f32.mrf.mxu0
      %v2451 = vadd.f32 %v2425, %v2450
      %2452 = vdwg.mxu0
      %v2454 = vsel %vm402, %v2398, 0
      %v2457 = vsel %vm402, %v2399, 0
      %v2460 = vsel %vm402, %v2400, 0
      %2462 = vmatpush.msra.mxu0 0.0
      %2463 = vmatpush.msra.mxu0 0.0
      %2464 = vmatpush.msra.mxu0 0.0
      %2465 = vmatpush.msra.mxu0 0.0
      %2466 = vmatpush.msra.mxu0 0.0
      %2467 = vmatpush.msra.mxu0 0.0
      %2468 = vmatpush.msra.mxu0 0.0
      %2469 = vmatpush.msra.mxu0 0.0
      %2470 = vmatpush.msra.mxu0 0.0
      %2471 = vmatpush.msra.mxu0 0.0
      %2472 = vmatpush.msra.mxu0 0.0
      %2473 = vmatpush.msra.mxu0 0.0
      %2474 = vmatpush.msra.mxu0 0.0
      %2475 = vmatpush.msra.mxu0 0.0
      %2476 = vmatpush.msra.mxu0 %v352
      %2477 = vmatpush.msra.mxu0 %v351
      %2478 = vmatmul.f32.gmra.mxu0 %v2454
      %v2479 = vpop.f32.mrf.mxu0
      %v2480 = vadd.f32 0.0, %v2479
      %2481 = vmatmul.f32.gmra.mxu0 %v2457
      %v2482 = vpop.f32.mrf.mxu0
      %v2483 = vadd.f32 0.0, %v2482
      %2484 = vmatmul.f32.gmra.mxu0 %v2460
      %v2485 = vpop.f32.mrf.mxu0
      %v2486 = vadd.f32 0.0, %v2485
      %2487 = vdwg.mxu0
      %v2489 = vsel %vm402, %v2445, 0
      %v2492 = vsel %vm402, %v2448, 0
      %v2495 = vsel %vm402, %v2451, 0
      %2497 = vmatpush.msra.mxu0 0.0
      %2498 = vmatpush.msra.mxu0 0.0
      %2499 = vmatpush.msra.mxu0 0.0
      %2500 = vmatpush.msra.mxu0 0.0
      %2501 = vmatpush.msra.mxu0 0.0
      %2502 = vmatpush.msra.mxu0 0.0
      %2503 = vmatpush.msra.mxu0 0.0
      %2504 = vmatpush.msra.mxu0 0.0
      %2505 = vmatpush.msra.mxu0 0.0
      %2506 = vmatpush.msra.mxu0 0.0
      %2507 = vmatpush.msra.mxu0 0.0
      %2508 = vmatpush.msra.mxu0 0.0
      %2509 = vmatpush.msra.mxu0 0.0
      %2510 = vmatpush.msra.mxu0 0.0
      %2511 = vmatpush.msra.mxu0 %v354
      %2512 = vmatpush.msra.mxu0 %v353
      %2513 = vmatmul.f32.gmra.mxu0 %v2489
      %v2514 = vpop.f32.mrf.mxu0
      %v2515 = vadd.f32 0.0, %v2514
      %2516 = vmatmul.f32.gmra.mxu0 %v2492
      %v2517 = vpop.f32.mrf.mxu0
      %v2518 = vadd.f32 0.0, %v2517
      %2519 = vmatmul.f32.gmra.mxu0 %v2495
      %v2520 = vpop.f32.mrf.mxu0
      %v2521 = vadd.f32 0.0, %v2520
      %2522 = vdwg.mxu0
      %v2523 = vsub.f32 %v2480, %v2515
      %v2524 = vsub.f32 %v2483, %v2518
      %v2525 = vsub.f32 %v2486, %v2521
      %2526 = vmatpush.msra.mxu0 0.0
      %2527 = vmatpush.msra.mxu0 0.0
      %2528 = vmatpush.msra.mxu0 0.0
      %2529 = vmatpush.msra.mxu0 0.0
      %2530 = vmatpush.msra.mxu0 0.0
      %2531 = vmatpush.msra.mxu0 0.0
      %2532 = vmatpush.msra.mxu0 0.0
      %2533 = vmatpush.msra.mxu0 0.0
      %2534 = vmatpush.msra.mxu0 0.0
      %2535 = vmatpush.msra.mxu0 0.0
      %2536 = vmatpush.msra.mxu0 0.0
      %2537 = vmatpush.msra.mxu0 0.0
      %2538 = vmatpush.msra.mxu0 0.0
      %2539 = vmatpush.msra.mxu0 0.0
      %2540 = vmatpush.msra.mxu0 %v352
      %2541 = vmatpush.msra.mxu0 %v351
      %2542 = vmatmul.f32.gmra.mxu0 %v2489
      %v2543 = vpop.f32.mrf.mxu0
      %v2544 = vadd.f32 0.0, %v2543
      %2545 = vmatmul.f32.gmra.mxu0 %v2492
      %v2546 = vpop.f32.mrf.mxu0
      %v2547 = vadd.f32 0.0, %v2546
      %2548 = vmatmul.f32.gmra.mxu0 %v2495
      %v2549 = vpop.f32.mrf.mxu0
      %v2550 = vadd.f32 0.0, %v2549
      %2551 = vdwg.mxu0
      %2552 = vmatpush.msra.mxu0 0.0
      %2553 = vmatpush.msra.mxu0 0.0
      %2554 = vmatpush.msra.mxu0 0.0
      %2555 = vmatpush.msra.mxu0 0.0
      %2556 = vmatpush.msra.mxu0 0.0
      %2557 = vmatpush.msra.mxu0 0.0
      %2558 = vmatpush.msra.mxu0 0.0
      %2559 = vmatpush.msra.mxu0 0.0
      %2560 = vmatpush.msra.mxu0 0.0
      %2561 = vmatpush.msra.mxu0 0.0
      %2562 = vmatpush.msra.mxu0 0.0
      %2563 = vmatpush.msra.mxu0 0.0
      %2564 = vmatpush.msra.mxu0 0.0
      %2565 = vmatpush.msra.mxu0 0.0
      %2566 = vmatpush.msra.mxu0 %v354
      %2567 = vmatpush.msra.mxu0 %v353
      %2568 = vmatmul.f32.gmra.mxu0 %v2454
      %v2569 = vpop.f32.mrf.mxu0
      %v2570 = vadd.f32 %v2544, %v2569
      %2571 = vmatmul.f32.gmra.mxu0 %v2457
      %v2572 = vpop.f32.mrf.mxu0
      %v2573 = vadd.f32 %v2547, %v2572
      %2574 = vmatmul.f32.gmra.mxu0 %v2460
      %v2575 = vpop.f32.mrf.mxu0
      %v2576 = vadd.f32 %v2550, %v2575
      %2577 = vdwg.mxu0
      %v2578 = vmul.f32 %v2523, %v387
      %v2579 = vmul.f32 %v2524, %v388
      %v2580 = vmul.f32 %v2525, %v389
      %v2581 = vmul.f32 %v2570, %v387
      %v2582 = vmul.f32 %v2573, %v388
      %v2583 = vmul.f32 %v2576, %v389
      %2584 = vmatpush.msra.mxu0 0.0
      %2585 = vmatpush.msra.mxu0 0.0
      %2586 = vmatpush.msra.mxu0 0.0
      %2587 = vmatpush.msra.mxu0 0.0
      %2588 = vmatpush.msra.mxu0 0.0
      %2589 = vmatpush.msra.mxu0 0.0
      %2590 = vmatpush.msra.mxu0 0.0
      %2591 = vmatpush.msra.mxu0 0.0
      %2592 = vmatpush.msra.mxu0 0.0
      %2593 = vmatpush.msra.mxu0 0.0
      %2594 = vmatpush.msra.mxu0 0.0
      %2595 = vmatpush.msra.mxu0 0.0
      %2596 = vmatpush.msra.mxu0 0.0
      %2597 = vmatpush.msra.mxu0 %v2580
      %2598 = vmatpush.msra.mxu0 %v2579
      %2599 = vmatpush.msra.mxu0 %v2578
      %2600 = vmatmul.f32.gmra.mxu0 %v873
      %v2601 = vpop.f32.mrf.mxu0
      %v2602 = vadd.f32 0.0, %v2601
      %2603 = vmatmul.f32.gmra.mxu0 %v876
      %v2604 = vpop.f32.mrf.mxu0
      %v2605 = vadd.f32 0.0, %v2604
      %2606 = vdwg.mxu0
      %2607 = vmatpush.msra.mxu0 0.0
      %2608 = vmatpush.msra.mxu0 0.0
      %2609 = vmatpush.msra.mxu0 0.0
      %2610 = vmatpush.msra.mxu0 0.0
      %2611 = vmatpush.msra.mxu0 0.0
      %2612 = vmatpush.msra.mxu0 0.0
      %2613 = vmatpush.msra.mxu0 0.0
      %2614 = vmatpush.msra.mxu0 0.0
      %2615 = vmatpush.msra.mxu0 0.0
      %2616 = vmatpush.msra.mxu0 0.0
      %2617 = vmatpush.msra.mxu0 0.0
      %2618 = vmatpush.msra.mxu0 0.0
      %2619 = vmatpush.msra.mxu0 0.0
      %2620 = vmatpush.msra.mxu0 %v2583
      %2621 = vmatpush.msra.mxu0 %v2582
      %2622 = vmatpush.msra.mxu0 %v2581
      %2623 = vmatmul.f32.gmra.mxu0 %v902
      %v2624 = vpop.f32.mrf.mxu0
      %v2625 = vadd.f32 0.0, %v2624
      %2626 = vmatmul.f32.gmra.mxu0 %v905
      %v2627 = vpop.f32.mrf.mxu0
      %v2628 = vadd.f32 0.0, %v2627
      %2629 = vdwg.mxu0
      %v2630 = vsub.f32 %v2602, %v2625
      %v2631 = vsub.f32 %v2605, %v2628
      %2632 = vmatpush.msra.mxu0 0.0
      %2633 = vmatpush.msra.mxu0 0.0
      %2634 = vmatpush.msra.mxu0 0.0
      %2635 = vmatpush.msra.mxu0 0.0
      %2636 = vmatpush.msra.mxu0 0.0
      %2637 = vmatpush.msra.mxu0 0.0
      %2638 = vmatpush.msra.mxu0 0.0
      %2639 = vmatpush.msra.mxu0 0.0
      %2640 = vmatpush.msra.mxu0 0.0
      %2641 = vmatpush.msra.mxu0 0.0
      %2642 = vmatpush.msra.mxu0 0.0
      %2643 = vmatpush.msra.mxu0 0.0
      %2644 = vmatpush.msra.mxu0 0.0
      %2645 = vmatpush.msra.mxu0 %v2580
      %2646 = vmatpush.msra.mxu0 %v2579
      %2647 = vmatpush.msra.mxu0 %v2578
      %2648 = vmatmul.f32.gmra.mxu0 %v902
      %v2649 = vpop.f32.mrf.mxu0
      %v2650 = vadd.f32 0.0, %v2649
      %2651 = vmatmul.f32.gmra.mxu0 %v905
      %v2652 = vpop.f32.mrf.mxu0
      %v2653 = vadd.f32 0.0, %v2652
      %2654 = vdwg.mxu0
      %2655 = vmatpush.msra.mxu0 0.0
      %2656 = vmatpush.msra.mxu0 0.0
      %2657 = vmatpush.msra.mxu0 0.0
      %2658 = vmatpush.msra.mxu0 0.0
      %2659 = vmatpush.msra.mxu0 0.0
      %2660 = vmatpush.msra.mxu0 0.0
      %2661 = vmatpush.msra.mxu0 0.0
      %2662 = vmatpush.msra.mxu0 0.0
      %2663 = vmatpush.msra.mxu0 0.0
      %2664 = vmatpush.msra.mxu0 0.0
      %2665 = vmatpush.msra.mxu0 0.0
      %2666 = vmatpush.msra.mxu0 0.0
      %2667 = vmatpush.msra.mxu0 0.0
      %2668 = vmatpush.msra.mxu0 %v2583
      %2669 = vmatpush.msra.mxu0 %v2582
      %2670 = vmatpush.msra.mxu0 %v2581
      %2671 = vmatmul.f32.gmra.mxu0 %v873
      %v2672 = vpop.f32.mrf.mxu0
      %v2673 = vadd.f32 %v2650, %v2672
      %2674 = vmatmul.f32.gmra.mxu0 %v876
      %v2675 = vpop.f32.mrf.mxu0
      %v2676 = vadd.f32 %v2653, %v2675
      %2677 = vdwg.mxu0
      %v2679 = vsel %vm871, %v2630, 0
      %v2682 = vsel %vm871, %v2631, 0
      %2684 = vmatpush.msra.mxu0 0.0
      %2685 = vmatpush.msra.mxu0 0.0
      %2686 = vmatpush.msra.mxu0 0.0
      %2687 = vmatpush.msra.mxu0 0.0
      %2688 = vmatpush.msra.mxu0 0.0
      %2689 = vmatpush.msra.mxu0 0.0
      %2690 = vmatpush.msra.mxu0 0.0
      %2691 = vmatpush.msra.mxu0 0.0
      %2692 = vmatpush.msra.mxu0 0.0
      %2693 = vmatpush.msra.mxu0 0.0
      %2694 = vmatpush.msra.mxu0 0.0
      %2695 = vmatpush.msra.mxu0 0.0
      %2696 = vmatpush.msra.mxu0 0.0
      %2697 = vmatpush.msra.mxu0 %v361
      %2698 = vmatpush.msra.mxu0 %v360
      %2699 = vmatpush.msra.mxu0 %v359
      %2700 = vmatmul.f32.gmra.mxu0 %v2679
      %v2701 = vpop.f32.mrf.mxu0
      %v2702 = vadd.f32 0.0, %v2701
      %2703 = vmatmul.f32.gmra.mxu0 %v2682
      %v2704 = vpop.f32.mrf.mxu0
      %v2705 = vadd.f32 0.0, %v2704
      %2706 = vdwg.mxu0
      %v2708 = vsel %vm871, %v2673, 0
      %v2711 = vsel %vm871, %v2676, 0
      %2713 = vmatpush.msra.mxu0 0.0
      %2714 = vmatpush.msra.mxu0 0.0
      %2715 = vmatpush.msra.mxu0 0.0
      %2716 = vmatpush.msra.mxu0 0.0
      %2717 = vmatpush.msra.mxu0 0.0
      %2718 = vmatpush.msra.mxu0 0.0
      %2719 = vmatpush.msra.mxu0 0.0
      %2720 = vmatpush.msra.mxu0 0.0
      %2721 = vmatpush.msra.mxu0 0.0
      %2722 = vmatpush.msra.mxu0 0.0
      %2723 = vmatpush.msra.mxu0 0.0
      %2724 = vmatpush.msra.mxu0 0.0
      %2725 = vmatpush.msra.mxu0 0.0
      %2726 = vmatpush.msra.mxu0 %v364
      %2727 = vmatpush.msra.mxu0 %v363
      %2728 = vmatpush.msra.mxu0 %v362
      %2729 = vmatmul.f32.gmra.mxu0 %v2708
      %v2730 = vpop.f32.mrf.mxu0
      %v2731 = vadd.f32 0.0, %v2730
      %2732 = vmatmul.f32.gmra.mxu0 %v2711
      %v2733 = vpop.f32.mrf.mxu0
      %v2734 = vadd.f32 0.0, %v2733
      %2735 = vdwg.mxu0
      %v2736 = vsub.f32 %v2702, %v2731
      %v2737 = vsub.f32 %v2705, %v2734
      %2738 = vmatpush.msra.mxu0 0.0
      %2739 = vmatpush.msra.mxu0 0.0
      %2740 = vmatpush.msra.mxu0 0.0
      %2741 = vmatpush.msra.mxu0 0.0
      %2742 = vmatpush.msra.mxu0 0.0
      %2743 = vmatpush.msra.mxu0 0.0
      %2744 = vmatpush.msra.mxu0 0.0
      %2745 = vmatpush.msra.mxu0 0.0
      %2746 = vmatpush.msra.mxu0 0.0
      %2747 = vmatpush.msra.mxu0 0.0
      %2748 = vmatpush.msra.mxu0 0.0
      %2749 = vmatpush.msra.mxu0 0.0
      %2750 = vmatpush.msra.mxu0 0.0
      %2751 = vmatpush.msra.mxu0 %v361
      %2752 = vmatpush.msra.mxu0 %v360
      %2753 = vmatpush.msra.mxu0 %v359
      %2754 = vmatmul.f32.gmra.mxu0 %v2708
      %v2755 = vpop.f32.mrf.mxu0
      %v2756 = vadd.f32 0.0, %v2755
      %2757 = vmatmul.f32.gmra.mxu0 %v2711
      %v2758 = vpop.f32.mrf.mxu0
      %v2759 = vadd.f32 0.0, %v2758
      %2760 = vdwg.mxu0
      %2761 = vmatpush.msra.mxu0 0.0
      %2762 = vmatpush.msra.mxu0 0.0
      %2763 = vmatpush.msra.mxu0 0.0
      %2764 = vmatpush.msra.mxu0 0.0
      %2765 = vmatpush.msra.mxu0 0.0
      %2766 = vmatpush.msra.mxu0 0.0
      %2767 = vmatpush.msra.mxu0 0.0
      %2768 = vmatpush.msra.mxu0 0.0
      %2769 = vmatpush.msra.mxu0 0.0
      %2770 = vmatpush.msra.mxu0 0.0
      %2771 = vmatpush.msra.mxu0 0.0
      %2772 = vmatpush.msra.mxu0 0.0
      %2773 = vmatpush.msra.mxu0 0.0
      %2774 = vmatpush.msra.mxu0 %v364
      %2775 = vmatpush.msra.mxu0 %v363
      %2776 = vmatpush.msra.mxu0 %v362
      %2777 = vmatmul.f32.gmra.mxu0 %v2679
      %v2778 = vpop.f32.mrf.mxu0
      %v2779 = vadd.f32 %v2756, %v2778
      %2780 = vmatmul.f32.gmra.mxu0 %v2682
      %v2781 = vpop.f32.mrf.mxu0
      %v2782 = vadd.f32 %v2759, %v2781
      %2783 = vdwg.mxu0
      %2784 = vmatpush.msra.mxu0 0.0
      %2785 = vmatpush.msra.mxu0 0.0
      %2786 = vmatpush.msra.mxu0 0.0
      %2787 = vmatpush.msra.mxu0 0.0
      %2788 = vmatpush.msra.mxu0 0.0
      %2789 = vmatpush.msra.mxu0 0.0
      %2790 = vmatpush.msra.mxu0 0.0
      %2791 = vmatpush.msra.mxu0 0.0
      %2792 = vmatpush.msra.mxu0 0.0
      %2793 = vmatpush.msra.mxu0 0.0
      %2794 = vmatpush.msra.mxu0 0.0
      %2795 = vmatpush.msra.mxu0 0.0
      %2796 = vmatpush.msra.mxu0 0.0
      %2797 = vmatpush.msra.mxu0 0.0
      %2798 = vmatpush.msra.mxu0 %v2737
      %2799 = vmatpush.msra.mxu0 %v2736
      %2800 = vmatmul.f32.gmra.mxu0 %v404
      %v2801 = vpop.f32.mrf.mxu0
      %v2802 = vadd.f32 0.0, %v2801
      %2803 = vmatmul.f32.gmra.mxu0 %v407
      %v2804 = vpop.f32.mrf.mxu0
      %v2805 = vadd.f32 0.0, %v2804
      %2806 = vdwg.mxu0
      %2807 = vmatpush.msra.mxu0 0.0
      %2808 = vmatpush.msra.mxu0 0.0
      %2809 = vmatpush.msra.mxu0 0.0
      %2810 = vmatpush.msra.mxu0 0.0
      %2811 = vmatpush.msra.mxu0 0.0
      %2812 = vmatpush.msra.mxu0 0.0
      %2813 = vmatpush.msra.mxu0 0.0
      %2814 = vmatpush.msra.mxu0 0.0
      %2815 = vmatpush.msra.mxu0 0.0
      %2816 = vmatpush.msra.mxu0 0.0
      %2817 = vmatpush.msra.mxu0 0.0
      %2818 = vmatpush.msra.mxu0 0.0
      %2819 = vmatpush.msra.mxu0 0.0
      %2820 = vmatpush.msra.mxu0 0.0
      %2821 = vmatpush.msra.mxu0 %v2782
      %2822 = vmatpush.msra.mxu0 %v2779
      %2823 = vmatmul.f32.gmra.mxu0 %v433
      %v2824 = vpop.f32.mrf.mxu0
      %v2825 = vadd.f32 0.0, %v2824
      %2826 = vmatmul.f32.gmra.mxu0 %v436
      %v2827 = vpop.f32.mrf.mxu0
      %v2828 = vadd.f32 0.0, %v2827
      %2829 = vdwg.mxu0
      %v2830 = vsub.f32 %v2802, %v2825
      %v2831 = vsub.f32 %v2805, %v2828
      %2832 = vmatpush.msra.mxu0 0.0
      %2833 = vmatpush.msra.mxu0 0.0
      %2834 = vmatpush.msra.mxu0 0.0
      %2835 = vmatpush.msra.mxu0 0.0
      %2836 = vmatpush.msra.mxu0 0.0
      %2837 = vmatpush.msra.mxu0 0.0
      %2838 = vmatpush.msra.mxu0 0.0
      %2839 = vmatpush.msra.mxu0 0.0
      %2840 = vmatpush.msra.mxu0 0.0
      %2841 = vmatpush.msra.mxu0 0.0
      %2842 = vmatpush.msra.mxu0 0.0
      %2843 = vmatpush.msra.mxu0 0.0
      %2844 = vmatpush.msra.mxu0 0.0
      %2845 = vmatpush.msra.mxu0 0.0
      %2846 = vmatpush.msra.mxu0 %v2737
      %2847 = vmatpush.msra.mxu0 %v2736
      %2848 = vmatmul.f32.gmra.mxu0 %v433
      %v2849 = vpop.f32.mrf.mxu0
      %v2850 = vadd.f32 0.0, %v2849
      %2851 = vmatmul.f32.gmra.mxu0 %v436
      %v2852 = vpop.f32.mrf.mxu0
      %v2853 = vadd.f32 0.0, %v2852
      %2854 = vdwg.mxu0
      %2855 = vmatpush.msra.mxu0 0.0
      %2856 = vmatpush.msra.mxu0 0.0
      %2857 = vmatpush.msra.mxu0 0.0
      %2858 = vmatpush.msra.mxu0 0.0
      %2859 = vmatpush.msra.mxu0 0.0
      %2860 = vmatpush.msra.mxu0 0.0
      %2861 = vmatpush.msra.mxu0 0.0
      %2862 = vmatpush.msra.mxu0 0.0
      %2863 = vmatpush.msra.mxu0 0.0
      %2864 = vmatpush.msra.mxu0 0.0
      %2865 = vmatpush.msra.mxu0 0.0
      %2866 = vmatpush.msra.mxu0 0.0
      %2867 = vmatpush.msra.mxu0 0.0
      %2868 = vmatpush.msra.mxu0 0.0
      %2869 = vmatpush.msra.mxu0 %v2782
      %2870 = vmatpush.msra.mxu0 %v2779
      %2871 = vmatmul.f32.gmra.mxu0 %v404
      %v2872 = vpop.f32.mrf.mxu0
      %v2873 = vadd.f32 %v2850, %v2872
      %2874 = vmatmul.f32.gmra.mxu0 %v407
      %v2875 = vpop.f32.mrf.mxu0
      %v2876 = vadd.f32 %v2853, %v2875
      %2877 = vdwg.mxu0
      %v2879 = vsel %vm402, %v2830, 0
      %v2882 = vsel %vm402, %v2831, 0
      %2884 = vmatpush.msra.mxu0 0.0
      %2885 = vmatpush.msra.mxu0 0.0
      %2886 = vmatpush.msra.mxu0 0.0
      %2887 = vmatpush.msra.mxu0 0.0
      %2888 = vmatpush.msra.mxu0 0.0
      %2889 = vmatpush.msra.mxu0 0.0
      %2890 = vmatpush.msra.mxu0 0.0
      %2891 = vmatpush.msra.mxu0 0.0
      %2892 = vmatpush.msra.mxu0 0.0
      %2893 = vmatpush.msra.mxu0 0.0
      %2894 = vmatpush.msra.mxu0 0.0
      %2895 = vmatpush.msra.mxu0 0.0
      %2896 = vmatpush.msra.mxu0 0.0
      %2897 = vmatpush.msra.mxu0 0.0
      %2898 = vmatpush.msra.mxu0 %v342
      %2899 = vmatpush.msra.mxu0 %v341
      %2900 = vmatmul.f32.gmra.mxu0 %v2879
      %v2901 = vpop.f32.mrf.mxu0
      %v2902 = vadd.f32 0.0, %v2901
      %2903 = vmatmul.f32.gmra.mxu0 %v2882
      %v2904 = vpop.f32.mrf.mxu0
      %v2905 = vadd.f32 0.0, %v2904
      %2906 = vdwg.mxu0
      %v2908 = vsel %vm402, %v2873, 0
      %v2911 = vsel %vm402, %v2876, 0
      %2913 = vmatpush.msra.mxu0 0.0
      %2914 = vmatpush.msra.mxu0 0.0
      %2915 = vmatpush.msra.mxu0 0.0
      %2916 = vmatpush.msra.mxu0 0.0
      %2917 = vmatpush.msra.mxu0 0.0
      %2918 = vmatpush.msra.mxu0 0.0
      %2919 = vmatpush.msra.mxu0 0.0
      %2920 = vmatpush.msra.mxu0 0.0
      %2921 = vmatpush.msra.mxu0 0.0
      %2922 = vmatpush.msra.mxu0 0.0
      %2923 = vmatpush.msra.mxu0 0.0
      %2924 = vmatpush.msra.mxu0 0.0
      %2925 = vmatpush.msra.mxu0 0.0
      %2926 = vmatpush.msra.mxu0 0.0
      %2927 = vmatpush.msra.mxu0 %v344
      %2928 = vmatpush.msra.mxu0 %v343
      %2929 = vmatmul.f32.gmra.mxu0 %v2908
      %v2930 = vpop.f32.mrf.mxu0
      %v2931 = vadd.f32 0.0, %v2930
      %2932 = vmatmul.f32.gmra.mxu0 %v2911
      %v2933 = vpop.f32.mrf.mxu0
      %v2934 = vadd.f32 0.0, %v2933
      %2935 = vdwg.mxu0
      %v2936 = vsub.f32 %v2902, %v2931
      %v2937 = vsub.f32 %v2905, %v2934
      %2938 = vmatpush.msra.mxu0 0.0
      %2939 = vmatpush.msra.mxu0 0.0
      %2940 = vmatpush.msra.mxu0 0.0
      %2941 = vmatpush.msra.mxu0 0.0
      %2942 = vmatpush.msra.mxu0 0.0
      %2943 = vmatpush.msra.mxu0 0.0
      %2944 = vmatpush.msra.mxu0 0.0
      %2945 = vmatpush.msra.mxu0 0.0
      %2946 = vmatpush.msra.mxu0 0.0
      %2947 = vmatpush.msra.mxu0 0.0
      %2948 = vmatpush.msra.mxu0 0.0
      %2949 = vmatpush.msra.mxu0 0.0
      %2950 = vmatpush.msra.mxu0 0.0
      %2951 = vmatpush.msra.mxu0 0.0
      %2952 = vmatpush.msra.mxu0 %v342
      %2953 = vmatpush.msra.mxu0 %v341
      %2954 = vmatmul.f32.gmra.mxu0 %v2908
      %v2955 = vpop.f32.mrf.mxu0
      %v2956 = vadd.f32 0.0, %v2955
      %2957 = vmatmul.f32.gmra.mxu0 %v2911
      %v2958 = vpop.f32.mrf.mxu0
      %v2959 = vadd.f32 0.0, %v2958
      %2960 = vdwg.mxu0
      %2961 = vmatpush.msra.mxu0 0.0
      %2962 = vmatpush.msra.mxu0 0.0
      %2963 = vmatpush.msra.mxu0 0.0
      %2964 = vmatpush.msra.mxu0 0.0
      %2965 = vmatpush.msra.mxu0 0.0
      %2966 = vmatpush.msra.mxu0 0.0
      %2967 = vmatpush.msra.mxu0 0.0
      %2968 = vmatpush.msra.mxu0 0.0
      %2969 = vmatpush.msra.mxu0 0.0
      %2970 = vmatpush.msra.mxu0 0.0
      %2971 = vmatpush.msra.mxu0 0.0
      %2972 = vmatpush.msra.mxu0 0.0
      %2973 = vmatpush.msra.mxu0 0.0
      %2974 = vmatpush.msra.mxu0 0.0
      %2975 = vmatpush.msra.mxu0 %v344
      %2976 = vmatpush.msra.mxu0 %v343
      %2977 = vmatmul.f32.gmra.mxu0 %v2879
      %v2978 = vpop.f32.mrf.mxu0
      %v2979 = vadd.f32 %v2956, %v2978
      %2980 = vmatmul.f32.gmra.mxu0 %v2882
      %v2981 = vpop.f32.mrf.mxu0
      %v2982 = vadd.f32 %v2959, %v2981
      %2983 = vdwg.mxu0
      %v2984 = vmul.f32 %v2936, %v377
      %v2985 = vmul.f32 %v2937, %v378
      %v2986 = vmul.f32 %v2979, %v379
      %v2987 = vmul.f32 %v2982, %v380
      %v2988 = vsub.f32 %v2984, %v2986
      %v2989 = vsub.f32 %v2985, %v2987
      %v2990 = vmul.f32 %v2936, %v379
      %v2991 = vmul.f32 %v2937, %v380
      %v2992 = vmul.f32 %v2979, %v377
      %v2993 = vmul.f32 %v2982, %v378
      %v2994 = vadd.f32 %v2990, %v2992
      %v2995 = vadd.f32 %v2991, %v2993
      %2996 = vmatpush.msra.mxu0 0.0
      %2997 = vmatpush.msra.mxu0 0.0
      %2998 = vmatpush.msra.mxu0 0.0
      %2999 = vmatpush.msra.mxu0 0.0
      %3000 = vmatpush.msra.mxu0 0.0
      %3001 = vmatpush.msra.mxu0 0.0
      %3002 = vmatpush.msra.mxu0 0.0
      %3003 = vmatpush.msra.mxu0 0.0
      %3004 = vmatpush.msra.mxu0 0.0
      %3005 = vmatpush.msra.mxu0 0.0
      %3006 = vmatpush.msra.mxu0 0.0
      %3007 = vmatpush.msra.mxu0 0.0
      %3008 = vmatpush.msra.mxu0 0.0
      %3009 = vmatpush.msra.mxu0 0.0
      %3010 = vmatpush.msra.mxu0 %v2989
      %3011 = vmatpush.msra.mxu0 %v2988
      %3012 = vmatmul.f32.gmra.mxu0 %v404
      %v3013 = vpop.f32.mrf.mxu0
      %v3014 = vadd.f32 0.0, %v3013
      %3015 = vmatmul.f32.gmra.mxu0 %v407
      %v3016 = vpop.f32.mrf.mxu0
      %v3017 = vadd.f32 0.0, %v3016
      %3018 = vdwg.mxu0
      %3019 = vmatpush.msra.mxu0 0.0
      %3020 = vmatpush.msra.mxu0 0.0
      %3021 = vmatpush.msra.mxu0 0.0
      %3022 = vmatpush.msra.mxu0 0.0
      %3023 = vmatpush.msra.mxu0 0.0
      %3024 = vmatpush.msra.mxu0 0.0
      %3025 = vmatpush.msra.mxu0 0.0
      %3026 = vmatpush.msra.mxu0 0.0
      %3027 = vmatpush.msra.mxu0 0.0
      %3028 = vmatpush.msra.mxu0 0.0
      %3029 = vmatpush.msra.mxu0 0.0
      %3030 = vmatpush.msra.mxu0 0.0
      %3031 = vmatpush.msra.mxu0 0.0
      %3032 = vmatpush.msra.mxu0 0.0
      %3033 = vmatpush.msra.mxu0 %v2995
      %3034 = vmatpush.msra.mxu0 %v2994
      %3035 = vmatmul.f32.gmra.mxu0 %v433
      %v3036 = vpop.f32.mrf.mxu0
      %v3037 = vadd.f32 0.0, %v3036
      %3038 = vmatmul.f32.gmra.mxu0 %v436
      %v3039 = vpop.f32.mrf.mxu0
      %v3040 = vadd.f32 0.0, %v3039
      %3041 = vdwg.mxu0
      %v3042 = vsub.f32 %v3014, %v3037
      %v3043 = vsub.f32 %v3017, %v3040
      %3044 = vmatpush.msra.mxu0 0.0
      %3045 = vmatpush.msra.mxu0 0.0
      %3046 = vmatpush.msra.mxu0 0.0
      %3047 = vmatpush.msra.mxu0 0.0
      %3048 = vmatpush.msra.mxu0 0.0
      %3049 = vmatpush.msra.mxu0 0.0
      %3050 = vmatpush.msra.mxu0 0.0
      %3051 = vmatpush.msra.mxu0 0.0
      %3052 = vmatpush.msra.mxu0 0.0
      %3053 = vmatpush.msra.mxu0 0.0
      %3054 = vmatpush.msra.mxu0 0.0
      %3055 = vmatpush.msra.mxu0 0.0
      %3056 = vmatpush.msra.mxu0 0.0
      %3057 = vmatpush.msra.mxu0 0.0
      %3058 = vmatpush.msra.mxu0 %v2989
      %3059 = vmatpush.msra.mxu0 %v2988
      %3060 = vmatmul.f32.gmra.mxu0 %v433
      %v3061 = vpop.f32.mrf.mxu0
      %v3062 = vadd.f32 0.0, %v3061
      %3063 = vmatmul.f32.gmra.mxu0 %v436
      %v3064 = vpop.f32.mrf.mxu0
      %v3065 = vadd.f32 0.0, %v3064
      %3066 = vdwg.mxu0
      %3067 = vmatpush.msra.mxu0 0.0
      %3068 = vmatpush.msra.mxu0 0.0
      %3069 = vmatpush.msra.mxu0 0.0
      %3070 = vmatpush.msra.mxu0 0.0
      %3071 = vmatpush.msra.mxu0 0.0
      %3072 = vmatpush.msra.mxu0 0.0
      %3073 = vmatpush.msra.mxu0 0.0
      %3074 = vmatpush.msra.mxu0 0.0
      %3075 = vmatpush.msra.mxu0 0.0
      %3076 = vmatpush.msra.mxu0 0.0
      %3077 = vmatpush.msra.mxu0 0.0
      %3078 = vmatpush.msra.mxu0 0.0
      %3079 = vmatpush.msra.mxu0 0.0
      %3080 = vmatpush.msra.mxu0 0.0
      %3081 = vmatpush.msra.mxu0 %v2995
      %3082 = vmatpush.msra.mxu0 %v2994
      %3083 = vmatmul.f32.gmra.mxu0 %v404
      %v3084 = vpop.f32.mrf.mxu0
      %v3085 = vadd.f32 %v3062, %v3084
      %3086 = vmatmul.f32.gmra.mxu0 %v407
      %v3087 = vpop.f32.mrf.mxu0
      %v3088 = vadd.f32 %v3065, %v3087
      %3089 = vdwg.mxu0
      %v3091 = vsel %vm402, %v3042, 0
      %v3094 = vsel %vm402, %v3043, 0
      %3096 = vmatpush.msra.mxu0 0.0
      %3097 = vmatpush.msra.mxu0 0.0
      %3098 = vmatpush.msra.mxu0 0.0
      %3099 = vmatpush.msra.mxu0 0.0
      %3100 = vmatpush.msra.mxu0 0.0
      %3101 = vmatpush.msra.mxu0 0.0
      %3102 = vmatpush.msra.mxu0 0.0
      %3103 = vmatpush.msra.mxu0 0.0
      %3104 = vmatpush.msra.mxu0 0.0
      %3105 = vmatpush.msra.mxu0 0.0
      %3106 = vmatpush.msra.mxu0 0.0
      %3107 = vmatpush.msra.mxu0 0.0
      %3108 = vmatpush.msra.mxu0 0.0
      %3109 = vmatpush.msra.mxu0 0.0
      %3110 = vmatpush.msra.mxu0 %v342
      %3111 = vmatpush.msra.mxu0 %v341
      %3112 = vmatmul.f32.gmra.mxu0 %v3091
      %v3113 = vpop.f32.mrf.mxu0
      %v3114 = vadd.f32 0.0, %v3113
      %3115 = vmatmul.f32.gmra.mxu0 %v3094
      %v3116 = vpop.f32.mrf.mxu0
      %v3117 = vadd.f32 0.0, %v3116
      %3118 = vdwg.mxu0
      %v3120 = vsel %vm402, %v3085, 0
      %v3123 = vsel %vm402, %v3088, 0
      %3125 = vmatpush.msra.mxu0 0.0
      %3126 = vmatpush.msra.mxu0 0.0
      %3127 = vmatpush.msra.mxu0 0.0
      %3128 = vmatpush.msra.mxu0 0.0
      %3129 = vmatpush.msra.mxu0 0.0
      %3130 = vmatpush.msra.mxu0 0.0
      %3131 = vmatpush.msra.mxu0 0.0
      %3132 = vmatpush.msra.mxu0 0.0
      %3133 = vmatpush.msra.mxu0 0.0
      %3134 = vmatpush.msra.mxu0 0.0
      %3135 = vmatpush.msra.mxu0 0.0
      %3136 = vmatpush.msra.mxu0 0.0
      %3137 = vmatpush.msra.mxu0 0.0
      %3138 = vmatpush.msra.mxu0 0.0
      %3139 = vmatpush.msra.mxu0 %v344
      %3140 = vmatpush.msra.mxu0 %v343
      %3141 = vmatmul.f32.gmra.mxu0 %v3120
      %v3142 = vpop.f32.mrf.mxu0
      %v3143 = vadd.f32 0.0, %v3142
      %3144 = vmatmul.f32.gmra.mxu0 %v3123
      %v3145 = vpop.f32.mrf.mxu0
      %v3146 = vadd.f32 0.0, %v3145
      %3147 = vdwg.mxu0
      %v3148 = vsub.f32 %v3114, %v3143
      %v3149 = vsub.f32 %v3117, %v3146
      %3150 = vmatpush.msra.mxu0 0.0
      %3151 = vmatpush.msra.mxu0 0.0
      %3152 = vmatpush.msra.mxu0 0.0
      %3153 = vmatpush.msra.mxu0 0.0
      %3154 = vmatpush.msra.mxu0 0.0
      %3155 = vmatpush.msra.mxu0 0.0
      %3156 = vmatpush.msra.mxu0 0.0
      %3157 = vmatpush.msra.mxu0 0.0
      %3158 = vmatpush.msra.mxu0 0.0
      %3159 = vmatpush.msra.mxu0 0.0
      %3160 = vmatpush.msra.mxu0 0.0
      %3161 = vmatpush.msra.mxu0 0.0
      %3162 = vmatpush.msra.mxu0 0.0
      %3163 = vmatpush.msra.mxu0 0.0
      %3164 = vmatpush.msra.mxu0 %v342
      %3165 = vmatpush.msra.mxu0 %v341
      %3166 = vmatmul.f32.gmra.mxu0 %v3120
      %v3167 = vpop.f32.mrf.mxu0
      %v3168 = vadd.f32 0.0, %v3167
      %3169 = vmatmul.f32.gmra.mxu0 %v3123
      %v3170 = vpop.f32.mrf.mxu0
      %v3171 = vadd.f32 0.0, %v3170
      %3172 = vdwg.mxu0
      %3173 = vmatpush.msra.mxu0 0.0
      %3174 = vmatpush.msra.mxu0 0.0
      %3175 = vmatpush.msra.mxu0 0.0
      %3176 = vmatpush.msra.mxu0 0.0
      %3177 = vmatpush.msra.mxu0 0.0
      %3178 = vmatpush.msra.mxu0 0.0
      %3179 = vmatpush.msra.mxu0 0.0
      %3180 = vmatpush.msra.mxu0 0.0
      %3181 = vmatpush.msra.mxu0 0.0
      %3182 = vmatpush.msra.mxu0 0.0
      %3183 = vmatpush.msra.mxu0 0.0
      %3184 = vmatpush.msra.mxu0 0.0
      %3185 = vmatpush.msra.mxu0 0.0
      %3186 = vmatpush.msra.mxu0 0.0
      %3187 = vmatpush.msra.mxu0 %v344
      %3188 = vmatpush.msra.mxu0 %v343
      %3189 = vmatmul.f32.gmra.mxu0 %v3091
      %v3190 = vpop.f32.mrf.mxu0
      %v3191 = vadd.f32 %v3168, %v3190
      %3192 = vmatmul.f32.gmra.mxu0 %v3094
      %v3193 = vpop.f32.mrf.mxu0
      %v3194 = vadd.f32 %v3171, %v3193
      %3195 = vdwg.mxu0
      %v3196 = vmul.f32 %v3148, %v3148
      %v3197 = vmul.f32 %v3149, %v3149
      %v3198 = vmul.f32 %v3191, %v3191
      %v3199 = vmul.f32 %v3194, %v3194
      %v3200 = vadd.f32 %v3196, %v3198
      %v3201 = vadd.f32 %v3197, %v3199
      %3202 = vst.msk [vmem:[%s332] sm:$0xff] %vm402, %v3200
      %3203 = vst.msk [vmem:[%s332 + $0x8] sm:$0xff] %vm402, %v3201
      %p3204 = scmp.lt.s32.totalorder %s20, 1
      %s3205 = scalar_select %p3204, %s20, 1
      %s3206 = smul.addr %s3205, 2
      %s3207 = smul.addr %s3206, 8
      %s3208 = scalar_lea.vmem %s9, %s3207
      // Predicated region
      $region57: #{optical_network_forward.1} parent=55 // pred_check
        %p3209 = pneg %p232
      $region58: #{optical_network_forward.1} parent=55 // pred_check_branch
        %3211 = sbr.rel (%p3209) target = $region60
      $region59: #{optical_network_forward.1} parent=55 // pred_region
        _
      $region60: #{optical_network_forward.1} parent=55 // pred_fallthru
        _
    $region56: #{optical_network_forward.1} parent=5 // pred_fallthru
      _
    %p3212 = scmp.le.s32.totalorder 2, %s15
    // Predicated region
    $region61: #{optical_network_forward.1} parent=5 // pred_check
      %p3213 = pneg %p3212
    $region62: #{optical_network_forward.1} parent=5 // pred_check_branch
      %3215 = sbr.rel (%p3213) target = $region64
    $region63: #{optical_network_forward.1} parent=5 // pred_region
      %s3216 = ssub.s32 %s15, 2
      // Predicated region
      $region65: #{optical_network_forward.1} parent=63 // pred_check
        %p3217 = pneg %p238
      $region66: #{optical_network_forward.1} parent=63 // pred_check_branch
        %3219 = sbr.rel (%p3217) target = $region68
      $region67: #{optical_network_forward.1} parent=63 // pred_region
        %p3220 = scmp.lt.s32.totalorder %s21, 1
        %s3221 = scalar_select %p3220, %s21, 1
        %s3222 = smul.addr %s3221, 2
        %s3223 = smul.addr %s3222, 8
        %s3224 = scalar_lea.vmem %s9, %s3223
      $region68: #{optical_network_forward.1} parent=63 // pred_fallthru
        _
    $region64: #{optical_network_forward.1} parent=5 // pred_fallthru
      _
  $region6: #{optical_network_forward.1} parent=0 // loop_footer
    %s19 = sadd.s32 1, %s15
  $region7: #{optical_network_forward.1} parent=0 // loop_footer_branch
    %14 = sbr.rel target = $region3
  $region8: #{optical_network_forward.1} parent=0 // loop_exit
    _

</llo_original>
